<compile_context>
chip_gen: v7x
topology: tpu7x:2x2x1
jax: 0.10.0
libtpu: 0.0.40
codegen_flags: <defaults>
</compile_context>

<pallas_src>
import math
import functools

import jax
import jax.numpy as jnp
from jax.experimental import pallas as pl
from jax.experimental.pallas import tpu as pltpu


# ------------------------------------------------------------------ helpers
def _layer_norm(x, w, b, eps=1e-5):
    mu = jnp.mean(x, axis=-1, keepdims=True)
    var = jnp.mean((x - mu) ** 2, axis=-1, keepdims=True)
    return (x - mu) / jnp.sqrt(var + eps) * w + b


def _softmax_last(x):
    m = jnp.max(x, axis=-1, keepdims=True)
    e = jnp.exp(x - m)
    return e / jnp.sum(e, axis=-1, keepdims=True)


# ----------------------------------------------------------- fused forward kernel
def fused_forward_kernel(xf_ref, bias_ref, avg_ref,
                         wqkv_ref, bqkv_ref, wo_ref, bo_ref,
                         n1w_ref, n1b_ref, w1_ref, b1_ref, w2_ref, b2_ref,
                         n2w_ref, n2b_ref,
                         wml_ref, bml_ref, we1_ref, be1_ref, we2_ref, be2_ref,
                         eps_ref,
                         enc_ref, ml_ref, z_ref, eval_ref,
                         *, num_layers, num_heads):
    # xf:   (T, H)  all N*S tokens, token-batched
    # bias: (T, T)  additive attention bias: 0 inside the same seq-position block
    #               for non-pad keys, -1e30 elsewhere (block-diag attention ==
    #               per-position attention over the original batch axis)
    x = xf_ref[...]
    bias = bias_ref[...]
    T, H = x.shape
    hd = H // num_heads
    scale = 1.0 / math.sqrt(hd)

    for l in range(num_layers):
        # fused QKV projection over all tokens: (T, H) x (H, 3H)
        qkv = jnp.dot(x, wqkv_ref[l], preferred_element_type=jnp.float32) + bqkv_ref[l]
        q = qkv[:, 0 * H:1 * H]
        k = qkv[:, 1 * H:2 * H]
        v = qkv[:, 2 * H:3 * H]

        ctx_heads = []
        for h in range(num_heads):
            sl = slice(h * hd, (h + 1) * hd)
            qh, kh, vh = q[:, sl], k[:, sl], v[:, sl]
            logits = jax.lax.dot_general(
                qh, kh, (((1,), (1,)), ((), ())),
                preferred_element_type=jnp.float32) * scale + bias
            attn = _softmax_last(logits)
            ctx_heads.append(jnp.dot(attn, vh, preferred_element_type=jnp.float32))
        ctx = jnp.concatenate(ctx_heads, axis=-1)                    # (T, H)
        attn_out = jnp.dot(ctx, wo_ref[l], preferred_element_type=jnp.float32) + bo_ref[l]

        # post-norm encoder layer (dropout = identity in eval mode)
        y = _layer_norm(x + attn_out, n1w_ref[l], n1b_ref[l])
        h1 = jnp.maximum(
            jnp.dot(y, w1_ref[l], preferred_element_type=jnp.float32) + b1_ref[l], 0.0)
        ff = jnp.dot(h1, w2_ref[l], preferred_element_type=jnp.float32) + b2_ref[l]
        x = _layer_norm(y + ff, n2w_ref[l], n2b_ref[l])

    # F.normalize(dim=-1, eps=1e-12)
    nrm = jnp.sqrt(jnp.sum(x * x, axis=-1, keepdims=True))
    enc = x / jnp.maximum(nrm, 1e-12)
    enc_ref[...] = enc

    # fused fc_mean | fc_logvar : (T, H) x (H, 2L) -> packed (T, 2L) output
    ml = jnp.dot(enc, wml_ref[...], preferred_element_type=jnp.float32) + bml_ref[...]
    ml_ref[...] = ml
    L = ml.shape[-1] // 2
    mean, logvar = ml[:, :L], ml[:, L:]

    # vae_reparameterize
    z = mean + eps_ref[...] * jnp.exp(0.5 * logvar)
    z_ref[...] = z

    # evaluator(z.mean(dim=0)): mean over the original batch axis per seq position,
    # realised as a tiny averaging matmul (avoids in-kernel reshapes).
    zmean = jnp.dot(avg_ref[...], z, preferred_element_type=jnp.float32)      # (N, L)
    h1e = jnp.maximum(
        jnp.dot(zmean, we1_ref[...], preferred_element_type=jnp.float32) + be1_ref[...], 0.0)
    logit = jnp.dot(h1e, we2_ref[...], preferred_element_type=jnp.float32) + be2_ref[...]
    eval_ref[...] = jax.nn.sigmoid(logit)                                      # (N, 1)


def run_fused_forward(xf, bias, avg, packed, eps, *, num_layers, num_heads):
    T, H = xf.shape
    L = packed['wml'].shape[1] // 2
    N = avg.shape[0]

    vmem_spec = pl.BlockSpec(memory_space=pltpu.MemorySpace.VMEM)
    args = (xf, bias, avg,
            packed['wqkv'], packed['bqkv'], packed['wo'], packed['bo'],
            packed['n1w'], packed['n1b'], packed['w1'], packed['b1'],
            packed['w2'], packed['b2'], packed['n2w'], packed['n2b'],
            packed['wml'], packed['bml'], packed['we1'], packed['be1'],
            packed['we2'], packed['be2'], eps)

    return pl.pallas_call(
        functools.partial(fused_forward_kernel,
                          num_layers=num_layers, num_heads=num_heads),
        in_specs=[vmem_spec] * len(args),
        out_specs=(vmem_spec, vmem_spec, vmem_spec, vmem_spec),
        out_shape=(
            jax.ShapeDtypeStruct((T, H), jnp.float32),       # encoded (normalized)
            jax.ShapeDtypeStruct((T, 2 * L), jnp.float32),   # packed [mean | logvar]
            jax.ShapeDtypeStruct((T, L), jnp.float32),       # z
            jax.ShapeDtypeStruct((N, 1), jnp.float32),       # evaluation
        ),
    )(*args)


# ------------------------------------------------------------------ glue / params
def sincos_pe(max_len, hidden):
    pos = jnp.arange(max_len, dtype=jnp.float32)[:, None]
    div = jnp.exp(jnp.arange(0, hidden, 2, dtype=jnp.float32)
                  * (-math.log(10000.0) / hidden))
    pe = jnp.zeros((max_len, hidden), jnp.float32)
    pe = pe.at[:, 0::2].set(jnp.sin(pos * div))
    pe = pe.at[:, 1::2].set(jnp.cos(pos * div))
    return pe


def init_params(key, vocab, hidden, latent, num_layers):
    keys = iter(jax.random.split(key, 16 + 20 * num_layers))

    def nrm(shape, scale=0.05):
        return (scale * jax.random.normal(next(keys), shape)).astype(jnp.float32)

    p = {'emb': nrm((vocab, hidden))}   # "tokenizer" used as nn.Embedding in forward
    layers = []
    for _ in range(num_layers):
        layers.append(dict(
            wq=nrm((hidden, hidden)), wk=nrm((hidden, hidden)), wv=nrm((hidden, hidden)),
            bq=nrm((1, hidden)), bk=nrm((1, hidden)), bv=nrm((1, hidden)),
            wo=nrm((hidden, hidden)), bo=nrm((1, hidden)),
            n1w=jnp.ones((1, hidden), jnp.float32), n1b=jnp.zeros((1, hidden), jnp.float32),
            w1=nrm((hidden, 4 * hidden)), b1=nrm((1, 4 * hidden)),
            w2=nrm((4 * hidden, hidden)), b2=nrm((1, hidden)),
            n2w=jnp.ones((1, hidden), jnp.float32), n2b=jnp.zeros((1, hidden), jnp.float32),
        ))
    p['layers'] = layers
    p['wm'] = nrm((hidden, latent)); p['bm'] = nrm((1, latent))
    p['wl'] = nrm((hidden, latent)); p['bl'] = nrm((1, latent))
    p['we1'] = nrm((latent, hidden)); p['be1'] = nrm((1, hidden))
    p['we2'] = nrm((hidden, 1)); p['be2'] = nrm((1, 1))
    return p


def pack_params(p):
    """Fuse QKV / mean|logvar weights and stack per-layer params along a leading axis."""
    layers = p['layers']
    stack = lambda name: jnp.stack([l[name] for l in layers])
    return {
        'wqkv': jnp.stack([jnp.concatenate([l['wq'], l['wk'], l['wv']], axis=1) for l in layers]),
        'bqkv': jnp.stack([jnp.concatenate([l['bq'], l['bk'], l['bv']], axis=1) for l in layers]),
        'wo': stack('wo'), 'bo': stack('bo'),
        'n1w': stack('n1w'), 'n1b': stack('n1b'),
        'w1': stack('w1'), 'b1': stack('b1'),
        'w2': stack('w2'), 'b2': stack('b2'),
        'n2w': stack('n2w'), 'n2b': stack('n2b'),
        'wml': jnp.concatenate([p['wm'], p['wl']], axis=1),
        'bml': jnp.concatenate([p['bm'], p['bl']], axis=1),
        'we1': p['we1'], 'be1': p['be1'],
        'we2': p['we2'], 'be2': p['be2'],
    }


def trans_encoder_forward(seq_ids, emb_table, packed, pe, num_heads, num_layers, eps_key):
    N, S = seq_ids.shape                               # N = seq_len, S = batch
    H = emb_table.shape[1]
    L = packed['wml'].shape[1] // 2
    T = N * S

    # embedding lookup + sin/cos position embedding (wrapper glue, token gather)
    emb = emb_table[seq_ids]                           # (N, S, H)
    x = emb + pe[:N][:, None, :]
    xf = x.reshape(T, H).astype(jnp.float32)           # token-batched layout, row i = n*S + s

    # additive attention bias: same seq-position block AND key not padded -> 0, else -1e30
    pad = (seq_ids == 0).reshape(-1)                   # (T,) key padding, torch's seq==0
    blk = jnp.arange(T) // S
    same = blk[:, None] == blk[None, :]
    bias = jnp.where(same & (~pad)[None, :], 0.0, -1e30).astype(jnp.float32)

    # averaging matrix for evaluator: zmean[n] = mean_s z[n*S + s]  (torch z.mean(dim=0))
    avg = jnp.where(jnp.arange(N)[:, None] == blk[None, :], 1.0 / S, 0.0).astype(jnp.float32)

    eps = jax.random.normal(eps_key, (T, L), dtype=jnp.float32)   # vae noise (fixed key)

    enc_f, ml_f, z_f, evaluation = run_fused_forward(
        xf, bias, avg, packed, eps, num_layers=num_layers, num_heads=num_heads)

    mean_f, logvar_f = ml_f[:, :L], ml_f[:, L:]
    to_torch = lambda a: jnp.transpose(a.reshape(N, S, -1), (1, 0, 2))  # (batch, seq, ·)
    return (to_torch(z_f), to_torch(mean_f), to_torch(logvar_f),
            evaluation, to_torch(enc_f))


if __name__ == "__main__":
    SEQ_LEN, BATCH = 8, 2
    VOCAB, HIDDEN, LATENT, NUM_LAYERS = 50, 128, 32, 2
    NUM_HEADS = HIDDEN // 64                           # nhead = int(hidden_size / 64)

    key = jax.random.PRNGKey(0)
    kp, kseq, keps = jax.random.split(key, 3)
    params = init_params(kp, VOCAB, HIDDEN, LATENT, NUM_LAYERS)
    packed = pack_params(params)
    pe = sincos_pe(512, HIDDEN)

    seq = jax.random.randint(kseq, (SEQ_LEN, BATCH), 1, VOCAB)
    seq = seq.at[0, 0].set(0).at[3, 1].set(0)          # a few pad tokens

    z, mean, logvar, evaluation, encoded = jax.block_until_ready(
        trans_encoder_forward(seq, params['emb'], packed, pe,
                              NUM_HEADS, NUM_LAYERS, keps))

    assert z.shape == (BATCH, SEQ_LEN, LATENT)
    assert mean.shape == (BATCH, SEQ_LEN, LATENT)
    assert logvar.shape == (BATCH, SEQ_LEN, LATENT)
    assert evaluation.shape == (SEQ_LEN, 1)
    assert encoded.shape == (BATCH, SEQ_LEN, HIDDEN)
    assert bool(jnp.all(jnp.isfinite(z))) and bool(jnp.all(jnp.isfinite(evaluation)))
    assert bool(jnp.all(jnp.isfinite(mean))) and bool(jnp.all(jnp.isfinite(encoded)))
    print("KERNEL_OK")
</pallas_src>

<mosaic_0001>
module attributes {stable_mosaic.version = 11 : i64} {
  func.func @fused_forward_kernel(%arg0: memref<16x128xf32, #tpu.memory_space<vmem>>, %arg1: memref<16x16xf32, #tpu.memory_space<vmem>>, %arg2: memref<8x16xf32, #tpu.memory_space<vmem>>, %arg3: memref<2x128x384xf32, #tpu.memory_space<vmem>>, %arg4: memref<2x1x384xf32, #tpu.memory_space<vmem>>, %arg5: memref<2x128x128xf32, #tpu.memory_space<vmem>>, %arg6: memref<2x1x128xf32, #tpu.memory_space<vmem>>, %arg7: memref<2x1x128xf32, #tpu.memory_space<vmem>>, %arg8: memref<2x1x128xf32, #tpu.memory_space<vmem>>, %arg9: memref<2x128x512xf32, #tpu.memory_space<vmem>>, %arg10: memref<2x1x512xf32, #tpu.memory_space<vmem>>, %arg11: memref<2x512x128xf32, #tpu.memory_space<vmem>>, %arg12: memref<2x1x128xf32, #tpu.memory_space<vmem>>, %arg13: memref<2x1x128xf32, #tpu.memory_space<vmem>>, %arg14: memref<2x1x128xf32, #tpu.memory_space<vmem>>, %arg15: memref<128x64xf32, #tpu.memory_space<vmem>>, %arg16: memref<1x64xf32, #tpu.memory_space<vmem>>, %arg17: memref<32x128xf32, #tpu.memory_space<vmem>>, %arg18: memref<1x128xf32, #tpu.memory_space<vmem>>, %arg19: memref<128x1xf32, #tpu.memory_space<vmem>>, %arg20: memref<1x1xf32, #tpu.memory_space<vmem>>, %arg21: memref<16x32xf32, #tpu.memory_space<vmem>>, %arg22: memref<16x128xf32, #tpu.memory_space<vmem>>, %arg23: memref<16x64xf32, #tpu.memory_space<vmem>>, %arg24: memref<16x32xf32, #tpu.memory_space<vmem>>, %arg25: memref<8x1xf32, #tpu.memory_space<vmem>>) attributes {dimension_semantics = [], scalar_prefetch = 0 : i64, scratch_operands = 0 : i64, tpu.core_type = #tpu.core_type<tc>} {
    %c0 = arith.constant 0 : index
    %c0_0 = arith.constant 0 : index
    %0 = vector.load %arg0[%c0, %c0_0] : memref<16x128xf32, #tpu.memory_space<vmem>>, vector<16x128xf32>
    %c0_1 = arith.constant 0 : index
    %c0_2 = arith.constant 0 : index
    %1 = vector.load %arg1[%c0_1, %c0_2] : memref<16x16xf32, #tpu.memory_space<vmem>>, vector<16x16xf32>
    %c0_3 = arith.constant 0 : index
    %c0_4 = arith.constant 0 : index
    %c0_5 = arith.constant 0 : index
    %2 = vector.load %arg3[%c0_3, %c0_4, %c0_5] : memref<2x128x384xf32, #tpu.memory_space<vmem>>, vector<1x128x384xf32>
    %3 = vector.shape_cast %2 : vector<1x128x384xf32> to vector<128x384xf32>
    %cst = arith.constant dense<0.000000e+00> : vector<16x384xf32>
    %4 = tpu.matmul %0, %3, %cst {dimension_numbers = #tpu.dot_dimension_numbers<[1], [0], [0], [1], [0, 0, 1, 1], [], []>} : vector<16x128xf32>, vector<128x384xf32>, vector<16x384xf32> -> vector<16x384xf32>
    %c0_6 = arith.constant 0 : index
    %c0_7 = arith.constant 0 : index
    %c0_8 = arith.constant 0 : index
    %5 = vector.load %arg4[%c0_6, %c0_7, %c0_8] : memref<2x1x384xf32, #tpu.memory_space<vmem>>, vector<1x1x384xf32>
    %6 = vector.shape_cast %5 : vector<1x1x384xf32> to vector<1x384xf32>
    %7 = vector.broadcast %6 : vector<1x384xf32> to vector<16x384xf32>
    %8 = arith.addf %4, %7 : vector<16x384xf32>
    %9 = vector.extract_strided_slice %8 {offsets = [0, 0], sizes = [16, 128], strides = [1, 1]} : vector<16x384xf32> to vector<16x128xf32>
    %10 = vector.extract_strided_slice %8 {offsets = [0, 128], sizes = [16, 128], strides = [1, 1]} : vector<16x384xf32> to vector<16x128xf32>
    %11 = vector.extract_strided_slice %8 {offsets = [0, 256], sizes = [16, 128], strides = [1, 1]} : vector<16x384xf32> to vector<16x128xf32>
    %12 = vector.extract_strided_slice %9 {offsets = [0, 0], sizes = [16, 64], strides = [1, 1]} : vector<16x128xf32> to vector<16x64xf32>
    %13 = vector.extract_strided_slice %10 {offsets = [0, 0], sizes = [16, 64], strides = [1, 1]} : vector<16x128xf32> to vector<16x64xf32>
    %14 = vector.extract_strided_slice %11 {offsets = [0, 0], sizes = [16, 64], strides = [1, 1]} : vector<16x128xf32> to vector<16x64xf32>
    %cst_9 = arith.constant dense<0.000000e+00> : vector<16x16xf32>
    %15 = tpu.matmul %12, %13, %cst_9 {dimension_numbers = #tpu.dot_dimension_numbers<[1], [1], [0], [0], [0, 0, 1, 0], [], []>} : vector<16x64xf32>, vector<16x64xf32>, vector<16x16xf32> -> vector<16x16xf32>
    %cst_10 = arith.constant 1.250000e-01 : f32
    %16 = vector.broadcast %cst_10 : f32 to vector<16x16xf32>
    %17 = arith.mulf %15, %16 : vector<16x16xf32>
    %18 = arith.addf %17, %1 : vector<16x16xf32>
    %cst_11 = arith.constant dense<0xFF800000> : vector<16xf32>
    %19 = vector.multi_reduction <maximumf>, %18, %cst_11 [1] : vector<16x16xf32> to vector<16xf32>
    %20 = vector.shape_cast %19 : vector<16xf32> to vector<16x1xf32>
    %21 = vector.broadcast %20 : vector<16x1xf32> to vector<16x16xf32>
    %22 = arith.subf %18, %21 : vector<16x16xf32>
    %23 = math.exp %22 : vector<16x16xf32>
    %cst_12 = arith.constant dense<0.000000e+00> : vector<16xf32>
    %24 = vector.multi_reduction <add>, %23, %cst_12 [1] : vector<16x16xf32> to vector<16xf32>
    %25 = vector.shape_cast %24 : vector<16xf32> to vector<16x1xf32>
    %26 = vector.broadcast %25 : vector<16x1xf32> to vector<16x16xf32>
    %27 = arith.divf %23, %26 : vector<16x16xf32>
    %cst_13 = arith.constant dense<0.000000e+00> : vector<16x64xf32>
    %28 = tpu.matmul %27, %14, %cst_13 {dimension_numbers = #tpu.dot_dimension_numbers<[1], [0], [0], [1], [0, 0, 1, 1], [], []>} : vector<16x16xf32>, vector<16x64xf32>, vector<16x64xf32> -> vector<16x64xf32>
    %29 = vector.extract_strided_slice %9 {offsets = [0, 64], sizes = [16, 64], strides = [1, 1]} : vector<16x128xf32> to vector<16x64xf32>
    %30 = vector.extract_strided_slice %10 {offsets = [0, 64], sizes = [16, 64], strides = [1, 1]} : vector<16x128xf32> to vector<16x64xf32>
    %31 = vector.extract_strided_slice %11 {offsets = [0, 64], sizes = [16, 64], strides = [1, 1]} : vector<16x128xf32> to vector<16x64xf32>
    %cst_14 = arith.constant dense<0.000000e+00> : vector<16x16xf32>
    %32 = tpu.matmul %29, %30, %cst_14 {dimension_numbers = #tpu.dot_dimension_numbers<[1], [1], [0], [0], [0, 0, 1, 0], [], []>} : vector<16x64xf32>, vector<16x64xf32>, vector<16x16xf32> -> vector<16x16xf32>
    %cst_15 = arith.constant 1.250000e-01 : f32
    %33 = vector.broadcast %cst_15 : f32 to vector<16x16xf32>
    %34 = arith.mulf %32, %33 : vector<16x16xf32>
    %35 = arith.addf %34, %1 : vector<16x16xf32>
    %cst_16 = arith.constant dense<0xFF800000> : vector<16xf32>
    %36 = vector.multi_reduction <maximumf>, %35, %cst_16 [1] : vector<16x16xf32> to vector<16xf32>
    %37 = vector.shape_cast %36 : vector<16xf32> to vector<16x1xf32>
    %38 = vector.broadcast %37 : vector<16x1xf32> to vector<16x16xf32>
    %39 = arith.subf %35, %38 : vector<16x16xf32>
    %40 = math.exp %39 : vector<16x16xf32>
    %cst_17 = arith.constant dense<0.000000e+00> : vector<16xf32>
    %41 = vector.multi_reduction <add>, %40, %cst_17 [1] : vector<16x16xf32> to vector<16xf32>
    %42 = vector.shape_cast %41 : vector<16xf32> to vector<16x1xf32>
    %43 = vector.broadcast %42 : vector<16x1xf32> to vector<16x16xf32>
    %44 = arith.divf %40, %43 : vector<16x16xf32>
    %cst_18 = arith.constant dense<0.000000e+00> : vector<16x64xf32>
    %45 = tpu.matmul %44, %31, %cst_18 {dimension_numbers = #tpu.dot_dimension_numbers<[1], [0], [0], [1], [0, 0, 1, 1], [], []>} : vector<16x16xf32>, vector<16x64xf32>, vector<16x64xf32> -> vector<16x64xf32>
    %46 = tpu.concatenate %28, %45 in 1 : vector<16x64xf32>, vector<16x64xf32> -> vector<16x128xf32>
    %c0_19 = arith.constant 0 : index
    %c0_20 = arith.constant 0 : index
    %c0_21 = arith.constant 0 : index
    %47 = vector.load %arg5[%c0_19, %c0_20, %c0_21] : memref<2x128x128xf32, #tpu.memory_space<vmem>>, vector<1x128x128xf32>
    %48 = vector.shape_cast %47 : vector<1x128x128xf32> to vector<128x128xf32>
    %cst_22 = arith.constant dense<0.000000e+00> : vector<16x128xf32>
    %49 = tpu.matmul %46, %48, %cst_22 {dimension_numbers = #tpu.dot_dimension_numbers<[1], [0], [0], [1], [0, 0, 1, 1], [], []>} : vector<16x128xf32>, vector<128x128xf32>, vector<16x128xf32> -> vector<16x128xf32>
    %c0_23 = arith.constant 0 : index
    %c0_24 = arith.constant 0 : index
    %c0_25 = arith.constant 0 : index
    %50 = vector.load %arg6[%c0_23, %c0_24, %c0_25] : memref<2x1x128xf32, #tpu.memory_space<vmem>>, vector<1x1x128xf32>
    %51 = vector.shape_cast %50 : vector<1x1x128xf32> to vector<1x128xf32>
    %52 = vector.broadcast %51 : vector<1x128xf32> to vector<16x128xf32>
    %53 = arith.addf %49, %52 : vector<16x128xf32>
    %54 = arith.addf %0, %53 : vector<16x128xf32>
    %c0_26 = arith.constant 0 : index
    %c0_27 = arith.constant 0 : index
    %c0_28 = arith.constant 0 : index
    %55 = vector.load %arg7[%c0_26, %c0_27, %c0_28] : memref<2x1x128xf32, #tpu.memory_space<vmem>>, vector<1x1x128xf32>
    %56 = vector.shape_cast %55 : vector<1x1x128xf32> to vector<1x128xf32>
    %c0_29 = arith.constant 0 : index
    %c0_30 = arith.constant 0 : index
    %c0_31 = arith.constant 0 : index
    %57 = vector.load %arg8[%c0_29, %c0_30, %c0_31] : memref<2x1x128xf32, #tpu.memory_space<vmem>>, vector<1x1x128xf32>
    %58 = vector.shape_cast %57 : vector<1x1x128xf32> to vector<1x128xf32>
    %cst_32 = arith.constant dense<0.000000e+00> : vector<16xf32>
    %59 = vector.multi_reduction <add>, %54, %cst_32 [1] : vector<16x128xf32> to vector<16xf32>
    %60 = vector.shape_cast %59 : vector<16xf32> to vector<16x1xf32>
    %cst_33 = arith.constant 1.280000e+02 : f32
    %61 = vector.broadcast %cst_33 : f32 to vector<16x1xf32>
    %62 = arith.divf %60, %61 : vector<16x1xf32>
    %63 = vector.broadcast %62 : vector<16x1xf32> to vector<16x128xf32>
    %64 = arith.subf %54, %63 : vector<16x128xf32>
    %65 = arith.mulf %64, %64 : vector<16x128xf32>
    %cst_34 = arith.constant dense<0.000000e+00> : vector<16xf32>
    %66 = vector.multi_reduction <add>, %65, %cst_34 [1] : vector<16x128xf32> to vector<16xf32>
    %67 = vector.shape_cast %66 : vector<16xf32> to vector<16x1xf32>
    %cst_35 = arith.constant 1.280000e+02 : f32
    %68 = vector.broadcast %cst_35 : f32 to vector<16x1xf32>
    %69 = arith.divf %67, %68 : vector<16x1xf32>
    %70 = vector.broadcast %62 : vector<16x1xf32> to vector<16x128xf32>
    %71 = arith.subf %54, %70 : vector<16x128xf32>
    %cst_36 = arith.constant 9.99999974E-6 : f32
    %72 = vector.broadcast %cst_36 : f32 to vector<16x1xf32>
    %73 = arith.addf %69, %72 : vector<16x1xf32>
    %74 = math.sqrt %73 : vector<16x1xf32>
    %75 = vector.broadcast %74 : vector<16x1xf32> to vector<16x128xf32>
    %76 = arith.divf %71, %75 : vector<16x128xf32>
    %77 = vector.broadcast %56 : vector<1x128xf32> to vector<16x128xf32>
    %78 = arith.mulf %76, %77 : vector<16x128xf32>
    %79 = vector.broadcast %58 : vector<1x128xf32> to vector<16x128xf32>
    %80 = arith.addf %78, %79 : vector<16x128xf32>
    %c0_37 = arith.constant 0 : index
    %c0_38 = arith.constant 0 : index
    %c0_39 = arith.constant 0 : index
    %81 = vector.load %arg9[%c0_37, %c0_38, %c0_39] : memref<2x128x512xf32, #tpu.memory_space<vmem>>, vector<1x128x512xf32>
    %82 = vector.shape_cast %81 : vector<1x128x512xf32> to vector<128x512xf32>
    %cst_40 = arith.constant dense<0.000000e+00> : vector<16x512xf32>
    %83 = tpu.matmul %80, %82, %cst_40 {dimension_numbers = #tpu.dot_dimension_numbers<[1], [0], [0], [1], [0, 0, 1, 1], [], []>} : vector<16x128xf32>, vector<128x512xf32>, vector<16x512xf32> -> vector<16x512xf32>
    %c0_41 = arith.constant 0 : index
    %c0_42 = arith.constant 0 : index
    %c0_43 = arith.constant 0 : index
    %84 = vector.load %arg10[%c0_41, %c0_42, %c0_43] : memref<2x1x512xf32, #tpu.memory_space<vmem>>, vector<1x1x512xf32>
    %85 = vector.shape_cast %84 : vector<1x1x512xf32> to vector<1x512xf32>
    %86 = vector.broadcast %85 : vector<1x512xf32> to vector<16x512xf32>
    %87 = arith.addf %83, %86 : vector<16x512xf32>
    %cst_44 = arith.constant 0.000000e+00 : f32
    %88 = vector.broadcast %cst_44 : f32 to vector<16x512xf32>
    %89 = arith.maximumf %87, %88 : vector<16x512xf32>
    %c0_45 = arith.constant 0 : index
    %c0_46 = arith.constant 0 : index
    %c0_47 = arith.constant 0 : index
    %90 = vector.load %arg11[%c0_45, %c0_46, %c0_47] : memref<2x512x128xf32, #tpu.memory_space<vmem>>, vector<1x512x128xf32>
    %91 = vector.shape_cast %90 : vector<1x512x128xf32> to vector<512x128xf32>
    %cst_48 = arith.constant dense<0.000000e+00> : vector<16x128xf32>
    %92 = tpu.matmul %89, %91, %cst_48 {dimension_numbers = #tpu.dot_dimension_numbers<[1], [0], [0], [1], [0, 0, 1, 1], [], []>} : vector<16x512xf32>, vector<512x128xf32>, vector<16x128xf32> -> vector<16x128xf32>
    %c0_49 = arith.constant 0 : index
    %c0_50 = arith.constant 0 : index
    %c0_51 = arith.constant 0 : index
    %93 = vector.load %arg12[%c0_49, %c0_50, %c0_51] : memref<2x1x128xf32, #tpu.memory_space<vmem>>, vector<1x1x128xf32>
    %94 = vector.shape_cast %93 : vector<1x1x128xf32> to vector<1x128xf32>
    %95 = vector.broadcast %94 : vector<1x128xf32> to vector<16x128xf32>
    %96 = arith.addf %92, %95 : vector<16x128xf32>
    %97 = arith.addf %80, %96 : vector<16x128xf32>
    %c0_52 = arith.constant 0 : index
    %c0_53 = arith.constant 0 : index
    %c0_54 = arith.constant 0 : index
    %98 = vector.load %arg13[%c0_52, %c0_53, %c0_54] : memref<2x1x128xf32, #tpu.memory_space<vmem>>, vector<1x1x128xf32>
    %99 = vector.shape_cast %98 : vector<1x1x128xf32> to vector<1x128xf32>
    %c0_55 = arith.constant 0 : index
    %c0_56 = arith.constant 0 : index
    %c0_57 = arith.constant 0 : index
    %100 = vector.load %arg14[%c0_55, %c0_56, %c0_57] : memref<2x1x128xf32, #tpu.memory_space<vmem>>, vector<1x1x128xf32>
    %101 = vector.shape_cast %100 : vector<1x1x128xf32> to vector<1x128xf32>
    %cst_58 = arith.constant dense<0.000000e+00> : vector<16xf32>
    %102 = vector.multi_reduction <add>, %97, %cst_58 [1] : vector<16x128xf32> to vector<16xf32>
    %103 = vector.shape_cast %102 : vector<16xf32> to vector<16x1xf32>
    %cst_59 = arith.constant 1.280000e+02 : f32
    %104 = vector.broadcast %cst_59 : f32 to vector<16x1xf32>
    %105 = arith.divf %103, %104 : vector<16x1xf32>
    %106 = vector.broadcast %105 : vector<16x1xf32> to vector<16x128xf32>
    %107 = arith.subf %97, %106 : vector<16x128xf32>
    %108 = arith.mulf %107, %107 : vector<16x128xf32>
    %cst_60 = arith.constant dense<0.000000e+00> : vector<16xf32>
    %109 = vector.multi_reduction <add>, %108, %cst_60 [1] : vector<16x128xf32> to vector<16xf32>
    %110 = vector.shape_cast %109 : vector<16xf32> to vector<16x1xf32>
    %cst_61 = arith.constant 1.280000e+02 : f32
    %111 = vector.broadcast %cst_61 : f32 to vector<16x1xf32>
    %112 = arith.divf %110, %111 : vector<16x1xf32>
    %113 = vector.broadcast %105 : vector<16x1xf32> to vector<16x128xf32>
    %114 = arith.subf %97, %113 : vector<16x128xf32>
    %cst_62 = arith.constant 9.99999974E-6 : f32
    %115 = vector.broadcast %cst_62 : f32 to vector<16x1xf32>
    %116 = arith.addf %112, %115 : vector<16x1xf32>
    %117 = math.sqrt %116 : vector<16x1xf32>
    %118 = vector.broadcast %117 : vector<16x1xf32> to vector<16x128xf32>
    %119 = arith.divf %114, %118 : vector<16x128xf32>
    %120 = vector.broadcast %99 : vector<1x128xf32> to vector<16x128xf32>
    %121 = arith.mulf %119, %120 : vector<16x128xf32>
    %122 = vector.broadcast %101 : vector<1x128xf32> to vector<16x128xf32>
    %123 = arith.addf %121, %122 : vector<16x128xf32>
    %c1 = arith.constant 1 : index
    %c0_63 = arith.constant 0 : index
    %c0_64 = arith.constant 0 : index
    %124 = vector.load %arg3[%c1, %c0_63, %c0_64] : memref<2x128x384xf32, #tpu.memory_space<vmem>>, vector<1x128x384xf32>
    %125 = vector.shape_cast %124 : vector<1x128x384xf32> to vector<128x384xf32>
    %cst_65 = arith.constant dense<0.000000e+00> : vector<16x384xf32>
    %126 = tpu.matmul %123, %125, %cst_65 {dimension_numbers = #tpu.dot_dimension_numbers<[1], [0], [0], [1], [0, 0, 1, 1], [], []>} : vector<16x128xf32>, vector<128x384xf32>, vector<16x384xf32> -> vector<16x384xf32>
    %c1_66 = arith.constant 1 : index
    %c0_67 = arith.constant 0 : index
    %c0_68 = arith.constant 0 : index
    %127 = vector.load %arg4[%c1_66, %c0_67, %c0_68] : memref<2x1x384xf32, #tpu.memory_space<vmem>>, vector<1x1x384xf32>
    %128 = vector.shape_cast %127 : vector<1x1x384xf32> to vector<1x384xf32>
    %129 = vector.broadcast %128 : vector<1x384xf32> to vector<16x384xf32>
    %130 = arith.addf %126, %129 : vector<16x384xf32>
    %131 = vector.extract_strided_slice %130 {offsets = [0, 0], sizes = [16, 128], strides = [1, 1]} : vector<16x384xf32> to vector<16x128xf32>
    %132 = vector.extract_strided_slice %130 {offsets = [0, 128], sizes = [16, 128], strides = [1, 1]} : vector<16x384xf32> to vector<16x128xf32>
    %133 = vector.extract_strided_slice %130 {offsets = [0, 256], sizes = [16, 128], strides = [1, 1]} : vector<16x384xf32> to vector<16x128xf32>
    %134 = vector.extract_strided_slice %131 {offsets = [0, 0], sizes = [16, 64], strides = [1, 1]} : vector<16x128xf32> to vector<16x64xf32>
    %135 = vector.extract_strided_slice %132 {offsets = [0, 0], sizes = [16, 64], strides = [1, 1]} : vector<16x128xf32> to vector<16x64xf32>
    %136 = vector.extract_strided_slice %133 {offsets = [0, 0], sizes = [16, 64], strides = [1, 1]} : vector<16x128xf32> to vector<16x64xf32>
    %cst_69 = arith.constant dense<0.000000e+00> : vector<16x16xf32>
    %137 = tpu.matmul %134, %135, %cst_69 {dimension_numbers = #tpu.dot_dimension_numbers<[1], [1], [0], [0], [0, 0, 1, 0], [], []>} : vector<16x64xf32>, vector<16x64xf32>, vector<16x16xf32> -> vector<16x16xf32>
    %cst_70 = arith.constant 1.250000e-01 : f32
    %138 = vector.broadcast %cst_70 : f32 to vector<16x16xf32>
    %139 = arith.mulf %137, %138 : vector<16x16xf32>
    %140 = arith.addf %139, %1 : vector<16x16xf32>
    %cst_71 = arith.constant dense<0xFF800000> : vector<16xf32>
    %141 = vector.multi_reduction <maximumf>, %140, %cst_71 [1] : vector<16x16xf32> to vector<16xf32>
    %142 = vector.shape_cast %141 : vector<16xf32> to vector<16x1xf32>
    %143 = vector.broadcast %142 : vector<16x1xf32> to vector<16x16xf32>
    %144 = arith.subf %140, %143 : vector<16x16xf32>
    %145 = math.exp %144 : vector<16x16xf32>
    %cst_72 = arith.constant dense<0.000000e+00> : vector<16xf32>
    %146 = vector.multi_reduction <add>, %145, %cst_72 [1] : vector<16x16xf32> to vector<16xf32>
    %147 = vector.shape_cast %146 : vector<16xf32> to vector<16x1xf32>
    %148 = vector.broadcast %147 : vector<16x1xf32> to vector<16x16xf32>
    %149 = arith.divf %145, %148 : vector<16x16xf32>
    %cst_73 = arith.constant dense<0.000000e+00> : vector<16x64xf32>
    %150 = tpu.matmul %149, %136, %cst_73 {dimension_numbers = #tpu.dot_dimension_numbers<[1], [0], [0], [1], [0, 0, 1, 1], [], []>} : vector<16x16xf32>, vector<16x64xf32>, vector<16x64xf32> -> vector<16x64xf32>
    %151 = vector.extract_strided_slice %131 {offsets = [0, 64], sizes = [16, 64], strides = [1, 1]} : vector<16x128xf32> to vector<16x64xf32>
    %152 = vector.extract_strided_slice %132 {offsets = [0, 64], sizes = [16, 64], strides = [1, 1]} : vector<16x128xf32> to vector<16x64xf32>
    %153 = vector.extract_strided_slice %133 {offsets = [0, 64], sizes = [16, 64], strides = [1, 1]} : vector<16x128xf32> to vector<16x64xf32>
    %cst_74 = arith.constant dense<0.000000e+00> : vector<16x16xf32>
    %154 = tpu.matmul %151, %152, %cst_74 {dimension_numbers = #tpu.dot_dimension_numbers<[1], [1], [0], [0], [0, 0, 1, 0], [], []>} : vector<16x64xf32>, vector<16x64xf32>, vector<16x16xf32> -> vector<16x16xf32>
    %cst_75 = arith.constant 1.250000e-01 : f32
    %155 = vector.broadcast %cst_75 : f32 to vector<16x16xf32>
    %156 = arith.mulf %154, %155 : vector<16x16xf32>
    %157 = arith.addf %156, %1 : vector<16x16xf32>
    %cst_76 = arith.constant dense<0xFF800000> : vector<16xf32>
    %158 = vector.multi_reduction <maximumf>, %157, %cst_76 [1] : vector<16x16xf32> to vector<16xf32>
    %159 = vector.shape_cast %158 : vector<16xf32> to vector<16x1xf32>
    %160 = vector.broadcast %159 : vector<16x1xf32> to vector<16x16xf32>
    %161 = arith.subf %157, %160 : vector<16x16xf32>
    %162 = math.exp %161 : vector<16x16xf32>
    %cst_77 = arith.constant dense<0.000000e+00> : vector<16xf32>
    %163 = vector.multi_reduction <add>, %162, %cst_77 [1] : vector<16x16xf32> to vector<16xf32>
    %164 = vector.shape_cast %163 : vector<16xf32> to vector<16x1xf32>
    %165 = vector.broadcast %164 : vector<16x1xf32> to vector<16x16xf32>
    %166 = arith.divf %162, %165 : vector<16x16xf32>
    %cst_78 = arith.constant dense<0.000000e+00> : vector<16x64xf32>
    %167 = tpu.matmul %166, %153, %cst_78 {dimension_numbers = #tpu.dot_dimension_numbers<[1], [0], [0], [1], [0, 0, 1, 1], [], []>} : vector<16x16xf32>, vector<16x64xf32>, vector<16x64xf32> -> vector<16x64xf32>
    %168 = tpu.concatenate %150, %167 in 1 : vector<16x64xf32>, vector<16x64xf32> -> vector<16x128xf32>
    %c1_79 = arith.constant 1 : index
    %c0_80 = arith.constant 0 : index
    %c0_81 = arith.constant 0 : index
    %169 = vector.load %arg5[%c1_79, %c0_80, %c0_81] : memref<2x128x128xf32, #tpu.memory_space<vmem>>, vector<1x128x128xf32>
    %170 = vector.shape_cast %169 : vector<1x128x128xf32> to vector<128x128xf32>
    %cst_82 = arith.constant dense<0.000000e+00> : vector<16x128xf32>
    %171 = tpu.matmul %168, %170, %cst_82 {dimension_numbers = #tpu.dot_dimension_numbers<[1], [0], [0], [1], [0, 0, 1, 1], [], []>} : vector<16x128xf32>, vector<128x128xf32>, vector<16x128xf32> -> vector<16x128xf32>
    %c1_83 = arith.constant 1 : index
    %c0_84 = arith.constant 0 : index
    %c0_85 = arith.constant 0 : index
    %172 = vector.load %arg6[%c1_83, %c0_84, %c0_85] : memref<2x1x128xf32, #tpu.memory_space<vmem>>, vector<1x1x128xf32>
    %173 = vector.shape_cast %172 : vector<1x1x128xf32> to vector<1x128xf32>
    %174 = vector.broadcast %173 : vector<1x128xf32> to vector<16x128xf32>
    %175 = arith.addf %171, %174 : vector<16x128xf32>
    %176 = arith.addf %123, %175 : vector<16x128xf32>
    %c1_86 = arith.constant 1 : index
    %c0_87 = arith.constant 0 : index
    %c0_88 = arith.constant 0 : index
    %177 = vector.load %arg7[%c1_86, %c0_87, %c0_88] : memref<2x1x128xf32, #tpu.memory_space<vmem>>, vector<1x1x128xf32>
    %178 = vector.shape_cast %177 : vector<1x1x128xf32> to vector<1x128xf32>
    %c1_89 = arith.constant 1 : index
    %c0_90 = arith.constant 0 : index
    %c0_91 = arith.constant 0 : index
    %179 = vector.load %arg8[%c1_89, %c0_90, %c0_91] : memref<2x1x128xf32, #tpu.memory_space<vmem>>, vector<1x1x128xf32>
    %180 = vector.shape_cast %179 : vector<1x1x128xf32> to vector<1x128xf32>
    %cst_92 = arith.constant dense<0.000000e+00> : vector<16xf32>
    %181 = vector.multi_reduction <add>, %176, %cst_92 [1] : vector<16x128xf32> to vector<16xf32>
    %182 = vector.shape_cast %181 : vector<16xf32> to vector<16x1xf32>
    %cst_93 = arith.constant 1.280000e+02 : f32
    %183 = vector.broadcast %cst_93 : f32 to vector<16x1xf32>
    %184 = arith.divf %182, %183 : vector<16x1xf32>
    %185 = vector.broadcast %184 : vector<16x1xf32> to vector<16x128xf32>
    %186 = arith.subf %176, %185 : vector<16x128xf32>
    %187 = arith.mulf %186, %186 : vector<16x128xf32>
    %cst_94 = arith.constant dense<0.000000e+00> : vector<16xf32>
    %188 = vector.multi_reduction <add>, %187, %cst_94 [1] : vector<16x128xf32> to vector<16xf32>
    %189 = vector.shape_cast %188 : vector<16xf32> to vector<16x1xf32>
    %cst_95 = arith.constant 1.280000e+02 : f32
    %190 = vector.broadcast %cst_95 : f32 to vector<16x1xf32>
    %191 = arith.divf %189, %190 : vector<16x1xf32>
    %192 = vector.broadcast %184 : vector<16x1xf32> to vector<16x128xf32>
    %193 = arith.subf %176, %192 : vector<16x128xf32>
    %cst_96 = arith.constant 9.99999974E-6 : f32
    %194 = vector.broadcast %cst_96 : f32 to vector<16x1xf32>
    %195 = arith.addf %191, %194 : vector<16x1xf32>
    %196 = math.sqrt %195 : vector<16x1xf32>
    %197 = vector.broadcast %196 : vector<16x1xf32> to vector<16x128xf32>
    %198 = arith.divf %193, %197 : vector<16x128xf32>
    %199 = vector.broadcast %178 : vector<1x128xf32> to vector<16x128xf32>
    %200 = arith.mulf %198, %199 : vector<16x128xf32>
    %201 = vector.broadcast %180 : vector<1x128xf32> to vector<16x128xf32>
    %202 = arith.addf %200, %201 : vector<16x128xf32>
    %c1_97 = arith.constant 1 : index
    %c0_98 = arith.constant 0 : index
    %c0_99 = arith.constant 0 : index
    %203 = vector.load %arg9[%c1_97, %c0_98, %c0_99] : memref<2x128x512xf32, #tpu.memory_space<vmem>>, vector<1x128x512xf32>
    %204 = vector.shape_cast %203 : vector<1x128x512xf32> to vector<128x512xf32>
    %cst_100 = arith.constant dense<0.000000e+00> : vector<16x512xf32>
    %205 = tpu.matmul %202, %204, %cst_100 {dimension_numbers = #tpu.dot_dimension_numbers<[1], [0], [0], [1], [0, 0, 1, 1], [], []>} : vector<16x128xf32>, vector<128x512xf32>, vector<16x512xf32> -> vector<16x512xf32>
    %c1_101 = arith.constant 1 : index
    %c0_102 = arith.constant 0 : index
    %c0_103 = arith.constant 0 : index
    %206 = vector.load %arg10[%c1_101, %c0_102, %c0_103] : memref<2x1x512xf32, #tpu.memory_space<vmem>>, vector<1x1x512xf32>
    %207 = vector.shape_cast %206 : vector<1x1x512xf32> to vector<1x512xf32>
    %208 = vector.broadcast %207 : vector<1x512xf32> to vector<16x512xf32>
    %209 = arith.addf %205, %208 : vector<16x512xf32>
    %cst_104 = arith.constant 0.000000e+00 : f32
    %210 = vector.broadcast %cst_104 : f32 to vector<16x512xf32>
    %211 = arith.maximumf %209, %210 : vector<16x512xf32>
    %c1_105 = arith.constant 1 : index
    %c0_106 = arith.constant 0 : index
    %c0_107 = arith.constant 0 : index
    %212 = vector.load %arg11[%c1_105, %c0_106, %c0_107] : memref<2x512x128xf32, #tpu.memory_space<vmem>>, vector<1x512x128xf32>
    %213 = vector.shape_cast %212 : vector<1x512x128xf32> to vector<512x128xf32>
    %cst_108 = arith.constant dense<0.000000e+00> : vector<16x128xf32>
    %214 = tpu.matmul %211, %213, %cst_108 {dimension_numbers = #tpu.dot_dimension_numbers<[1], [0], [0], [1], [0, 0, 1, 1], [], []>} : vector<16x512xf32>, vector<512x128xf32>, vector<16x128xf32> -> vector<16x128xf32>
    %c1_109 = arith.constant 1 : index
    %c0_110 = arith.constant 0 : index
    %c0_111 = arith.constant 0 : index
    %215 = vector.load %arg12[%c1_109, %c0_110, %c0_111] : memref<2x1x128xf32, #tpu.memory_space<vmem>>, vector<1x1x128xf32>
    %216 = vector.shape_cast %215 : vector<1x1x128xf32> to vector<1x128xf32>
    %217 = vector.broadcast %216 : vector<1x128xf32> to vector<16x128xf32>
    %218 = arith.addf %214, %217 : vector<16x128xf32>
    %219 = arith.addf %202, %218 : vector<16x128xf32>
    %c1_112 = arith.constant 1 : index
    %c0_113 = arith.constant 0 : index
    %c0_114 = arith.constant 0 : index
    %220 = vector.load %arg13[%c1_112, %c0_113, %c0_114] : memref<2x1x128xf32, #tpu.memory_space<vmem>>, vector<1x1x128xf32>
    %221 = vector.shape_cast %220 : vector<1x1x128xf32> to vector<1x128xf32>
    %c1_115 = arith.constant 1 : index
    %c0_116 = arith.constant 0 : index
    %c0_117 = arith.constant 0 : index
    %222 = vector.load %arg14[%c1_115, %c0_116, %c0_117] : memref<2x1x128xf32, #tpu.memory_space<vmem>>, vector<1x1x128xf32>
    %223 = vector.shape_cast %222 : vector<1x1x128xf32> to vector<1x128xf32>
    %cst_118 = arith.constant dense<0.000000e+00> : vector<16xf32>
    %224 = vector.multi_reduction <add>, %219, %cst_118 [1] : vector<16x128xf32> to vector<16xf32>
    %225 = vector.shape_cast %224 : vector<16xf32> to vector<16x1xf32>
    %cst_119 = arith.constant 1.280000e+02 : f32
    %226 = vector.broadcast %cst_119 : f32 to vector<16x1xf32>
    %227 = arith.divf %225, %226 : vector<16x1xf32>
    %228 = vector.broadcast %227 : vector<16x1xf32> to vector<16x128xf32>
    %229 = arith.subf %219, %228 : vector<16x128xf32>
    %230 = arith.mulf %229, %229 : vector<16x128xf32>
    %cst_120 = arith.constant dense<0.000000e+00> : vector<16xf32>
    %231 = vector.multi_reduction <add>, %230, %cst_120 [1] : vector<16x128xf32> to vector<16xf32>
    %232 = vector.shape_cast %231 : vector<16xf32> to vector<16x1xf32>
    %cst_121 = arith.constant 1.280000e+02 : f32
    %233 = vector.broadcast %cst_121 : f32 to vector<16x1xf32>
    %234 = arith.divf %232, %233 : vector<16x1xf32>
    %235 = vector.broadcast %227 : vector<16x1xf32> to vector<16x128xf32>
    %236 = arith.subf %219, %235 : vector<16x128xf32>
    %cst_122 = arith.constant 9.99999974E-6 : f32
    %237 = vector.broadcast %cst_122 : f32 to vector<16x1xf32>
    %238 = arith.addf %234, %237 : vector<16x1xf32>
    %239 = math.sqrt %238 : vector<16x1xf32>
    %240 = vector.broadcast %239 : vector<16x1xf32> to vector<16x128xf32>
    %241 = arith.divf %236, %240 : vector<16x128xf32>
    %242 = vector.broadcast %221 : vector<1x128xf32> to vector<16x128xf32>
    %243 = arith.mulf %241, %242 : vector<16x128xf32>
    %244 = vector.broadcast %223 : vector<1x128xf32> to vector<16x128xf32>
    %245 = arith.addf %243, %244 : vector<16x128xf32>
    %246 = arith.mulf %245, %245 : vector<16x128xf32>
    %cst_123 = arith.constant dense<0.000000e+00> : vector<16xf32>
    %247 = vector.multi_reduction <add>, %246, %cst_123 [1] : vector<16x128xf32> to vector<16xf32>
    %248 = vector.shape_cast %247 : vector<16xf32> to vector<16x1xf32>
    %249 = math.sqrt %248 : vector<16x1xf32>
    %cst_124 = arith.constant 9.99999996E-13 : f32
    %250 = vector.broadcast %cst_124 : f32 to vector<16x1xf32>
    %251 = arith.maximumf %249, %250 : vector<16x1xf32>
    %252 = vector.broadcast %251 : vector<16x1xf32> to vector<16x128xf32>
    %253 = arith.divf %245, %252 : vector<16x128xf32>
    %c0_125 = arith.constant 0 : index
    %c0_126 = arith.constant 0 : index
    %254 = vector.load %arg22[%c0_125, %c0_126] : memref<16x128xf32, #tpu.memory_space<vmem>>, vector<16x128xf32>
    tpu.vector_store %arg22[%c0_125, %c0_126], %253 {strides = array<i32>} : memref<16x128xf32, #tpu.memory_space<vmem>>, vector<16x128xf32>,
    %c0_127 = arith.constant 0 : index
    %c0_128 = arith.constant 0 : index
    %255 = vector.load %arg15[%c0_127, %c0_128] : memref<128x64xf32, #tpu.memory_space<vmem>>, vector<128x64xf32>
    %cst_129 = arith.constant dense<0.000000e+00> : vector<16x64xf32>
    %256 = tpu.matmul %253, %255, %cst_129 {dimension_numbers = #tpu.dot_dimension_numbers<[1], [0], [0], [1], [0, 0, 1, 1], [], []>} : vector<16x128xf32>, vector<128x64xf32>, vector<16x64xf32> -> vector<16x64xf32>
    %c0_130 = arith.constant 0 : index
    %c0_131 = arith.constant 0 : index
    %257 = vector.load %arg16[%c0_130, %c0_131] : memref<1x64xf32, #tpu.memory_space<vmem>>, vector<1x64xf32>
    %258 = vector.broadcast %257 : vector<1x64xf32> to vector<16x64xf32>
    %259 = arith.addf %256, %258 : vector<16x64xf32>
    %c0_132 = arith.constant 0 : index
    %c0_133 = arith.constant 0 : index
    %260 = vector.load %arg23[%c0_132, %c0_133] : memref<16x64xf32, #tpu.memory_space<vmem>>, vector<16x64xf32>
    tpu.vector_store %arg23[%c0_132, %c0_133], %259 {strides = array<i32>} : memref<16x64xf32, #tpu.memory_space<vmem>>, vector<16x64xf32>,
    %261 = vector.extract_strided_slice %259 {offsets = [0, 0], sizes = [16, 32], strides = [1, 1]} : vector<16x64xf32> to vector<16x32xf32>
    %262 = vector.extract_strided_slice %259 {offsets = [0, 32], sizes = [16, 32], strides = [1, 1]} : vector<16x64xf32> to vector<16x32xf32>
    %c0_134 = arith.constant 0 : index
    %c0_135 = arith.constant 0 : index
    %263 = vector.load %arg21[%c0_134, %c0_135] : memref<16x32xf32, #tpu.memory_space<vmem>>, vector<16x32xf32>
    %cst_136 = arith.constant 5.000000e-01 : f32
    %264 = vector.broadcast %cst_136 : f32 to vector<16x32xf32>
    %265 = arith.mulf %264, %262 : vector<16x32xf32>
    %266 = math.exp %265 : vector<16x32xf32>
    %267 = arith.mulf %263, %266 : vector<16x32xf32>
    %268 = arith.addf %261, %267 : vector<16x32xf32>
    %c0_137 = arith.constant 0 : index
    %c0_138 = arith.constant 0 : index
    %269 = vector.load %arg24[%c0_137, %c0_138] : memref<16x32xf32, #tpu.memory_space<vmem>>, vector<16x32xf32>
    tpu.vector_store %arg24[%c0_137, %c0_138], %268 {strides = array<i32>} : memref<16x32xf32, #tpu.memory_space<vmem>>, vector<16x32xf32>,
    %c0_139 = arith.constant 0 : index
    %c0_140 = arith.constant 0 : index
    %270 = vector.load %arg2[%c0_139, %c0_140] : memref<8x16xf32, #tpu.memory_space<vmem>>, vector<8x16xf32>
    %cst_141 = arith.constant dense<0.000000e+00> : vector<8x32xf32>
    %271 = tpu.matmul %270, %268, %cst_141 {dimension_numbers = #tpu.dot_dimension_numbers<[1], [0], [0], [1], [0, 0, 1, 1], [], []>} : vector<8x16xf32>, vector<16x32xf32>, vector<8x32xf32> -> vector<8x32xf32>
    %c0_142 = arith.constant 0 : index
    %c0_143 = arith.constant 0 : index
    %272 = vector.load %arg17[%c0_142, %c0_143] : memref<32x128xf32, #tpu.memory_space<vmem>>, vector<32x128xf32>
    %cst_144 = arith.constant dense<0.000000e+00> : vector<8x128xf32>
    %273 = tpu.matmul %271, %272, %cst_144 {dimension_numbers = #tpu.dot_dimension_numbers<[1], [0], [0], [1], [0, 0, 1, 1], [], []>} : vector<8x32xf32>, vector<32x128xf32>, vector<8x128xf32> -> vector<8x128xf32>
    %c0_145 = arith.constant 0 : index
    %c0_146 = arith.constant 0 : index
    %274 = vector.load %arg18[%c0_145, %c0_146] : memref<1x128xf32, #tpu.memory_space<vmem>>, vector<1x128xf32>
    %275 = vector.broadcast %274 : vector<1x128xf32> to vector<8x128xf32>
    %276 = arith.addf %273, %275 : vector<8x128xf32>
    %cst_147 = arith.constant 0.000000e+00 : f32
    %277 = vector.broadcast %cst_147 : f32 to vector<8x128xf32>
    %278 = arith.maximumf %276, %277 : vector<8x128xf32>
    %c0_148 = arith.constant 0 : index
    %c0_149 = arith.constant 0 : index
    %279 = vector.load %arg19[%c0_148, %c0_149] : memref<128x1xf32, #tpu.memory_space<vmem>>, vector<128x1xf32>
    %cst_150 = arith.constant dense<0.000000e+00> : vector<8x1xf32>
    %280 = tpu.matmul %278, %279, %cst_150 {dimension_numbers = #tpu.dot_dimension_numbers<[1], [0], [0], [1], [0, 0, 1, 1], [], []>} : vector<8x128xf32>, vector<128x1xf32>, vector<8x1xf32> -> vector<8x1xf32>
    %c0_151 = arith.constant 0 : index
    %c0_152 = arith.constant 0 : index
    %281 = vector.load %arg20[%c0_151, %c0_152] : memref<1x1xf32, #tpu.memory_space<vmem>>, vector<1x1xf32>
    %282 = vector.broadcast %281 : vector<1x1xf32> to vector<8x1xf32>
    %283 = arith.addf %280, %282 : vector<8x1xf32>
    %284 = arith.negf %283 : vector<8x1xf32>
    %285 = math.exp %284 : vector<8x1xf32>
    %cst_153 = arith.constant 1.000000e+00 : f32
    %286 = vector.broadcast %cst_153 : f32 to vector<8x1xf32>
    %287 = arith.addf %286, %285 : vector<8x1xf32>
    %288 = arith.divf %286, %287 : vector<8x1xf32>
    %c0_154 = arith.constant 0 : index
    %c0_155 = arith.constant 0 : index
    %289 = vector.load %arg25[%c0_154, %c0_155] : memref<8x1xf32, #tpu.memory_space<vmem>>, vector<8x1xf32>
    tpu.vector_store %arg25[%c0_154, %c0_155], %288 {strides = array<i32>} : memref<8x1xf32, #tpu.memory_space<vmem>>, vector<8x1xf32>,
    return
  }
}

</mosaic_0001>

<llo_original>
// kernel: tpu_custom_call.1
$region0: #{tpu_custom_call.1}
  #allocation0 [shape = 'u32[]', space=smem, size = 0x4, offset = 0x4, fixed_abs, tag = 'smem constant byte address 0x4 - core index']
  #allocation1 [shape = 'u32[144,128]{1,0:T(1,128)}', space=vmem, size = 0x12000, scoped, tag = 'internal scratch']
  #allocation2 [shape = 'f32[1,1]{1,0:T(1,128)S(1)}', space=vmem, size = 0x200, scoped, tag = 'scoped memory for tpu_custom_call.1']
  %s0 = inlined_call_operand.vmem [shape: f32[16,128], index: 0, kind: input, shape index: {}]
  %s1 = inlined_call_operand.vmem [shape: f32[16,16], index: 1, kind: input, shape index: {}]
  %s2 = inlined_call_operand.hbm [shape: f32[8,16], index: 2, kind: input, shape index: {}]
  %s3 = inlined_call_operand.hbm [shape: f32[2,128,384], index: 3, kind: input, shape index: {}]
  %s4 = inlined_call_operand.hbm [shape: f32[2,1,384], index: 4, kind: input, shape index: {}]
  %s5 = inlined_call_operand.vmem [shape: f32[2,128,128], index: 5, kind: input, shape index: {}]
  %s6 = inlined_call_operand.vmem [shape: f32[2,1,128], index: 6, kind: input, shape index: {}]
  %s7 = inlined_call_operand.vmem [shape: f32[2,1,128], index: 7, kind: input, shape index: {}]
  %s8 = inlined_call_operand.vmem [shape: f32[2,1,128], index: 8, kind: input, shape index: {}]
  %s9 = inlined_call_operand.hbm [shape: f32[2,128,512], index: 9, kind: input, shape index: {}]
  %s10 = inlined_call_operand.vmem [shape: f32[2,1,512], index: 10, kind: input, shape index: {}]
  %s11 = inlined_call_operand.hbm [shape: f32[2,512,128], index: 11, kind: input, shape index: {}]
  %s12 = inlined_call_operand.vmem [shape: f32[2,1,128], index: 12, kind: input, shape index: {}]
  %s13 = inlined_call_operand.vmem [shape: f32[2,1,128], index: 13, kind: input, shape index: {}]
  %s14 = inlined_call_operand.vmem [shape: f32[2,1,128], index: 14, kind: input, shape index: {}]
  %s15 = inlined_call_operand.vmem [shape: f32[128,64], index: 15, kind: input, shape index: {}]
  %s16 = inlined_call_operand.vmem [shape: f32[1,64], index: 16, kind: input, shape index: {}]
  %s17 = inlined_call_operand.vmem [shape: f32[32,128], index: 17, kind: input, shape index: {}]
  %s18 = inlined_call_operand.vmem [shape: f32[1,128], index: 18, kind: input, shape index: {}]
  %s19 = inlined_call_operand.vmem [shape: f32[128,1], index: 19, kind: input, shape index: {}]
  %s20 = inlined_call_operand.<no memory space> [shape: f32[1,1], index: 20, kind: input, shape index: {}]
  %s21 = inlined_call_operand.vmem [shape: f32[16,32], index: 21, kind: input, shape index: {}]
  %s22 = inlined_call_operand.hbm [shape: f32[16,128], index: 22, kind: output, shape index: {0}]
  %s23 = inlined_call_operand.hbm [shape: f32[16,64], index: 23, kind: output, shape index: {1}]
  %s24 = inlined_call_operand.hbm [shape: f32[16,32], index: 24, kind: output, shape index: {2}]
  %s25 = inlined_call_operand.vmem [shape: f32[8,1], index: 25, kind: output, shape index: {3}]
  %26 = xla_tuple %s22, %s23, %s24, %s25
  %s27 = sld [smem:[#allocation0]]
  $region142: #{tpu_custom_call.1} parent=0
    _
  %s29 = ssub.s32 1, %s27
  %s30 = scalar_select 0, %s29, %s27
  %v31 = vstv %s20
  %32 = vst [vmem:[#allocation2] sm:$0x1] %v31
  $region1: #{tpu_custom_call.1} parent=0
    #allocation3 [shape = 'u8[4096]{0}', space=vmem, size = 0x1000, scoped, tag = 'input window, operand 2, single buffered']
    #allocation4 [shape = 's32[1]{0}', space=sflag, size = 0x4, scoped, tag = 'scoped memory for tpu_custom_call.1']
    #allocation5 [shape = 's32[1]{0}', space=sflag, size = 0x4, scoped, tag = 'scoped memory for tpu_custom_call.1']
    #allocation6 [shape = 'u8[393216]{0}', space=vmem, size = 0x60000, scoped, tag = 'input window, operand 3, single buffered']
    #allocation7 [shape = 's32[1]{0}', space=sflag, size = 0x4, scoped, tag = 'scoped memory for tpu_custom_call.1']
    #allocation8 [shape = 'u8[3072]{0}', space=vmem, size = 0xc00, scoped, tag = 'input window, operand 4, single buffered']
    #allocation9 [shape = 'u8[524288]{0}', space=vmem, size = 0x80000, scoped, tag = 'input window, operand 9, single buffered']
    #allocation10 [shape = 's32[1]{0}', space=sflag, size = 0x4, scoped, tag = 'scoped memory for tpu_custom_call.1']
    #allocation11 [shape = 'u8[524288]{0}', space=vmem, size = 0x80000, scoped, tag = 'input window, operand 11, single buffered']
    #allocation12 [shape = 'u8[8192]{0}', space=vmem, size = 0x2000, scoped, tag = 'output window, operand 0, single buffered']
    #allocation13 [shape = 'u8[8192]{0}', space=vmem, size = 0x2000, scoped, tag = 'output window, operand 1, single buffered']
    #allocation14 [shape = 's32[1]{0}', space=sflag, size = 0x4, scoped, tag = 'scoped memory for tpu_custom_call.1']
    #allocation15 [shape = 'u8[8192]{0}', space=vmem, size = 0x2000, scoped, tag = 'output window, operand 2, single buffered']
    %33 = vsyncpa [#allocation4], 0
    %34 = vsyncpa [#allocation7], 0
    %35 = vsyncpa [#allocation10], 0
    %36 = vsyncpa [#allocation5], 0
    %37 = vsyncpa [#allocation14], 0
    // Predicated region
    $region2: #{tpu_custom_call.1} parent=1 // pred_check
      _
    $region3: #{tpu_custom_call.1} parent=1 // pred_check_branch
      %39 = sbr.rel (0) target = $region5
    $region4: #{tpu_custom_call.1} parent=1 // pred_region
      _
    $region5: #{tpu_custom_call.1} parent=1 // pred_fallthru
      _
    // Predicated region
    $region6: #{tpu_custom_call.1} parent=1 // pred_check
      _
    $region7: #{tpu_custom_call.1} parent=1 // pred_check_branch
      %41 = sbr.rel (0) target = $region9
    $region8: #{tpu_custom_call.1} parent=1 // pred_region
      _
    $region9: #{tpu_custom_call.1} parent=1 // pred_fallthru
      _
    // Predicated region
    $region10: #{tpu_custom_call.1} parent=1 // pred_check
      _
    $region11: #{tpu_custom_call.1} parent=1 // pred_check_branch
      %43 = sbr.rel (0) target = $region13
    $region12: #{tpu_custom_call.1} parent=1 // pred_region
      %s45 = ssub.s32 128, 128
      %46 = vsyncadd [#allocation4], %s45
      %s48 = sshll.u32 [#allocation3], 4
      %s49 = int_to_ptr.vmem [resolvable:$true] %s48
      %51 = dma.hbm_to_vmem [thread:$0]  %s2, 128, %s49, [#allocation4]
    $region13: #{tpu_custom_call.1} parent=1 // pred_fallthru
      _
    // Predicated region
    $region14: #{tpu_custom_call.1} parent=1 // pred_check
      _
    $region15: #{tpu_custom_call.1} parent=1 // pred_check_branch
      %53 = sbr.rel (0) target = $region17
    $region16: #{tpu_custom_call.1} parent=1 // pred_region
      %s55 = ssub.s32 12288, 12288
      %56 = vsyncadd [#allocation7], %s55
      %s57 = sshll.u32 [#allocation6], 4
      %s58 = int_to_ptr.vmem [resolvable:$true] %s57
      %63 = dma.hbm_to_vmem [thread:$0]  %s3, 12288, %s58, [#allocation7], 384, 384, 24
    $region17: #{tpu_custom_call.1} parent=1 // pred_fallthru
      _
    // Predicated region
    $region18: #{tpu_custom_call.1} parent=1 // pred_check
      _
    $region19: #{tpu_custom_call.1} parent=1 // pred_check_branch
      %65 = sbr.rel (0) target = $region21
    $region20: #{tpu_custom_call.1} parent=1 // pred_region
      %s67 = ssub.s32 96, 96
      %68 = vsyncadd [#allocation7], %s67
      %s69 = sshll.u32 [#allocation8], 4
      %s70 = int_to_ptr.vmem [resolvable:$true] %s69
      %75 = dma.hbm_to_vmem [thread:$0]  %s4, 96, %s70, [#allocation7], 48, 48, 3
    $region21: #{tpu_custom_call.1} parent=1 // pred_fallthru
      _
    // Predicated region
    $region22: #{tpu_custom_call.1} parent=1 // pred_check
      _
    $region23: #{tpu_custom_call.1} parent=1 // pred_check_branch
      %77 = sbr.rel (0) target = $region25
    $region24: #{tpu_custom_call.1} parent=1 // pred_region
      _
    $region25: #{tpu_custom_call.1} parent=1 // pred_fallthru
      _
    // Predicated region
    $region26: #{tpu_custom_call.1} parent=1 // pred_check
      _
    $region27: #{tpu_custom_call.1} parent=1 // pred_check_branch
      %79 = sbr.rel (0) target = $region29
    $region28: #{tpu_custom_call.1} parent=1 // pred_region
      _
    $region29: #{tpu_custom_call.1} parent=1 // pred_fallthru
      _
    // Predicated region
    $region30: #{tpu_custom_call.1} parent=1 // pred_check
      _
    $region31: #{tpu_custom_call.1} parent=1 // pred_check_branch
      %81 = sbr.rel (0) target = $region33
    $region32: #{tpu_custom_call.1} parent=1 // pred_region
      _
    $region33: #{tpu_custom_call.1} parent=1 // pred_fallthru
      _
    // Predicated region
    $region34: #{tpu_custom_call.1} parent=1 // pred_check
      _
    $region35: #{tpu_custom_call.1} parent=1 // pred_check_branch
      %83 = sbr.rel (0) target = $region37
    $region36: #{tpu_custom_call.1} parent=1 // pred_region
      _
    $region37: #{tpu_custom_call.1} parent=1 // pred_fallthru
      _
    // Predicated region
    $region38: #{tpu_custom_call.1} parent=1 // pred_check
      _
    $region39: #{tpu_custom_call.1} parent=1 // pred_check_branch
      %85 = sbr.rel (0) target = $region41
    $region40: #{tpu_custom_call.1} parent=1 // pred_region
      %s87 = ssub.s32 16384, 16384
      %88 = vsyncadd [#allocation10], %s87
      %s89 = sshll.u32 [#allocation9], 4
      %s90 = int_to_ptr.vmem [resolvable:$true] %s89
      %95 = dma.hbm_to_vmem [thread:$0]  %s9, 16384, %s90, [#allocation10], 512, 512, 32
    $region41: #{tpu_custom_call.1} parent=1 // pred_fallthru
      _
    // Predicated region
    $region42: #{tpu_custom_call.1} parent=1 // pred_check
      _
    $region43: #{tpu_custom_call.1} parent=1 // pred_check_branch
      %97 = sbr.rel (0) target = $region45
    $region44: #{tpu_custom_call.1} parent=1 // pred_region
      _
    $region45: #{tpu_custom_call.1} parent=1 // pred_fallthru
      _
    // Predicated region
    $region46: #{tpu_custom_call.1} parent=1 // pred_check
      _
    $region47: #{tpu_custom_call.1} parent=1 // pred_check_branch
      %99 = sbr.rel (0) target = $region49
    $region48: #{tpu_custom_call.1} parent=1 // pred_region
      %s101 = ssub.s32 16384, 16384
      %102 = vsyncadd [#allocation10], %s101
      %s103 = sshll.u32 [#allocation11], 4
      %s104 = int_to_ptr.vmem [resolvable:$true] %s103
      %109 = dma.hbm_to_vmem [thread:$0]  %s11, 16384, %s104, [#allocation10], 128, 128, 8
    $region49: #{tpu_custom_call.1} parent=1 // pred_fallthru
      _
    // Predicated region
    $region50: #{tpu_custom_call.1} parent=1 // pred_check
      _
    $region51: #{tpu_custom_call.1} parent=1 // pred_check_branch
      %111 = sbr.rel (0) target = $region53
    $region52: #{tpu_custom_call.1} parent=1 // pred_region
      _
    $region53: #{tpu_custom_call.1} parent=1 // pred_fallthru
      _
    // Predicated region
    $region54: #{tpu_custom_call.1} parent=1 // pred_check
      _
    $region55: #{tpu_custom_call.1} parent=1 // pred_check_branch
      %113 = sbr.rel (0) target = $region57
    $region56: #{tpu_custom_call.1} parent=1 // pred_region
      _
    $region57: #{tpu_custom_call.1} parent=1 // pred_fallthru
      _
    // Predicated region
    $region58: #{tpu_custom_call.1} parent=1 // pred_check
      _
    $region59: #{tpu_custom_call.1} parent=1 // pred_check_branch
      %115 = sbr.rel (0) target = $region61
    $region60: #{tpu_custom_call.1} parent=1 // pred_region
      _
    $region61: #{tpu_custom_call.1} parent=1 // pred_fallthru
      _
    // Predicated region
    $region62: #{tpu_custom_call.1} parent=1 // pred_check
      _
    $region63: #{tpu_custom_call.1} parent=1 // pred_check_branch
      %117 = sbr.rel (0) target = $region65
    $region64: #{tpu_custom_call.1} parent=1 // pred_region
      _
    $region65: #{tpu_custom_call.1} parent=1 // pred_fallthru
      _
    // Predicated region
    $region66: #{tpu_custom_call.1} parent=1 // pred_check
      _
    $region67: #{tpu_custom_call.1} parent=1 // pred_check_branch
      %119 = sbr.rel (0) target = $region69
    $region68: #{tpu_custom_call.1} parent=1 // pred_region
      _
    $region69: #{tpu_custom_call.1} parent=1 // pred_fallthru
      _
    // Predicated region
    $region70: #{tpu_custom_call.1} parent=1 // pred_check
      _
    $region71: #{tpu_custom_call.1} parent=1 // pred_check_branch
      %121 = sbr.rel (0) target = $region73
    $region72: #{tpu_custom_call.1} parent=1 // pred_region
      _
    $region73: #{tpu_custom_call.1} parent=1 // pred_fallthru
      _
    // Predicated region
    $region74: #{tpu_custom_call.1} parent=1 // pred_check
      _
    $region75: #{tpu_custom_call.1} parent=1 // pred_check_branch
      %123 = sbr.rel (0) target = $region77
    $region76: #{tpu_custom_call.1} parent=1 // pred_region
      _
    $region77: #{tpu_custom_call.1} parent=1 // pred_fallthru
      _
    // Predicated region
    $region78: #{tpu_custom_call.1} parent=1 // pred_check
      _
    $region79: #{tpu_custom_call.1} parent=1 // pred_check_branch
      %125 = sbr.rel (0) target = $region81
    $region80: #{tpu_custom_call.1} parent=1 // pred_region
      _
    $region81: #{tpu_custom_call.1} parent=1 // pred_fallthru
      _
    // Predicated region
    $region82: #{tpu_custom_call.1} parent=1 // pred_check
      _
    $region83: #{tpu_custom_call.1} parent=1 // pred_check_branch
      %127 = sbr.rel (0) target = $region85
    $region84: #{tpu_custom_call.1} parent=1 // pred_region
      _
    $region85: #{tpu_custom_call.1} parent=1 // pred_fallthru
      _
    // Predicated region
    $region86: #{tpu_custom_call.1} parent=1 // pred_check
      _
    $region87: #{tpu_custom_call.1} parent=1 // pred_check_branch
      %129 = sbr.rel (0) target = $region89
    $region88: #{tpu_custom_call.1} parent=1 // pred_region
      _
    $region89: #{tpu_custom_call.1} parent=1 // pred_fallthru
      _
    // Predicated region
    $region90: #{tpu_custom_call.1} parent=1 // pred_check
      _
    $region91: #{tpu_custom_call.1} parent=1 // pred_check_branch
      %131 = sbr.rel (0) target = $region93
    $region92: #{tpu_custom_call.1} parent=1 // pred_region
      %132 = dma.done [#allocation4], 128
    $region93: #{tpu_custom_call.1} parent=1 // pred_fallthru
      _
    // Predicated region
    $region94: #{tpu_custom_call.1} parent=1 // pred_check
      _
    $region95: #{tpu_custom_call.1} parent=1 // pred_check_branch
      %134 = sbr.rel (0) target = $region97
    $region96: #{tpu_custom_call.1} parent=1 // pred_region
      %135 = dma.done [#allocation7], 12288
    $region97: #{tpu_custom_call.1} parent=1 // pred_fallthru
      _
    // Predicated region
    $region98: #{tpu_custom_call.1} parent=1 // pred_check
      _
    $region99: #{tpu_custom_call.1} parent=1 // pred_check_branch
      %137 = sbr.rel (0) target = $region101
    $region100: #{tpu_custom_call.1} parent=1 // pred_region
      %138 = dma.done [#allocation7], 96
    $region101: #{tpu_custom_call.1} parent=1 // pred_fallthru
      _
    // Predicated region
    $region102: #{tpu_custom_call.1} parent=1 // pred_check
      _
    $region103: #{tpu_custom_call.1} parent=1 // pred_check_branch
      %140 = sbr.rel (0) target = $region105
    $region104: #{tpu_custom_call.1} parent=1 // pred_region
      %141 = dma.done [#allocation10], 16384
    $region105: #{tpu_custom_call.1} parent=1 // pred_fallthru
      _
    // Predicated region
    $region106: #{tpu_custom_call.1} parent=1 // pred_check
      _
    $region107: #{tpu_custom_call.1} parent=1 // pred_check_branch
      %143 = sbr.rel (0) target = $region109
    $region108: #{tpu_custom_call.1} parent=1 // pred_region
      %144 = dma.done [#allocation10], 16384
    $region109: #{tpu_custom_call.1} parent=1 // pred_fallthru
      _
    %v145 = vld [vmem:[%s0] sm:$0xff]
    %v146 = vld [vmem:[%s0 + $0x8] sm:$0xff]
    %v147 = vld [vmem:[%s1] sm:$0xff]
    %v148 = vld [vmem:[%s1 + $0x8] sm:$0xff]
    %v149 = vld [vmem:[#allocation6] sm:$0xff]
    %v150 = vld [vmem:[#allocation6 + $0x8] sm:$0xff]
    %v151 = vld [vmem:[#allocation6 + $0x10] sm:$0xff]
    %v152 = vld [vmem:[#allocation6 + $0x18] sm:$0xff]
    %v153 = vld [vmem:[#allocation6 + $0x20] sm:$0xff]
    %v154 = vld [vmem:[#allocation6 + $0x28] sm:$0xff]
    %v155 = vld [vmem:[#allocation6 + $0x30] sm:$0xff]
    %v156 = vld [vmem:[#allocation6 + $0x38] sm:$0xff]
    %v157 = vld [vmem:[#allocation6 + $0x40] sm:$0xff]
    %v158 = vld [vmem:[#allocation6 + $0x48] sm:$0xff]
    %v159 = vld [vmem:[#allocation6 + $0x50] sm:$0xff]
    %v160 = vld [vmem:[#allocation6 + $0x58] sm:$0xff]
    %v161 = vld [vmem:[#allocation6 + $0x60] sm:$0xff]
    %v162 = vld [vmem:[#allocation6 + $0x68] sm:$0xff]
    %v163 = vld [vmem:[#allocation6 + $0x70] sm:$0xff]
    %v164 = vld [vmem:[#allocation6 + $0x78] sm:$0xff]
    %v165 = vld [vmem:[#allocation6 + $0x80] sm:$0xff]
    %v166 = vld [vmem:[#allocation6 + $0x88] sm:$0xff]
    %v167 = vld [vmem:[#allocation6 + $0x90] sm:$0xff]
    %v168 = vld [vmem:[#allocation6 + $0x98] sm:$0xff]
    %v169 = vld [vmem:[#allocation6 + $0xa0] sm:$0xff]
    %v170 = vld [vmem:[#allocation6 + $0xa8] sm:$0xff]
    %v171 = vld [vmem:[#allocation6 + $0xb0] sm:$0xff]
    %v172 = vld [vmem:[#allocation6 + $0xb8] sm:$0xff]
    %v173 = vld [vmem:[#allocation6 + $0xc0] sm:$0xff]
    %v174 = vld [vmem:[#allocation6 + $0xc8] sm:$0xff]
    %v175 = vld [vmem:[#allocation6 + $0xd0] sm:$0xff]
    %v176 = vld [vmem:[#allocation6 + $0xd8] sm:$0xff]
    %v177 = vld [vmem:[#allocation6 + $0xe0] sm:$0xff]
    %v178 = vld [vmem:[#allocation6 + $0xe8] sm:$0xff]
    %v179 = vld [vmem:[#allocation6 + $0xf0] sm:$0xff]
    %v180 = vld [vmem:[#allocation6 + $0xf8] sm:$0xff]
    %v181 = vld [vmem:[#allocation6 + $0x100] sm:$0xff]
    %v182 = vld [vmem:[#allocation6 + $0x108] sm:$0xff]
    %v183 = vld [vmem:[#allocation6 + $0x110] sm:$0xff]
    %v184 = vld [vmem:[#allocation6 + $0x118] sm:$0xff]
    %v185 = vld [vmem:[#allocation6 + $0x120] sm:$0xff]
    %v186 = vld [vmem:[#allocation6 + $0x128] sm:$0xff]
    %v187 = vld [vmem:[#allocation6 + $0x130] sm:$0xff]
    %v188 = vld [vmem:[#allocation6 + $0x138] sm:$0xff]
    %v189 = vld [vmem:[#allocation6 + $0x140] sm:$0xff]
    %v190 = vld [vmem:[#allocation6 + $0x148] sm:$0xff]
    %v191 = vld [vmem:[#allocation6 + $0x150] sm:$0xff]
    %v192 = vld [vmem:[#allocation6 + $0x158] sm:$0xff]
    %v193 = vld [vmem:[#allocation6 + $0x160] sm:$0xff]
    %v194 = vld [vmem:[#allocation6 + $0x168] sm:$0xff]
    %v195 = vld [vmem:[#allocation6 + $0x170] sm:$0xff]
    %v196 = vld [vmem:[#allocation6 + $0x178] sm:$0xff]
    %v197 = vld [vmem:[#allocation8] sm:$0x7]
    %v199 = vlaneseq
    %v200 = vshrl.u32 %v199, 7
    %v201 = vsub.s32 0, %v200
    %v202 = vrot.slane %v197, %v201
    %v203 = vlaneseq
    %v204 = vshrl.u32 %v203, 7
    %v205 = vsub.s32 1, %v204
    %v206 = vrot.slane %v197, %v205
    %v207 = vlaneseq
    %v208 = vshrl.u32 %v207, 7
    %v209 = vsub.s32 2, %v208
    %v210 = vrot.slane %v197, %v209
    %214 = vmatprep.subr.mxu0 %v150
    %215 = vmatpush1.msra.mxu0 %v149
    %216 = vmatprep.subr.mxu0 %v153
    %217 = vmatpush1.msra.mxu0 %v152
    %218 = vmatprep.subr.mxu0 %v156
    %219 = vmatpush1.msra.mxu0 %v155
    %220 = vmatprep.subr.mxu0 %v159
    %221 = vmatpush1.msra.mxu0 %v158
    %222 = vmatprep.subr.mxu0 %v162
    %223 = vmatpush1.msra.mxu0 %v161
    %224 = vmatprep.subr.mxu0 %v165
    %225 = vmatpush1.msra.mxu0 %v164
    %226 = vmatprep.subr.mxu0 %v168
    %227 = vmatpush1.msra.mxu0 %v167
    %228 = vmatprep.subr.mxu0 %v171
    %229 = vmatpush1.msra.mxu0 %v170
    %230 = vmatprep.subr.mxu0 %v174
    %231 = vmatpush1.msra.mxu0 %v173
    %232 = vmatprep.subr.mxu0 %v177
    %233 = vmatpush1.msra.mxu0 %v176
    %234 = vmatprep.subr.mxu0 %v180
    %235 = vmatpush1.msra.mxu0 %v179
    %236 = vmatprep.subr.mxu0 %v183
    %237 = vmatpush1.msra.mxu0 %v182
    %238 = vmatprep.subr.mxu0 %v186
    %239 = vmatpush1.msra.mxu0 %v185
    %240 = vmatprep.subr.mxu0 %v189
    %241 = vmatpush1.msra.mxu0 %v188
    %242 = vmatprep.subr.mxu0 %v192
    %243 = vmatpush1.msra.mxu0 %v191
    %244 = vmatprep.subr.mxu0 %v195
    %245 = vmatpush1.msra.mxu0 %v194
    %246 = vmatprep.subr.mxu0 0.0
    %247 = vmatpush1.msra.mxu0 0.0
    %248 = vmatprep.subr.mxu0 0.0
    %249 = vmatpush1.msra.mxu0 0.0
    %250 = vmatprep.subr.mxu0 0.0
    %251 = vmatpush1.msra.mxu0 0.0
    %252 = vmatprep.subr.mxu0 0.0
    %253 = vmatpush1.msra.mxu0 0.0
    %254 = vmatprep.subr.mxu0 0.0
    %255 = vmatpush1.msra.mxu0 0.0
    %256 = vmatprep.subr.mxu0 0.0
    %257 = vmatpush1.msra.mxu0 0.0
    %258 = vmatprep.subr.mxu0 0.0
    %259 = vmatpush1.msra.mxu0 0.0
    %260 = vmatprep.subr.mxu0 0.0
    %261 = vmatpush1.msra.mxu0 0.0
    %262 = vmatprep.subr.mxu0 0.0
    %263 = vmatpush1.msra.mxu0 0.0
    %264 = vmatprep.subr.mxu0 0.0
    %265 = vmatpush1.msra.mxu0 0.0
    %266 = vmatprep.subr.mxu0 0.0
    %267 = vmatpush1.msra.mxu0 0.0
    %268 = vmatprep.subr.mxu0 0.0
    %269 = vmatpush1.msra.mxu0 0.0
    %270 = vmatprep.subr.mxu0 0.0
    %271 = vmatpush1.msra.mxu0 0.0
    %272 = vmatprep.subr.mxu0 0.0
    %273 = vmatpush1.msra.mxu0 0.0
    %274 = vmatprep.subr.mxu0 0.0
    %275 = vmatpush1.msra.mxu0 0.0
    %276 = vmatprep.subr.mxu0 0.0
    %277 = vmatpush1.msra.mxu0 0.0
    %278 = vmatprep.mubr.f32.mxu0 0.0
    %279 = vmatmul.mubr.f32.gmra.mrb[0].mxu0 %v145
    %v280 = vpop.f32.mrb[0].mxu0
    %v281 = vadd.f32 %v202, %v280
    %v282 = vpop.f32.mrb[0].mxu0
    %v283 = vadd.f32 %v206, %v282
    %284 = vmatprep.mubr.f32.mxu0 0.0
    %285 = vmatmul.mubr.f32.gmra.mrb[0].mxu0 %v146
    %v286 = vpop.f32.mrb[0].mxu0
    %v287 = vadd.f32 %v202, %v286
    %v288 = vpop.f32.mrb[0].mxu0
    %v289 = vadd.f32 %v206, %v288
    %290 = vdwg.mxu0
    %291 = vmatprep.subr.mxu0 0.0
    %292 = vmatpush1.msra.mxu0 %v151
    %293 = vmatprep.subr.mxu0 0.0
    %294 = vmatpush1.msra.mxu0 %v154
    %295 = vmatprep.subr.mxu0 0.0
    %296 = vmatpush1.msra.mxu0 %v157
    %297 = vmatprep.subr.mxu0 0.0
    %298 = vmatpush1.msra.mxu0 %v160
    %299 = vmatprep.subr.mxu0 0.0
    %300 = vmatpush1.msra.mxu0 %v163
    %301 = vmatprep.subr.mxu0 0.0
    %302 = vmatpush1.msra.mxu0 %v166
    %303 = vmatprep.subr.mxu0 0.0
    %304 = vmatpush1.msra.mxu0 %v169
    %305 = vmatprep.subr.mxu0 0.0
    %306 = vmatpush1.msra.mxu0 %v172
    %307 = vmatprep.subr.mxu0 0.0
    %308 = vmatpush1.msra.mxu0 %v175
    %309 = vmatprep.subr.mxu0 0.0
    %310 = vmatpush1.msra.mxu0 %v178
    %311 = vmatprep.subr.mxu0 0.0
    %312 = vmatpush1.msra.mxu0 %v181
    %313 = vmatprep.subr.mxu0 0.0
    %314 = vmatpush1.msra.mxu0 %v184
    %315 = vmatprep.subr.mxu0 0.0
    %316 = vmatpush1.msra.mxu0 %v187
    %317 = vmatprep.subr.mxu0 0.0
    %318 = vmatpush1.msra.mxu0 %v190
    %319 = vmatprep.subr.mxu0 0.0
    %320 = vmatpush1.msra.mxu0 %v193
    %321 = vmatprep.subr.mxu0 0.0
    %322 = vmatpush1.msra.mxu0 %v196
    %323 = vmatprep.subr.mxu0 0.0
    %324 = vmatpush1.msra.mxu0 0.0
    %325 = vmatprep.subr.mxu0 0.0
    %326 = vmatpush1.msra.mxu0 0.0
    %327 = vmatprep.subr.mxu0 0.0
    %328 = vmatpush1.msra.mxu0 0.0
    %329 = vmatprep.subr.mxu0 0.0
    %330 = vmatpush1.msra.mxu0 0.0
    %331 = vmatprep.subr.mxu0 0.0
    %332 = vmatpush1.msra.mxu0 0.0
    %333 = vmatprep.subr.mxu0 0.0
    %334 = vmatpush1.msra.mxu0 0.0
    %335 = vmatprep.subr.mxu0 0.0
    %336 = vmatpush1.msra.mxu0 0.0
    %337 = vmatprep.subr.mxu0 0.0
    %338 = vmatpush1.msra.mxu0 0.0
    %339 = vmatprep.subr.mxu0 0.0
    %340 = vmatpush1.msra.mxu0 0.0
    %341 = vmatprep.subr.mxu0 0.0
    %342 = vmatpush1.msra.mxu0 0.0
    %343 = vmatprep.subr.mxu0 0.0
    %344 = vmatpush1.msra.mxu0 0.0
    %345 = vmatprep.subr.mxu0 0.0
    %346 = vmatpush1.msra.mxu0 0.0
    %347 = vmatprep.subr.mxu0 0.0
    %348 = vmatpush1.msra.mxu0 0.0
    %349 = vmatprep.subr.mxu0 0.0
    %350 = vmatpush1.msra.mxu0 0.0
    %351 = vmatprep.subr.mxu0 0.0
    %352 = vmatpush1.msra.mxu0 0.0
    %353 = vmatprep.subr.mxu0 0.0
    %354 = vmatpush1.msra.mxu0 0.0
    %355 = vmatprep.mubr.f32.mxu0 0.0
    %356 = vmatmul.mubr.f32.gmra.mrb[0].mxu0 %v145
    %v357 = vpop.f32.mrb[0].mxu0
    %v358 = vadd.f32 %v210, %v357
    %v359 = vpop.f32.mrb[0].mxu0
    %360 = vmatprep.mubr.f32.mxu0 0.0
    %361 = vmatmul.mubr.f32.gmra.mrb[0].mxu0 %v146
    %v362 = vpop.f32.mrb[0].mxu0
    %v363 = vadd.f32 %v210, %v362
    %v364 = vpop.f32.mrb[0].mxu0
    %365 = vdwg.mxu0
    %vm366 = vcmask 523264
    %v368 = vsel %vm366, %v281, 0
    %v371 = vsel %vm366, %v287, 0
    %v374 = vsel %vm366, %v283, 0
    %v377 = vsel %vm366, %v289, 0
    %379 = vmatprep.subr.mxu0 0.0
    %380 = vmatpush1.xpose.msra.mxu0 %v374
    %381 = vmatprep.subr.mxu0 0.0
    %382 = vmatpush1.xpose.msra.mxu0 %v377
    %383 = vmatprep.subr.mxu0 0.0
    %384 = vmatpush1.xpose.msra.mxu0 0.0
    %385 = vmatprep.subr.mxu0 0.0
    %386 = vmatpush1.xpose.msra.mxu0 0.0
    %387 = vmatprep.subr.mxu0 0.0
    %388 = vmatpush1.xpose.msra.mxu0 0.0
    %389 = vmatprep.subr.mxu0 0.0
    %390 = vmatpush1.xpose.msra.mxu0 0.0
    %391 = vmatprep.subr.mxu0 0.0
    %392 = vmatpush1.xpose.msra.mxu0 0.0
    %393 = vmatprep.subr.mxu0 0.0
    %394 = vmatpush1.xpose.msra.mxu0 0.0
    %395 = vmatprep.subr.mxu0 0.0
    %396 = vmatpush1.xpose.msra.mxu0 0.0
    %397 = vmatprep.subr.mxu0 0.0
    %398 = vmatpush1.xpose.msra.mxu0 0.0
    %399 = vmatprep.subr.mxu0 0.0
    %400 = vmatpush1.xpose.msra.mxu0 0.0
    %401 = vmatprep.subr.mxu0 0.0
    %402 = vmatpush1.xpose.msra.mxu0 0.0
    %403 = vmatprep.subr.mxu0 0.0
    %404 = vmatpush1.xpose.msra.mxu0 0.0
    %405 = vmatprep.subr.mxu0 0.0
    %406 = vmatpush1.xpose.msra.mxu0 0.0
    %407 = vmatprep.subr.mxu0 0.0
    %408 = vmatpush1.xpose.msra.mxu0 0.0
    %409 = vmatprep.subr.mxu0 0.0
    %410 = vmatpush1.xpose.msra.mxu0 0.0
    %411 = vmatprep.subr.mxu0 0.0
    %412 = vmatpush1.xpose.msra.mxu0 0.0
    %413 = vmatprep.subr.mxu0 0.0
    %414 = vmatpush1.xpose.msra.mxu0 0.0
    %415 = vmatprep.subr.mxu0 0.0
    %416 = vmatpush1.xpose.msra.mxu0 0.0
    %417 = vmatprep.subr.mxu0 0.0
    %418 = vmatpush1.xpose.msra.mxu0 0.0
    %419 = vmatprep.subr.mxu0 0.0
    %420 = vmatpush1.xpose.msra.mxu0 0.0
    %421 = vmatprep.subr.mxu0 0.0
    %422 = vmatpush1.xpose.msra.mxu0 0.0
    %423 = vmatprep.subr.mxu0 0.0
    %424 = vmatpush1.xpose.msra.mxu0 0.0
    %425 = vmatprep.subr.mxu0 0.0
    %426 = vmatpush1.xpose.msra.mxu0 0.0
    %427 = vmatprep.subr.mxu0 0.0
    %428 = vmatpush1.xpose.msra.mxu0 0.0
    %429 = vmatprep.subr.mxu0 0.0
    %430 = vmatpush1.xpose.msra.mxu0 0.0
    %431 = vmatprep.subr.mxu0 0.0
    %432 = vmatpush1.xpose.msra.mxu0 0.0
    %433 = vmatprep.subr.mxu0 0.0
    %434 = vmatpush1.xpose.msra.mxu0 0.0
    %435 = vmatprep.subr.mxu0 0.0
    %436 = vmatpush1.xpose.msra.mxu0 0.0
    %437 = vmatprep.subr.mxu0 0.0
    %438 = vmatpush1.xpose.msra.mxu0 0.0
    %439 = vmatprep.subr.mxu0 0.0
    %440 = vmatpush1.xpose.msra.mxu0 0.0
    %441 = vmatprep.subr.mxu0 0.0
    %442 = vmatpush1.xpose.msra.mxu0 0.0
    %443 = vmatprep.mubr.f32.mxu0 0.0
    %444 = vmatmul.mubr.f32.gmra.mrb[0].mxu0 %v368
    %v445 = vpop.f32.mrb[0].mxu0
    %v446 = vadd.f32 0.0, %v445
    %v447 = vpop.f32.mrb[0].mxu0
    %448 = vmatprep.mubr.f32.mxu0 0.0
    %449 = vmatmul.mubr.f32.gmra.mrb[0].mxu0 %v371
    %v450 = vpop.f32.mrb[0].mxu0
    %v451 = vadd.f32 0.0, %v450
    %v452 = vpop.f32.mrb[0].mxu0
    %453 = vdwg.mxu0
    %v454 = vmul.f32 %v446, 0.125
    %v455 = vmul.f32 %v451, 0.125
    %v456 = vadd.f32 %v454, %v147
    %v457 = vadd.f32 %v455, %v148
    %vm458 = vcmask 130048
    %v459 = vsel %vm458, %v456, -inf
    %460 = vmax.xlane.f32.xlu0 %v459
    %v461 = vpop.xlane.xlu0 %460
    %v462 = vsel %vm458, %v457, -inf
    %463 = vmax.xlane.f32.xlu0 %v462
    %v464 = vpop.xlane.xlu0 %463
    %v465 = vsub.f32 %v456, %v461
    %v466 = vsub.f32 %v457, %v464
    %v467 = vmul.f32 %v465, 1.442695
    %v468 = vpow.pop %v467
    %v469 = vmul.f32 %v466, 1.442695
    %v470 = vpow.pop %v469
    %v471 = vsel %vm458, %v468, 0.0
    %472 = vadd.xlane.f32.xlu0 %v471
    %v473 = vpop.xlane.xlu0 %472
    %v474 = vsel %vm458, %v470, 0.0
    %475 = vadd.xlane.f32.xlu0 %v474
    %v476 = vpop.xlane.xlu0 %475
    %v477 = vrcp.pop %v473
    %v478 = vmul.f32 %v468, %v477
    %v479 = vrcp.pop %v476
    %v480 = vmul.f32 %v470, %v479
    %v482 = vsel %vm458, %v478, 0
    %v485 = vsel %vm458, %v480, 0
    %487 = vmatprep.subr.mxu0 0.0
    %488 = vmatpush1.msra.mxu0 %v358
    %489 = vmatprep.subr.mxu0 0.0
    %490 = vmatpush1.msra.mxu0 %v363
    %491 = vmatprep.subr.mxu0 0.0
    %492 = vmatpush1.msra.mxu0 0.0
    %493 = vmatprep.subr.mxu0 0.0
    %494 = vmatpush1.msra.mxu0 0.0
    %495 = vmatprep.subr.mxu0 0.0
    %496 = vmatpush1.msra.mxu0 0.0
    %497 = vmatprep.subr.mxu0 0.0
    %498 = vmatpush1.msra.mxu0 0.0
    %499 = vmatprep.subr.mxu0 0.0
    %500 = vmatpush1.msra.mxu0 0.0
    %501 = vmatprep.subr.mxu0 0.0
    %502 = vmatpush1.msra.mxu0 0.0
    %503 = vmatprep.subr.mxu0 0.0
    %504 = vmatpush1.msra.mxu0 0.0
    %505 = vmatprep.subr.mxu0 0.0
    %506 = vmatpush1.msra.mxu0 0.0
    %507 = vmatprep.subr.mxu0 0.0
    %508 = vmatpush1.msra.mxu0 0.0
    %509 = vmatprep.subr.mxu0 0.0
    %510 = vmatpush1.msra.mxu0 0.0
    %511 = vmatprep.subr.mxu0 0.0
    %512 = vmatpush1.msra.mxu0 0.0
    %513 = vmatprep.subr.mxu0 0.0
    %514 = vmatpush1.msra.mxu0 0.0
    %515 = vmatprep.subr.mxu0 0.0
    %516 = vmatpush1.msra.mxu0 0.0
    %517 = vmatprep.subr.mxu0 0.0
    %518 = vmatpush1.msra.mxu0 0.0
    %519 = vmatprep.subr.mxu0 0.0
    %520 = vmatpush1.msra.mxu0 0.0
    %521 = vmatprep.subr.mxu0 0.0
    %522 = vmatpush1.msra.mxu0 0.0
    %523 = vmatprep.subr.mxu0 0.0
    %524 = vmatpush1.msra.mxu0 0.0
    %525 = vmatprep.subr.mxu0 0.0
    %526 = vmatpush1.msra.mxu0 0.0
    %527 = vmatprep.subr.mxu0 0.0
    %528 = vmatpush1.msra.mxu0 0.0
    %529 = vmatprep.subr.mxu0 0.0
    %530 = vmatpush1.msra.mxu0 0.0
    %531 = vmatprep.subr.mxu0 0.0
    %532 = vmatpush1.msra.mxu0 0.0
    %533 = vmatprep.subr.mxu0 0.0
    %534 = vmatpush1.msra.mxu0 0.0
    %535 = vmatprep.subr.mxu0 0.0
    %536 = vmatpush1.msra.mxu0 0.0
    %537 = vmatprep.subr.mxu0 0.0
    %538 = vmatpush1.msra.mxu0 0.0
    %539 = vmatprep.subr.mxu0 0.0
    %540 = vmatpush1.msra.mxu0 0.0
    %541 = vmatprep.subr.mxu0 0.0
    %542 = vmatpush1.msra.mxu0 0.0
    %543 = vmatprep.subr.mxu0 0.0
    %544 = vmatpush1.msra.mxu0 0.0
    %545 = vmatprep.subr.mxu0 0.0
    %546 = vmatpush1.msra.mxu0 0.0
    %547 = vmatprep.subr.mxu0 0.0
    %548 = vmatpush1.msra.mxu0 0.0
    %549 = vmatprep.subr.mxu0 0.0
    %550 = vmatpush1.msra.mxu0 0.0
    %551 = vmatprep.mubr.f32.mxu0 0.0
    %552 = vmatmul.mubr.f32.gmra.mrb[0].mxu0 %v482
    %v553 = vpop.f32.mrb[0].mxu0
    %v554 = vadd.f32 0.0, %v553
    %v555 = vpop.f32.mrb[0].mxu0
    %556 = vmatprep.mubr.f32.mxu0 0.0
    %557 = vmatmul.mubr.f32.gmra.mrb[0].mxu0 %v485
    %v558 = vpop.f32.mrb[0].mxu0
    %v559 = vadd.f32 0.0, %v558
    %v560 = vpop.f32.mrb[0].mxu0
    %561 = vdwg.mxu0
    %562 = vrot.lane.b32.xlu0 %v281, 64
    %v563 = vpop.permute.xlu0 %562
    %564 = vrot.lane.b32.xlu0 %v287, 64
    %v565 = vpop.permute.xlu0 %564
    %566 = vrot.lane.b32.xlu0 %v283, 64
    %v567 = vpop.permute.xlu0 %566
    %568 = vrot.lane.b32.xlu0 %v289, 64
    %v569 = vpop.permute.xlu0 %568
    %v570 = vsel %vm366, %v563, 0
    %v572 = vsel %vm366, %v565, 0
    %v574 = vsel %vm366, %v567, 0
    %v576 = vsel %vm366, %v569, 0
    %578 = vmatprep.subr.mxu0 0.0
    %579 = vmatpush1.xpose.msra.mxu0 %v574
    %580 = vmatprep.subr.mxu0 0.0
    %581 = vmatpush1.xpose.msra.mxu0 %v576
    %582 = vmatprep.subr.mxu0 0.0
    %583 = vmatpush1.xpose.msra.mxu0 0.0
    %584 = vmatprep.subr.mxu0 0.0
    %585 = vmatpush1.xpose.msra.mxu0 0.0
    %586 = vmatprep.subr.mxu0 0.0
    %587 = vmatpush1.xpose.msra.mxu0 0.0
    %588 = vmatprep.subr.mxu0 0.0
    %589 = vmatpush1.xpose.msra.mxu0 0.0
    %590 = vmatprep.subr.mxu0 0.0
    %591 = vmatpush1.xpose.msra.mxu0 0.0
    %592 = vmatprep.subr.mxu0 0.0
    %593 = vmatpush1.xpose.msra.mxu0 0.0
    %594 = vmatprep.subr.mxu0 0.0
    %595 = vmatpush1.xpose.msra.mxu0 0.0
    %596 = vmatprep.subr.mxu0 0.0
    %597 = vmatpush1.xpose.msra.mxu0 0.0
    %598 = vmatprep.subr.mxu0 0.0
    %599 = vmatpush1.xpose.msra.mxu0 0.0
    %600 = vmatprep.subr.mxu0 0.0
    %601 = vmatpush1.xpose.msra.mxu0 0.0
    %602 = vmatprep.subr.mxu0 0.0
    %603 = vmatpush1.xpose.msra.mxu0 0.0
    %604 = vmatprep.subr.mxu0 0.0
    %605 = vmatpush1.xpose.msra.mxu0 0.0
    %606 = vmatprep.subr.mxu0 0.0
    %607 = vmatpush1.xpose.msra.mxu0 0.0
    %608 = vmatprep.subr.mxu0 0.0
    %609 = vmatpush1.xpose.msra.mxu0 0.0
    %610 = vmatprep.subr.mxu0 0.0
    %611 = vmatpush1.xpose.msra.mxu0 0.0
    %612 = vmatprep.subr.mxu0 0.0
    %613 = vmatpush1.xpose.msra.mxu0 0.0
    %614 = vmatprep.subr.mxu0 0.0
    %615 = vmatpush1.xpose.msra.mxu0 0.0
    %616 = vmatprep.subr.mxu0 0.0
    %617 = vmatpush1.xpose.msra.mxu0 0.0
    %618 = vmatprep.subr.mxu0 0.0
    %619 = vmatpush1.xpose.msra.mxu0 0.0
    %620 = vmatprep.subr.mxu0 0.0
    %621 = vmatpush1.xpose.msra.mxu0 0.0
    %622 = vmatprep.subr.mxu0 0.0
    %623 = vmatpush1.xpose.msra.mxu0 0.0
    %624 = vmatprep.subr.mxu0 0.0
    %625 = vmatpush1.xpose.msra.mxu0 0.0
    %626 = vmatprep.subr.mxu0 0.0
    %627 = vmatpush1.xpose.msra.mxu0 0.0
    %628 = vmatprep.subr.mxu0 0.0
    %629 = vmatpush1.xpose.msra.mxu0 0.0
    %630 = vmatprep.subr.mxu0 0.0
    %631 = vmatpush1.xpose.msra.mxu0 0.0
    %632 = vmatprep.subr.mxu0 0.0
    %633 = vmatpush1.xpose.msra.mxu0 0.0
    %634 = vmatprep.subr.mxu0 0.0
    %635 = vmatpush1.xpose.msra.mxu0 0.0
    %636 = vmatprep.subr.mxu0 0.0
    %637 = vmatpush1.xpose.msra.mxu0 0.0
    %638 = vmatprep.subr.mxu0 0.0
    %639 = vmatpush1.xpose.msra.mxu0 0.0
    %640 = vmatprep.subr.mxu0 0.0
    %641 = vmatpush1.xpose.msra.mxu0 0.0
    %642 = vmatprep.mubr.f32.mxu0 0.0
    %643 = vmatmul.mubr.f32.gmra.mrb[0].mxu0 %v570
    %v644 = vpop.f32.mrb[0].mxu0
    %v645 = vadd.f32 0.0, %v644
    %v646 = vpop.f32.mrb[0].mxu0
    %647 = vmatprep.mubr.f32.mxu0 0.0
    %648 = vmatmul.mubr.f32.gmra.mrb[0].mxu0 %v572
    %v649 = vpop.f32.mrb[0].mxu0
    %v650 = vadd.f32 0.0, %v649
    %v651 = vpop.f32.mrb[0].mxu0
    %652 = vdwg.mxu0
    %v653 = vmul.f32 %v645, 0.125
    %v654 = vmul.f32 %v650, 0.125
    %v655 = vadd.f32 %v653, %v147
    %v656 = vadd.f32 %v654, %v148
    %v657 = vsel %vm458, %v655, -inf
    %658 = vmax.xlane.f32.xlu0 %v657
    %v659 = vpop.xlane.xlu0 %658
    %v660 = vsel %vm458, %v656, -inf
    %661 = vmax.xlane.f32.xlu0 %v660
    %v662 = vpop.xlane.xlu0 %661
    %v663 = vsub.f32 %v655, %v659
    %v664 = vsub.f32 %v656, %v662
    %v665 = vmul.f32 %v663, 1.442695
    %v666 = vpow.pop %v665
    %v667 = vmul.f32 %v664, 1.442695
    %v668 = vpow.pop %v667
    %v669 = vsel %vm458, %v666, 0.0
    %670 = vadd.xlane.f32.xlu0 %v669
    %v671 = vpop.xlane.xlu0 %670
    %v672 = vsel %vm458, %v668, 0.0
    %673 = vadd.xlane.f32.xlu0 %v672
    %v674 = vpop.xlane.xlu0 %673
    %v675 = vrcp.pop %v671
    %v676 = vmul.f32 %v666, %v675
    %v677 = vrcp.pop %v674
    %v678 = vmul.f32 %v668, %v677
    %681 = vrot.lane.b32.xlu0 %v358, 64
    %v682 = vpop.permute.xlu0 %681
    %683 = vrot.lane.b32.xlu0 %v363, 64
    %v684 = vpop.permute.xlu0 %683
    %v688 = vsel %vm458, %v676, 0
    %v691 = vsel %vm458, %v678, 0
    %693 = vmatprep.subr.mxu0 0.0
    %694 = vmatpush1.msra.mxu0 %v682
    %695 = vmatprep.subr.mxu0 0.0
    %696 = vmatpush1.msra.mxu0 %v684
    %697 = vmatprep.subr.mxu0 0.0
    %698 = vmatpush1.msra.mxu0 0.0
    %699 = vmatprep.subr.mxu0 0.0
    %700 = vmatpush1.msra.mxu0 0.0
    %701 = vmatprep.subr.mxu0 0.0
    %702 = vmatpush1.msra.mxu0 0.0
    %703 = vmatprep.subr.mxu0 0.0
    %704 = vmatpush1.msra.mxu0 0.0
    %705 = vmatprep.subr.mxu0 0.0
    %706 = vmatpush1.msra.mxu0 0.0
    %707 = vmatprep.subr.mxu0 0.0
    %708 = vmatpush1.msra.mxu0 0.0
    %709 = vmatprep.subr.mxu0 0.0
    %710 = vmatpush1.msra.mxu0 0.0
    %711 = vmatprep.subr.mxu0 0.0
    %712 = vmatpush1.msra.mxu0 0.0
    %713 = vmatprep.subr.mxu0 0.0
    %714 = vmatpush1.msra.mxu0 0.0
    %715 = vmatprep.subr.mxu0 0.0
    %716 = vmatpush1.msra.mxu0 0.0
    %717 = vmatprep.subr.mxu0 0.0
    %718 = vmatpush1.msra.mxu0 0.0
    %719 = vmatprep.subr.mxu0 0.0
    %720 = vmatpush1.msra.mxu0 0.0
    %721 = vmatprep.subr.mxu0 0.0
    %722 = vmatpush1.msra.mxu0 0.0
    %723 = vmatprep.subr.mxu0 0.0
    %724 = vmatpush1.msra.mxu0 0.0
    %725 = vmatprep.subr.mxu0 0.0
    %726 = vmatpush1.msra.mxu0 0.0
    %727 = vmatprep.subr.mxu0 0.0
    %728 = vmatpush1.msra.mxu0 0.0
    %729 = vmatprep.subr.mxu0 0.0
    %730 = vmatpush1.msra.mxu0 0.0
    %731 = vmatprep.subr.mxu0 0.0
    %732 = vmatpush1.msra.mxu0 0.0
    %733 = vmatprep.subr.mxu0 0.0
    %734 = vmatpush1.msra.mxu0 0.0
    %735 = vmatprep.subr.mxu0 0.0
    %736 = vmatpush1.msra.mxu0 0.0
    %737 = vmatprep.subr.mxu0 0.0
    %738 = vmatpush1.msra.mxu0 0.0
    %739 = vmatprep.subr.mxu0 0.0
    %740 = vmatpush1.msra.mxu0 0.0
    %741 = vmatprep.subr.mxu0 0.0
    %742 = vmatpush1.msra.mxu0 0.0
    %743 = vmatprep.subr.mxu0 0.0
    %744 = vmatpush1.msra.mxu0 0.0
    %745 = vmatprep.subr.mxu0 0.0
    %746 = vmatpush1.msra.mxu0 0.0
    %747 = vmatprep.subr.mxu0 0.0
    %748 = vmatpush1.msra.mxu0 0.0
    %749 = vmatprep.subr.mxu0 0.0
    %750 = vmatpush1.msra.mxu0 0.0
    %751 = vmatprep.subr.mxu0 0.0
    %752 = vmatpush1.msra.mxu0 0.0
    %753 = vmatprep.subr.mxu0 0.0
    %754 = vmatpush1.msra.mxu0 0.0
    %755 = vmatprep.subr.mxu0 0.0
    %756 = vmatpush1.msra.mxu0 0.0
    %757 = vmatprep.mubr.f32.mxu0 0.0
    %758 = vmatmul.mubr.f32.gmra.mrb[0].mxu0 %v688
    %v759 = vpop.f32.mrb[0].mxu0
    %v760 = vadd.f32 0.0, %v759
    %v761 = vpop.f32.mrb[0].mxu0
    %762 = vmatprep.mubr.f32.mxu0 0.0
    %763 = vmatmul.mubr.f32.gmra.mrb[0].mxu0 %v691
    %v764 = vpop.f32.mrb[0].mxu0
    %v765 = vadd.f32 0.0, %v764
    %v766 = vpop.f32.mrb[0].mxu0
    %767 = vdwg.mxu0
    %770 = vrot.lane.b32.xlu0 %v760, 64
    %v771 = vpop.permute.xlu0 %770
    %772 = vrot.lane.b32.xlu0 %v765, 64
    %v773 = vpop.permute.xlu0 %772
    %v776 = vsel %vm366, %v554, %v771
    %v777 = vsel %vm366, %v559, %v773
    %v778 = vld [vmem:[%s5] sm:$0xff]
    %v779 = vld [vmem:[%s5 + $0x8] sm:$0xff]
    %v780 = vld [vmem:[%s5 + $0x10] sm:$0xff]
    %v781 = vld [vmem:[%s5 + $0x18] sm:$0xff]
    %v782 = vld [vmem:[%s5 + $0x20] sm:$0xff]
    %v783 = vld [vmem:[%s5 + $0x28] sm:$0xff]
    %v784 = vld [vmem:[%s5 + $0x30] sm:$0xff]
    %v785 = vld [vmem:[%s5 + $0x38] sm:$0xff]
    %v786 = vld [vmem:[%s5 + $0x40] sm:$0xff]
    %v787 = vld [vmem:[%s5 + $0x48] sm:$0xff]
    %v788 = vld [vmem:[%s5 + $0x50] sm:$0xff]
    %v789 = vld [vmem:[%s5 + $0x58] sm:$0xff]
    %v790 = vld [vmem:[%s5 + $0x60] sm:$0xff]
    %v791 = vld [vmem:[%s5 + $0x68] sm:$0xff]
    %v792 = vld [vmem:[%s5 + $0x70] sm:$0xff]
    %v793 = vld [vmem:[%s5 + $0x78] sm:$0xff]
    %v794 = vld [vmem:[%s6] sm:$0x1]
    %v796 = vlaneseq
    %v797 = vshrl.u32 %v796, 7
    %v798 = vsub.s32 0, %v797
    %v799 = vrot.slane %v794, %v798
    %801 = vmatprep.subr.mxu0 0.0
    %802 = vmatpush1.msra.mxu0 %v778
    %803 = vmatprep.subr.mxu0 0.0
    %804 = vmatpush1.msra.mxu0 %v779
    %805 = vmatprep.subr.mxu0 0.0
    %806 = vmatpush1.msra.mxu0 %v780
    %807 = vmatprep.subr.mxu0 0.0
    %808 = vmatpush1.msra.mxu0 %v781
    %809 = vmatprep.subr.mxu0 0.0
    %810 = vmatpush1.msra.mxu0 %v782
    %811 = vmatprep.subr.mxu0 0.0
    %812 = vmatpush1.msra.mxu0 %v783
    %813 = vmatprep.subr.mxu0 0.0
    %814 = vmatpush1.msra.mxu0 %v784
    %815 = vmatprep.subr.mxu0 0.0
    %816 = vmatpush1.msra.mxu0 %v785
    %817 = vmatprep.subr.mxu0 0.0
    %818 = vmatpush1.msra.mxu0 %v786
    %819 = vmatprep.subr.mxu0 0.0
    %820 = vmatpush1.msra.mxu0 %v787
    %821 = vmatprep.subr.mxu0 0.0
    %822 = vmatpush1.msra.mxu0 %v788
    %823 = vmatprep.subr.mxu0 0.0
    %824 = vmatpush1.msra.mxu0 %v789
    %825 = vmatprep.subr.mxu0 0.0
    %826 = vmatpush1.msra.mxu0 %v790
    %827 = vmatprep.subr.mxu0 0.0
    %828 = vmatpush1.msra.mxu0 %v791
    %829 = vmatprep.subr.mxu0 0.0
    %830 = vmatpush1.msra.mxu0 %v792
    %831 = vmatprep.subr.mxu0 0.0
    %832 = vmatpush1.msra.mxu0 %v793
    %833 = vmatprep.subr.mxu0 0.0
    %834 = vmatpush1.msra.mxu0 0.0
    %835 = vmatprep.subr.mxu0 0.0
    %836 = vmatpush1.msra.mxu0 0.0
    %837 = vmatprep.subr.mxu0 0.0
    %838 = vmatpush1.msra.mxu0 0.0
    %839 = vmatprep.subr.mxu0 0.0
    %840 = vmatpush1.msra.mxu0 0.0
    %841 = vmatprep.subr.mxu0 0.0
    %842 = vmatpush1.msra.mxu0 0.0
    %843 = vmatprep.subr.mxu0 0.0
    %844 = vmatpush1.msra.mxu0 0.0
    %845 = vmatprep.subr.mxu0 0.0
    %846 = vmatpush1.msra.mxu0 0.0
    %847 = vmatprep.subr.mxu0 0.0
    %848 = vmatpush1.msra.mxu0 0.0
    %849 = vmatprep.subr.mxu0 0.0
    %850 = vmatpush1.msra.mxu0 0.0
    %851 = vmatprep.subr.mxu0 0.0
    %852 = vmatpush1.msra.mxu0 0.0
    %853 = vmatprep.subr.mxu0 0.0
    %854 = vmatpush1.msra.mxu0 0.0
    %855 = vmatprep.subr.mxu0 0.0
    %856 = vmatpush1.msra.mxu0 0.0
    %857 = vmatprep.subr.mxu0 0.0
    %858 = vmatpush1.msra.mxu0 0.0
    %859 = vmatprep.subr.mxu0 0.0
    %860 = vmatpush1.msra.mxu0 0.0
    %861 = vmatprep.subr.mxu0 0.0
    %862 = vmatpush1.msra.mxu0 0.0
    %863 = vmatprep.subr.mxu0 0.0
    %864 = vmatpush1.msra.mxu0 0.0
    %865 = vmatprep.mubr.f32.mxu0 0.0
    %866 = vmatmul.mubr.f32.gmra.mrb[0].mxu0 %v776
    %v867 = vpop.f32.mrb[0].mxu0
    %v868 = vadd.f32 %v799, %v867
    %v869 = vpop.f32.mrb[0].mxu0
    %870 = vmatprep.mubr.f32.mxu0 0.0
    %871 = vmatmul.mubr.f32.gmra.mrb[0].mxu0 %v777
    %v872 = vpop.f32.mrb[0].mxu0
    %v873 = vadd.f32 %v799, %v872
    %v874 = vpop.f32.mrb[0].mxu0
    %875 = vdwg.mxu0
    %v876 = vadd.f32 %v145, %v868
    %v877 = vadd.f32 %v146, %v873
    %v878 = vld [vmem:[%s7] sm:$0x1]
    %v879 = vld [vmem:[%s8] sm:$0x1]
    %880 = vadd.xlane.f32.xlu0 %v876
    %v881 = vpop.xlane.xlu0 %880
    %882 = vadd.xlane.f32.xlu0 %v877
    %v883 = vpop.xlane.xlu0 %882
    %v884 = vrcp.pop 128.0
    %v885 = vmul.f32 %v881, %v884
    %v886 = vmul.f32 %v883, %v884
    %v887 = vsub.f32 %v876, %v885
    %v888 = vsub.f32 %v877, %v886
    %v889 = vmul.f32 %v887, %v887
    %v890 = vmul.f32 %v888, %v888
    %891 = vadd.xlane.f32.xlu0 %v889
    %v892 = vpop.xlane.xlu0 %891
    %893 = vadd.xlane.f32.xlu0 %v890
    %v894 = vpop.xlane.xlu0 %893
    %v895 = vmul.f32 %v892, %v884
    %v896 = vmul.f32 %v894, %v884
    %v897 = vadd.f32 %v895, 1e-05
    %v898 = vadd.f32 %v896, 1e-05
    %v899 = vrsqrt.pop %v897
    %v900 = vmul.f32 %v897, %v899
    %vm901 = vcmp.eq.f32.partialorder %v897, inf
    %v902 = vsel %vm901, %v897, %v900
    %vm903 = vcmp.eq.f32.partialorder %v897, 0.0
    %v904 = vand.u32 %v897, 2147483648
    %v905 = vsel %vm903, %v904, %v902
    %v906 = vrsqrt.pop %v898
    %v907 = vmul.f32 %v898, %v906
    %vm908 = vcmp.eq.f32.partialorder %v898, inf
    %v909 = vsel %vm908, %v898, %v907
    %vm910 = vcmp.eq.f32.partialorder %v898, 0.0
    %v911 = vand.u32 %v898, 2147483648
    %v912 = vsel %vm910, %v911, %v909
    %v913 = vrcp.pop %v905
    %v914 = vmul.f32 %v887, %v913
    %v915 = vrcp.pop %v912
    %v916 = vmul.f32 %v888, %v915
    %v918 = vlaneseq
    %v919 = vshrl.u32 %v918, 7
    %v920 = vsub.s32 0, %v919
    %v921 = vrot.slane %v878, %v920
    %v923 = vmul.f32 %v914, %v921
    %v924 = vmul.f32 %v916, %v921
    %v926 = vlaneseq
    %v927 = vshrl.u32 %v926, 7
    %v928 = vsub.s32 0, %v927
    %v929 = vrot.slane %v879, %v928
    %v931 = vadd.f32 %v923, %v929
    %v932 = vadd.f32 %v924, %v929
    %v933 = vld [vmem:[#allocation9] sm:$0xff]
    %v934 = vld [vmem:[#allocation9 + $0x8] sm:$0xff]
    %v935 = vld [vmem:[#allocation9 + $0x10] sm:$0xff]
    %v936 = vld [vmem:[#allocation9 + $0x18] sm:$0xff]
    %v937 = vld [vmem:[#allocation9 + $0x20] sm:$0xff]
    %v938 = vld [vmem:[#allocation9 + $0x28] sm:$0xff]
    %v939 = vld [vmem:[#allocation9 + $0x30] sm:$0xff]
    %v940 = vld [vmem:[#allocation9 + $0x38] sm:$0xff]
    %v941 = vld [vmem:[#allocation9 + $0x40] sm:$0xff]
    %v942 = vld [vmem:[#allocation9 + $0x48] sm:$0xff]
    %v943 = vld [vmem:[#allocation9 + $0x50] sm:$0xff]
    %v944 = vld [vmem:[#allocation9 + $0x58] sm:$0xff]
    %v945 = vld [vmem:[#allocation9 + $0x60] sm:$0xff]
    %v946 = vld [vmem:[#allocation9 + $0x68] sm:$0xff]
    %v947 = vld [vmem:[#allocation9 + $0x70] sm:$0xff]
    %v948 = vld [vmem:[#allocation9 + $0x78] sm:$0xff]
    %v949 = vld [vmem:[#allocation9 + $0x80] sm:$0xff]
    %v950 = vld [vmem:[#allocation9 + $0x88] sm:$0xff]
    %v951 = vld [vmem:[#allocation9 + $0x90] sm:$0xff]
    %v952 = vld [vmem:[#allocation9 + $0x98] sm:$0xff]
    %v953 = vld [vmem:[#allocation9 + $0xa0] sm:$0xff]
    %v954 = vld [vmem:[#allocation9 + $0xa8] sm:$0xff]
    %v955 = vld [vmem:[#allocation9 + $0xb0] sm:$0xff]
    %v956 = vld [vmem:[#allocation9 + $0xb8] sm:$0xff]
    %v957 = vld [vmem:[#allocation9 + $0xc0] sm:$0xff]
    %v958 = vld [vmem:[#allocation9 + $0xc8] sm:$0xff]
    %v959 = vld [vmem:[#allocation9 + $0xd0] sm:$0xff]
    %v960 = vld [vmem:[#allocation9 + $0xd8] sm:$0xff]
    %v961 = vld [vmem:[#allocation9 + $0xe0] sm:$0xff]
    %v962 = vld [vmem:[#allocation9 + $0xe8] sm:$0xff]
    %v963 = vld [vmem:[#allocation9 + $0xf0] sm:$0xff]
    %v964 = vld [vmem:[#allocation9 + $0xf8] sm:$0xff]
    %v965 = vld [vmem:[#allocation9 + $0x100] sm:$0xff]
    %v966 = vld [vmem:[#allocation9 + $0x108] sm:$0xff]
    %v967 = vld [vmem:[#allocation9 + $0x110] sm:$0xff]
    %v968 = vld [vmem:[#allocation9 + $0x118] sm:$0xff]
    %v969 = vld [vmem:[#allocation9 + $0x120] sm:$0xff]
    %v970 = vld [vmem:[#allocation9 + $0x128] sm:$0xff]
    %v971 = vld [vmem:[#allocation9 + $0x130] sm:$0xff]
    %v972 = vld [vmem:[#allocation9 + $0x138] sm:$0xff]
    %v973 = vld [vmem:[#allocation9 + $0x140] sm:$0xff]
    %v974 = vld [vmem:[#allocation9 + $0x148] sm:$0xff]
    %v975 = vld [vmem:[#allocation9 + $0x150] sm:$0xff]
    %v976 = vld [vmem:[#allocation9 + $0x158] sm:$0xff]
    %v977 = vld [vmem:[#allocation9 + $0x160] sm:$0xff]
    %v978 = vld [vmem:[#allocation9 + $0x168] sm:$0xff]
    %v979 = vld [vmem:[#allocation9 + $0x170] sm:$0xff]
    %v980 = vld [vmem:[#allocation9 + $0x178] sm:$0xff]
    %v981 = vld [vmem:[#allocation9 + $0x180] sm:$0xff]
    %v982 = vld [vmem:[#allocation9 + $0x188] sm:$0xff]
    %v983 = vld [vmem:[#allocation9 + $0x190] sm:$0xff]
    %v984 = vld [vmem:[#allocation9 + $0x198] sm:$0xff]
    %v985 = vld [vmem:[#allocation9 + $0x1a0] sm:$0xff]
    %v986 = vld [vmem:[#allocation9 + $0x1a8] sm:$0xff]
    %v987 = vld [vmem:[#allocation9 + $0x1b0] sm:$0xff]
    %v988 = vld [vmem:[#allocation9 + $0x1b8] sm:$0xff]
    %v989 = vld [vmem:[#allocation9 + $0x1c0] sm:$0xff]
    %v990 = vld [vmem:[#allocation9 + $0x1c8] sm:$0xff]
    %v991 = vld [vmem:[#allocation9 + $0x1d0] sm:$0xff]
    %v992 = vld [vmem:[#allocation9 + $0x1d8] sm:$0xff]
    %v993 = vld [vmem:[#allocation9 + $0x1e0] sm:$0xff]
    %v994 = vld [vmem:[#allocation9 + $0x1e8] sm:$0xff]
    %v995 = vld [vmem:[#allocation9 + $0x1f0] sm:$0xff]
    %v996 = vld [vmem:[#allocation9 + $0x1f8] sm:$0xff]
    %v997 = vld [vmem:[%s10] sm:$0xf]
    %v999 = vlaneseq
    %v1000 = vshrl.u32 %v999, 7
    %v1001 = vsub.s32 0, %v1000
    %v1002 = vrot.slane %v997, %v1001
    %v1003 = vlaneseq
    %v1004 = vshrl.u32 %v1003, 7
    %v1005 = vsub.s32 1, %v1004
    %v1006 = vrot.slane %v997, %v1005
    %v1007 = vlaneseq
    %v1008 = vshrl.u32 %v1007, 7
    %v1009 = vsub.s32 2, %v1008
    %v1010 = vrot.slane %v997, %v1009
    %v1011 = vlaneseq
    %v1012 = vshrl.u32 %v1011, 7
    %v1013 = vsub.s32 3, %v1012
    %v1014 = vrot.slane %v997, %v1013
    %1019 = vmatprep.subr.mxu0 %v934
    %1020 = vmatpush1.msra.mxu0 %v933
    %1021 = vmatprep.subr.mxu0 %v938
    %1022 = vmatpush1.msra.mxu0 %v937
    %1023 = vmatprep.subr.mxu0 %v942
    %1024 = vmatpush1.msra.mxu0 %v941
    %1025 = vmatprep.subr.mxu0 %v946
    %1026 = vmatpush1.msra.mxu0 %v945
    %1027 = vmatprep.subr.mxu0 %v950
    %1028 = vmatpush1.msra.mxu0 %v949
    %1029 = vmatprep.subr.mxu0 %v954
    %1030 = vmatpush1.msra.mxu0 %v953
    %1031 = vmatprep.subr.mxu0 %v958
    %1032 = vmatpush1.msra.mxu0 %v957
    %1033 = vmatprep.subr.mxu0 %v962
    %1034 = vmatpush1.msra.mxu0 %v961
    %1035 = vmatprep.subr.mxu0 %v966
    %1036 = vmatpush1.msra.mxu0 %v965
    %1037 = vmatprep.subr.mxu0 %v970
    %1038 = vmatpush1.msra.mxu0 %v969
    %1039 = vmatprep.subr.mxu0 %v974
    %1040 = vmatpush1.msra.mxu0 %v973
    %1041 = vmatprep.subr.mxu0 %v978
    %1042 = vmatpush1.msra.mxu0 %v977
    %1043 = vmatprep.subr.mxu0 %v982
    %1044 = vmatpush1.msra.mxu0 %v981
    %1045 = vmatprep.subr.mxu0 %v986
    %1046 = vmatpush1.msra.mxu0 %v985
    %1047 = vmatprep.subr.mxu0 %v990
    %1048 = vmatpush1.msra.mxu0 %v989
    %1049 = vmatprep.subr.mxu0 %v994
    %1050 = vmatpush1.msra.mxu0 %v993
    %1051 = vmatprep.subr.mxu0 0.0
    %1052 = vmatpush1.msra.mxu0 0.0
    %1053 = vmatprep.subr.mxu0 0.0
    %1054 = vmatpush1.msra.mxu0 0.0
    %1055 = vmatprep.subr.mxu0 0.0
    %1056 = vmatpush1.msra.mxu0 0.0
    %1057 = vmatprep.subr.mxu0 0.0
    %1058 = vmatpush1.msra.mxu0 0.0
    %1059 = vmatprep.subr.mxu0 0.0
    %1060 = vmatpush1.msra.mxu0 0.0
    %1061 = vmatprep.subr.mxu0 0.0
    %1062 = vmatpush1.msra.mxu0 0.0
    %1063 = vmatprep.subr.mxu0 0.0
    %1064 = vmatpush1.msra.mxu0 0.0
    %1065 = vmatprep.subr.mxu0 0.0
    %1066 = vmatpush1.msra.mxu0 0.0
    %1067 = vmatprep.subr.mxu0 0.0
    %1068 = vmatpush1.msra.mxu0 0.0
    %1069 = vmatprep.subr.mxu0 0.0
    %1070 = vmatpush1.msra.mxu0 0.0
    %1071 = vmatprep.subr.mxu0 0.0
    %1072 = vmatpush1.msra.mxu0 0.0
    %1073 = vmatprep.subr.mxu0 0.0
    %1074 = vmatpush1.msra.mxu0 0.0
    %1075 = vmatprep.subr.mxu0 0.0
    %1076 = vmatpush1.msra.mxu0 0.0
    %1077 = vmatprep.subr.mxu0 0.0
    %1078 = vmatpush1.msra.mxu0 0.0
    %1079 = vmatprep.subr.mxu0 0.0
    %1080 = vmatpush1.msra.mxu0 0.0
    %1081 = vmatprep.subr.mxu0 0.0
    %1082 = vmatpush1.msra.mxu0 0.0
    %1083 = vmatprep.mubr.f32.mxu0 0.0
    %1084 = vmatmul.mubr.f32.gmra.mrb[0].mxu0 %v931
    %v1085 = vpop.f32.mrb[0].mxu0
    %v1086 = vadd.f32 %v1002, %v1085
    %v1087 = vpop.f32.mrb[0].mxu0
    %v1088 = vadd.f32 %v1006, %v1087
    %1089 = vmatprep.mubr.f32.mxu0 0.0
    %1090 = vmatmul.mubr.f32.gmra.mrb[0].mxu0 %v932
    %v1091 = vpop.f32.mrb[0].mxu0
    %v1092 = vadd.f32 %v1002, %v1091
    %v1093 = vpop.f32.mrb[0].mxu0
    %v1094 = vadd.f32 %v1006, %v1093
    %1095 = vdwg.mxu0
    %1096 = vmatprep.subr.mxu0 %v936
    %1097 = vmatpush1.msra.mxu0 %v935
    %1098 = vmatprep.subr.mxu0 %v940
    %1099 = vmatpush1.msra.mxu0 %v939
    %1100 = vmatprep.subr.mxu0 %v944
    %1101 = vmatpush1.msra.mxu0 %v943
    %1102 = vmatprep.subr.mxu0 %v948
    %1103 = vmatpush1.msra.mxu0 %v947
    %1104 = vmatprep.subr.mxu0 %v952
    %1105 = vmatpush1.msra.mxu0 %v951
    %1106 = vmatprep.subr.mxu0 %v956
    %1107 = vmatpush1.msra.mxu0 %v955
    %1108 = vmatprep.subr.mxu0 %v960
    %1109 = vmatpush1.msra.mxu0 %v959
    %1110 = vmatprep.subr.mxu0 %v964
    %1111 = vmatpush1.msra.mxu0 %v963
    %1112 = vmatprep.subr.mxu0 %v968
    %1113 = vmatpush1.msra.mxu0 %v967
    %1114 = vmatprep.subr.mxu0 %v972
    %1115 = vmatpush1.msra.mxu0 %v971
    %1116 = vmatprep.subr.mxu0 %v976
    %1117 = vmatpush1.msra.mxu0 %v975
    %1118 = vmatprep.subr.mxu0 %v980
    %1119 = vmatpush1.msra.mxu0 %v979
    %1120 = vmatprep.subr.mxu0 %v984
    %1121 = vmatpush1.msra.mxu0 %v983
    %1122 = vmatprep.subr.mxu0 %v988
    %1123 = vmatpush1.msra.mxu0 %v987
    %1124 = vmatprep.subr.mxu0 %v992
    %1125 = vmatpush1.msra.mxu0 %v991
    %1126 = vmatprep.subr.mxu0 %v996
    %1127 = vmatpush1.msra.mxu0 %v995
    %1128 = vmatprep.subr.mxu0 0.0
    %1129 = vmatpush1.msra.mxu0 0.0
    %1130 = vmatprep.subr.mxu0 0.0
    %1131 = vmatpush1.msra.mxu0 0.0
    %1132 = vmatprep.subr.mxu0 0.0
    %1133 = vmatpush1.msra.mxu0 0.0
    %1134 = vmatprep.subr.mxu0 0.0
    %1135 = vmatpush1.msra.mxu0 0.0
    %1136 = vmatprep.subr.mxu0 0.0
    %1137 = vmatpush1.msra.mxu0 0.0
    %1138 = vmatprep.subr.mxu0 0.0
    %1139 = vmatpush1.msra.mxu0 0.0
    %1140 = vmatprep.subr.mxu0 0.0
    %1141 = vmatpush1.msra.mxu0 0.0
    %1142 = vmatprep.subr.mxu0 0.0
    %1143 = vmatpush1.msra.mxu0 0.0
    %1144 = vmatprep.subr.mxu0 0.0
    %1145 = vmatpush1.msra.mxu0 0.0
    %1146 = vmatprep.subr.mxu0 0.0
    %1147 = vmatpush1.msra.mxu0 0.0
    %1148 = vmatprep.subr.mxu0 0.0
    %1149 = vmatpush1.msra.mxu0 0.0
    %1150 = vmatprep.subr.mxu0 0.0
    %1151 = vmatpush1.msra.mxu0 0.0
    %1152 = vmatprep.subr.mxu0 0.0
    %1153 = vmatpush1.msra.mxu0 0.0
    %1154 = vmatprep.subr.mxu0 0.0
    %1155 = vmatpush1.msra.mxu0 0.0
    %1156 = vmatprep.subr.mxu0 0.0
    %1157 = vmatpush1.msra.mxu0 0.0
    %1158 = vmatprep.subr.mxu0 0.0
    %1159 = vmatpush1.msra.mxu0 0.0
    %1160 = vmatprep.mubr.f32.mxu0 0.0
    %1161 = vmatmul.mubr.f32.gmra.mrb[0].mxu0 %v931
    %v1162 = vpop.f32.mrb[0].mxu0
    %v1163 = vadd.f32 %v1010, %v1162
    %v1164 = vpop.f32.mrb[0].mxu0
    %v1165 = vadd.f32 %v1014, %v1164
    %1166 = vmatprep.mubr.f32.mxu0 0.0
    %1167 = vmatmul.mubr.f32.gmra.mrb[0].mxu0 %v932
    %v1168 = vpop.f32.mrb[0].mxu0
    %v1169 = vadd.f32 %v1010, %v1168
    %v1170 = vpop.f32.mrb[0].mxu0
    %v1171 = vadd.f32 %v1014, %v1170
    %1172 = vdwg.mxu0
    %v1173 = vmax.f32 %v1086, 0.0
    %v1174 = vmax.f32 %v1088, 0.0
    %v1175 = vmax.f32 %v1163, 0.0
    %v1176 = vmax.f32 %v1165, 0.0
    %v1177 = vmax.f32 %v1092, 0.0
    %v1178 = vmax.f32 %v1094, 0.0
    %v1179 = vmax.f32 %v1169, 0.0
    %v1180 = vmax.f32 %v1171, 0.0
    %v1181 = vld [vmem:[#allocation11] sm:$0xff]
    %v1182 = vld [vmem:[#allocation11 + $0x8] sm:$0xff]
    %v1183 = vld [vmem:[#allocation11 + $0x10] sm:$0xff]
    %v1184 = vld [vmem:[#allocation11 + $0x18] sm:$0xff]
    %v1185 = vld [vmem:[#allocation11 + $0x20] sm:$0xff]
    %v1186 = vld [vmem:[#allocation11 + $0x28] sm:$0xff]
    %v1187 = vld [vmem:[#allocation11 + $0x30] sm:$0xff]
    %v1188 = vld [vmem:[#allocation11 + $0x38] sm:$0xff]
    %v1189 = vld [vmem:[#allocation11 + $0x40] sm:$0xff]
    %v1190 = vld [vmem:[#allocation11 + $0x48] sm:$0xff]
    %v1191 = vld [vmem:[#allocation11 + $0x50] sm:$0xff]
    %v1192 = vld [vmem:[#allocation11 + $0x58] sm:$0xff]
    %v1193 = vld [vmem:[#allocation11 + $0x60] sm:$0xff]
    %v1194 = vld [vmem:[#allocation11 + $0x68] sm:$0xff]
    %v1195 = vld [vmem:[#allocation11 + $0x70] sm:$0xff]
    %v1196 = vld [vmem:[#allocation11 + $0x78] sm:$0xff]
    %v1197 = vld [vmem:[#allocation11 + $0x80] sm:$0xff]
    %v1198 = vld [vmem:[#allocation11 + $0x88] sm:$0xff]
    %v1199 = vld [vmem:[#allocation11 + $0x90] sm:$0xff]
    %v1200 = vld [vmem:[#allocation11 + $0x98] sm:$0xff]
    %v1201 = vld [vmem:[#allocation11 + $0xa0] sm:$0xff]
    %v1202 = vld [vmem:[#allocation11 + $0xa8] sm:$0xff]
    %v1203 = vld [vmem:[#allocation11 + $0xb0] sm:$0xff]
    %v1204 = vld [vmem:[#allocation11 + $0xb8] sm:$0xff]
    %v1205 = vld [vmem:[#allocation11 + $0xc0] sm:$0xff]
    %v1206 = vld [vmem:[#allocation11 + $0xc8] sm:$0xff]
    %v1207 = vld [vmem:[#allocation11 + $0xd0] sm:$0xff]
    %v1208 = vld [vmem:[#allocation11 + $0xd8] sm:$0xff]
    %v1209 = vld [vmem:[#allocation11 + $0xe0] sm:$0xff]
    %v1210 = vld [vmem:[#allocation11 + $0xe8] sm:$0xff]
    %v1211 = vld [vmem:[#allocation11 + $0xf0] sm:$0xff]
    %v1212 = vld [vmem:[#allocation11 + $0xf8] sm:$0xff]
    %v1213 = vld [vmem:[#allocation11 + $0x100] sm:$0xff]
    %v1214 = vld [vmem:[#allocation11 + $0x108] sm:$0xff]
    %v1215 = vld [vmem:[#allocation11 + $0x110] sm:$0xff]
    %v1216 = vld [vmem:[#allocation11 + $0x118] sm:$0xff]
    %v1217 = vld [vmem:[#allocation11 + $0x120] sm:$0xff]
    %v1218 = vld [vmem:[#allocation11 + $0x128] sm:$0xff]
    %v1219 = vld [vmem:[#allocation11 + $0x130] sm:$0xff]
    %v1220 = vld [vmem:[#allocation11 + $0x138] sm:$0xff]
    %v1221 = vld [vmem:[#allocation11 + $0x140] sm:$0xff]
    %v1222 = vld [vmem:[#allocation11 + $0x148] sm:$0xff]
    %v1223 = vld [vmem:[#allocation11 + $0x150] sm:$0xff]
    %v1224 = vld [vmem:[#allocation11 + $0x158] sm:$0xff]
    %v1225 = vld [vmem:[#allocation11 + $0x160] sm:$0xff]
    %v1226 = vld [vmem:[#allocation11 + $0x168] sm:$0xff]
    %v1227 = vld [vmem:[#allocation11 + $0x170] sm:$0xff]
    %v1228 = vld [vmem:[#allocation11 + $0x178] sm:$0xff]
    %v1229 = vld [vmem:[#allocation11 + $0x180] sm:$0xff]
    %v1230 = vld [vmem:[#allocation11 + $0x188] sm:$0xff]
    %v1231 = vld [vmem:[#allocation11 + $0x190] sm:$0xff]
    %v1232 = vld [vmem:[#allocation11 + $0x198] sm:$0xff]
    %v1233 = vld [vmem:[#allocation11 + $0x1a0] sm:$0xff]
    %v1234 = vld [vmem:[#allocation11 + $0x1a8] sm:$0xff]
    %v1235 = vld [vmem:[#allocation11 + $0x1b0] sm:$0xff]
    %v1236 = vld [vmem:[#allocation11 + $0x1b8] sm:$0xff]
    %v1237 = vld [vmem:[#allocation11 + $0x1c0] sm:$0xff]
    %v1238 = vld [vmem:[#allocation11 + $0x1c8] sm:$0xff]
    %v1239 = vld [vmem:[#allocation11 + $0x1d0] sm:$0xff]
    %v1240 = vld [vmem:[#allocation11 + $0x1d8] sm:$0xff]
    %v1241 = vld [vmem:[#allocation11 + $0x1e0] sm:$0xff]
    %v1242 = vld [vmem:[#allocation11 + $0x1e8] sm:$0xff]
    %v1243 = vld [vmem:[#allocation11 + $0x1f0] sm:$0xff]
    %v1244 = vld [vmem:[#allocation11 + $0x1f8] sm:$0xff]
    %v1245 = vld [vmem:[%s12] sm:$0x1]
    %v1247 = vlaneseq
    %v1248 = vshrl.u32 %v1247, 7
    %v1249 = vsub.s32 0, %v1248
    %v1250 = vrot.slane %v1245, %v1249
    %1252 = vmatprep.subr.mxu0 0.0
    %1253 = vmatpush1.msra.mxu0 %v1181
    %1254 = vmatprep.subr.mxu0 0.0
    %1255 = vmatpush1.msra.mxu0 %v1182
    %1256 = vmatprep.subr.mxu0 0.0
    %1257 = vmatpush1.msra.mxu0 %v1183
    %1258 = vmatprep.subr.mxu0 0.0
    %1259 = vmatpush1.msra.mxu0 %v1184
    %1260 = vmatprep.subr.mxu0 0.0
    %1261 = vmatpush1.msra.mxu0 %v1185
    %1262 = vmatprep.subr.mxu0 0.0
    %1263 = vmatpush1.msra.mxu0 %v1186
    %1264 = vmatprep.subr.mxu0 0.0
    %1265 = vmatpush1.msra.mxu0 %v1187
    %1266 = vmatprep.subr.mxu0 0.0
    %1267 = vmatpush1.msra.mxu0 %v1188
    %1268 = vmatprep.subr.mxu0 0.0
    %1269 = vmatpush1.msra.mxu0 %v1189
    %1270 = vmatprep.subr.mxu0 0.0
    %1271 = vmatpush1.msra.mxu0 %v1190
    %1272 = vmatprep.subr.mxu0 0.0
    %1273 = vmatpush1.msra.mxu0 %v1191
    %1274 = vmatprep.subr.mxu0 0.0
    %1275 = vmatpush1.msra.mxu0 %v1192
    %1276 = vmatprep.subr.mxu0 0.0
    %1277 = vmatpush1.msra.mxu0 %v1193
    %1278 = vmatprep.subr.mxu0 0.0
    %1279 = vmatpush1.msra.mxu0 %v1194
    %1280 = vmatprep.subr.mxu0 0.0
    %1281 = vmatpush1.msra.mxu0 %v1195
    %1282 = vmatprep.subr.mxu0 0.0
    %1283 = vmatpush1.msra.mxu0 %v1196
    %1284 = vmatprep.subr.mxu0 0.0
    %1285 = vmatpush1.msra.mxu0 %v1197
    %1286 = vmatprep.subr.mxu0 0.0
    %1287 = vmatpush1.msra.mxu0 %v1198
    %1288 = vmatprep.subr.mxu0 0.0
    %1289 = vmatpush1.msra.mxu0 %v1199
    %1290 = vmatprep.subr.mxu0 0.0
    %1291 = vmatpush1.msra.mxu0 %v1200
    %1292 = vmatprep.subr.mxu0 0.0
    %1293 = vmatpush1.msra.mxu0 %v1201
    %1294 = vmatprep.subr.mxu0 0.0
    %1295 = vmatpush1.msra.mxu0 %v1202
    %1296 = vmatprep.subr.mxu0 0.0
    %1297 = vmatpush1.msra.mxu0 %v1203
    %1298 = vmatprep.subr.mxu0 0.0
    %1299 = vmatpush1.msra.mxu0 %v1204
    %1300 = vmatprep.subr.mxu0 0.0
    %1301 = vmatpush1.msra.mxu0 %v1205
    %1302 = vmatprep.subr.mxu0 0.0
    %1303 = vmatpush1.msra.mxu0 %v1206
    %1304 = vmatprep.subr.mxu0 0.0
    %1305 = vmatpush1.msra.mxu0 %v1207
    %1306 = vmatprep.subr.mxu0 0.0
    %1307 = vmatpush1.msra.mxu0 %v1208
    %1308 = vmatprep.subr.mxu0 0.0
    %1309 = vmatpush1.msra.mxu0 %v1209
    %1310 = vmatprep.subr.mxu0 0.0
    %1311 = vmatpush1.msra.mxu0 %v1210
    %1312 = vmatprep.subr.mxu0 0.0
    %1313 = vmatpush1.msra.mxu0 %v1211
    %1314 = vmatprep.subr.mxu0 0.0
    %1315 = vmatpush1.msra.mxu0 %v1212
    %1316 = vmatprep.mubr.f32.mxu0 %v1174
    %1317 = vmatmul.mubr.f32.gmra.mrb[0].mxu0 %v1173
    %v1318 = vpop.f32.mrb[0].mxu0
    %v1319 = vadd.f32 %v1250, %v1318
    %v1320 = vpop.f32.mrb[0].mxu0
    %1321 = vmatprep.mubr.f32.mxu0 %v1178
    %1322 = vmatmul.mubr.f32.gmra.mrb[0].mxu0 %v1177
    %v1323 = vpop.f32.mrb[0].mxu0
    %v1324 = vadd.f32 %v1250, %v1323
    %v1325 = vpop.f32.mrb[0].mxu0
    %1326 = vdwg.mxu0
    %1327 = vmatprep.subr.mxu0 0.0
    %1328 = vmatpush1.msra.mxu0 %v1213
    %1329 = vmatprep.subr.mxu0 0.0
    %1330 = vmatpush1.msra.mxu0 %v1214
    %1331 = vmatprep.subr.mxu0 0.0
    %1332 = vmatpush1.msra.mxu0 %v1215
    %1333 = vmatprep.subr.mxu0 0.0
    %1334 = vmatpush1.msra.mxu0 %v1216
    %1335 = vmatprep.subr.mxu0 0.0
    %1336 = vmatpush1.msra.mxu0 %v1217
    %1337 = vmatprep.subr.mxu0 0.0
    %1338 = vmatpush1.msra.mxu0 %v1218
    %1339 = vmatprep.subr.mxu0 0.0
    %1340 = vmatpush1.msra.mxu0 %v1219
    %1341 = vmatprep.subr.mxu0 0.0
    %1342 = vmatpush1.msra.mxu0 %v1220
    %1343 = vmatprep.subr.mxu0 0.0
    %1344 = vmatpush1.msra.mxu0 %v1221
    %1345 = vmatprep.subr.mxu0 0.0
    %1346 = vmatpush1.msra.mxu0 %v1222
    %1347 = vmatprep.subr.mxu0 0.0
    %1348 = vmatpush1.msra.mxu0 %v1223
    %1349 = vmatprep.subr.mxu0 0.0
    %1350 = vmatpush1.msra.mxu0 %v1224
    %1351 = vmatprep.subr.mxu0 0.0
    %1352 = vmatpush1.msra.mxu0 %v1225
    %1353 = vmatprep.subr.mxu0 0.0
    %1354 = vmatpush1.msra.mxu0 %v1226
    %1355 = vmatprep.subr.mxu0 0.0
    %1356 = vmatpush1.msra.mxu0 %v1227
    %1357 = vmatprep.subr.mxu0 0.0
    %1358 = vmatpush1.msra.mxu0 %v1228
    %1359 = vmatprep.subr.mxu0 0.0
    %1360 = vmatpush1.msra.mxu0 %v1229
    %1361 = vmatprep.subr.mxu0 0.0
    %1362 = vmatpush1.msra.mxu0 %v1230
    %1363 = vmatprep.subr.mxu0 0.0
    %1364 = vmatpush1.msra.mxu0 %v1231
    %1365 = vmatprep.subr.mxu0 0.0
    %1366 = vmatpush1.msra.mxu0 %v1232
    %1367 = vmatprep.subr.mxu0 0.0
    %1368 = vmatpush1.msra.mxu0 %v1233
    %1369 = vmatprep.subr.mxu0 0.0
    %1370 = vmatpush1.msra.mxu0 %v1234
    %1371 = vmatprep.subr.mxu0 0.0
    %1372 = vmatpush1.msra.mxu0 %v1235
    %1373 = vmatprep.subr.mxu0 0.0
    %1374 = vmatpush1.msra.mxu0 %v1236
    %1375 = vmatprep.subr.mxu0 0.0
    %1376 = vmatpush1.msra.mxu0 %v1237
    %1377 = vmatprep.subr.mxu0 0.0
    %1378 = vmatpush1.msra.mxu0 %v1238
    %1379 = vmatprep.subr.mxu0 0.0
    %1380 = vmatpush1.msra.mxu0 %v1239
    %1381 = vmatprep.subr.mxu0 0.0
    %1382 = vmatpush1.msra.mxu0 %v1240
    %1383 = vmatprep.subr.mxu0 0.0
    %1384 = vmatpush1.msra.mxu0 %v1241
    %1385 = vmatprep.subr.mxu0 0.0
    %1386 = vmatpush1.msra.mxu0 %v1242
    %1387 = vmatprep.subr.mxu0 0.0
    %1388 = vmatpush1.msra.mxu0 %v1243
    %1389 = vmatprep.subr.mxu0 0.0
    %1390 = vmatpush1.msra.mxu0 %v1244
    %1391 = vmatprep.mubr.f32.mxu0 %v1176
    %1392 = vmatmul.mubr.f32.gmra.mrb[0].mxu0 %v1175
    %v1393 = vpop.f32.mrb[0].mxu0
    %v1394 = vadd.f32 %v1319, %v1393
    %v1395 = vpop.f32.mrb[0].mxu0
    %1396 = vmatprep.mubr.f32.mxu0 %v1180
    %1397 = vmatmul.mubr.f32.gmra.mrb[0].mxu0 %v1179
    %v1398 = vpop.f32.mrb[0].mxu0
    %v1399 = vadd.f32 %v1324, %v1398
    %v1400 = vpop.f32.mrb[0].mxu0
    %1401 = vdwg.mxu0
    %v1402 = vadd.f32 %v931, %v1394
    %v1403 = vadd.f32 %v932, %v1399
    %v1404 = vld [vmem:[%s13] sm:$0x1]
    %v1405 = vld [vmem:[%s14] sm:$0x1]
    %1406 = vadd.xlane.f32.xlu0 %v1402
    %v1407 = vpop.xlane.xlu0 %1406
    %1408 = vadd.xlane.f32.xlu0 %v1403
    %v1409 = vpop.xlane.xlu0 %1408
    %v1410 = vmul.f32 %v1407, %v884
    %v1411 = vmul.f32 %v1409, %v884
    %v1412 = vsub.f32 %v1402, %v1410
    %v1413 = vsub.f32 %v1403, %v1411
    %v1414 = vmul.f32 %v1412, %v1412
    %v1415 = vmul.f32 %v1413, %v1413
    %1416 = vadd.xlane.f32.xlu0 %v1414
    %v1417 = vpop.xlane.xlu0 %1416
    %1418 = vadd.xlane.f32.xlu0 %v1415
    %v1419 = vpop.xlane.xlu0 %1418
    %v1420 = vmul.f32 %v1417, %v884
    %v1421 = vmul.f32 %v1419, %v884
    %v1422 = vadd.f32 %v1420, 1e-05
    %v1423 = vadd.f32 %v1421, 1e-05
    %v1424 = vrsqrt.pop %v1422
    %v1425 = vmul.f32 %v1422, %v1424
    %vm1426 = vcmp.eq.f32.partialorder %v1422, inf
    %v1427 = vsel %vm1426, %v1422, %v1425
    %vm1428 = vcmp.eq.f32.partialorder %v1422, 0.0
    %v1429 = vand.u32 %v1422, 2147483648
    %v1430 = vsel %vm1428, %v1429, %v1427
    %v1431 = vrsqrt.pop %v1423
    %v1432 = vmul.f32 %v1423, %v1431
    %vm1433 = vcmp.eq.f32.partialorder %v1423, inf
    %v1434 = vsel %vm1433, %v1423, %v1432
    %vm1435 = vcmp.eq.f32.partialorder %v1423, 0.0
    %v1436 = vand.u32 %v1423, 2147483648
    %v1437 = vsel %vm1435, %v1436, %v1434
    %v1438 = vrcp.pop %v1430
    %v1439 = vmul.f32 %v1412, %v1438
    %v1440 = vrcp.pop %v1437
    %v1441 = vmul.f32 %v1413, %v1440
    %v1443 = vlaneseq
    %v1444 = vshrl.u32 %v1443, 7
    %v1445 = vsub.s32 0, %v1444
    %v1446 = vrot.slane %v1404, %v1445
    %v1448 = vmul.f32 %v1439, %v1446
    %v1449 = vmul.f32 %v1441, %v1446
    %v1451 = vlaneseq
    %v1452 = vshrl.u32 %v1451, 7
    %v1453 = vsub.s32 0, %v1452
    %v1454 = vrot.slane %v1405, %v1453
    %v1456 = vadd.f32 %v1448, %v1454
    %v1457 = vadd.f32 %v1449, %v1454
    %s1458 = scalar_lea.vmem [#allocation6], 384
    %v1459 = vld [vmem:[%s1458] sm:$0xff]
    %v1460 = vld [vmem:[%s1458 + $0x8] sm:$0xff]
    %v1461 = vld [vmem:[%s1458 + $0x10] sm:$0xff]
    %v1462 = vld [vmem:[%s1458 + $0x18] sm:$0xff]
    %v1463 = vld [vmem:[%s1458 + $0x20] sm:$0xff]
    %v1464 = vld [vmem:[%s1458 + $0x28] sm:$0xff]
    %v1465 = vld [vmem:[%s1458 + $0x30] sm:$0xff]
    %v1466 = vld [vmem:[%s1458 + $0x38] sm:$0xff]
    %v1467 = vld [vmem:[%s1458 + $0x40] sm:$0xff]
    %v1468 = vld [vmem:[%s1458 + $0x48] sm:$0xff]
    %v1469 = vld [vmem:[%s1458 + $0x50] sm:$0xff]
    %v1470 = vld [vmem:[%s1458 + $0x58] sm:$0xff]
    %v1471 = vld [vmem:[%s1458 + $0x60] sm:$0xff]
    %v1472 = vld [vmem:[%s1458 + $0x68] sm:$0xff]
    %v1473 = vld [vmem:[%s1458 + $0x70] sm:$0xff]
    %v1474 = vld [vmem:[%s1458 + $0x78] sm:$0xff]
    %v1475 = vld [vmem:[%s1458 + $0x80] sm:$0xff]
    %v1476 = vld [vmem:[%s1458 + $0x88] sm:$0xff]
    %v1477 = vld [vmem:[%s1458 + $0x90] sm:$0xff]
    %v1478 = vld [vmem:[%s1458 + $0x98] sm:$0xff]
    %v1479 = vld [vmem:[%s1458 + $0xa0] sm:$0xff]
    %v1480 = vld [vmem:[%s1458 + $0xa8] sm:$0xff]
    %v1481 = vld [vmem:[%s1458 + $0xb0] sm:$0xff]
    %v1482 = vld [vmem:[%s1458 + $0xb8] sm:$0xff]
    %v1483 = vld [vmem:[%s1458 + $0xc0] sm:$0xff]
    %v1484 = vld [vmem:[%s1458 + $0xc8] sm:$0xff]
    %v1485 = vld [vmem:[%s1458 + $0xd0] sm:$0xff]
    %v1486 = vld [vmem:[%s1458 + $0xd8] sm:$0xff]
    %v1487 = vld [vmem:[%s1458 + $0xe0] sm:$0xff]
    %v1488 = vld [vmem:[%s1458 + $0xe8] sm:$0xff]
    %v1489 = vld [vmem:[%s1458 + $0xf0] sm:$0xff]
    %v1490 = vld [vmem:[%s1458 + $0xf8] sm:$0xff]
    %v1491 = vld [vmem:[%s1458 + $0x100] sm:$0xff]
    %v1492 = vld [vmem:[%s1458 + $0x108] sm:$0xff]
    %v1493 = vld [vmem:[%s1458 + $0x110] sm:$0xff]
    %v1494 = vld [vmem:[%s1458 + $0x118] sm:$0xff]
    %v1495 = vld [vmem:[%s1458 + $0x120] sm:$0xff]
    %v1496 = vld [vmem:[%s1458 + $0x128] sm:$0xff]
    %v1497 = vld [vmem:[%s1458 + $0x130] sm:$0xff]
    %v1498 = vld [vmem:[%s1458 + $0x138] sm:$0xff]
    %v1499 = vld [vmem:[%s1458 + $0x140] sm:$0xff]
    %v1500 = vld [vmem:[%s1458 + $0x148] sm:$0xff]
    %v1501 = vld [vmem:[%s1458 + $0x150] sm:$0xff]
    %v1502 = vld [vmem:[%s1458 + $0x158] sm:$0xff]
    %v1503 = vld [vmem:[%s1458 + $0x160] sm:$0xff]
    %v1504 = vld [vmem:[%s1458 + $0x168] sm:$0xff]
    %v1505 = vld [vmem:[%s1458 + $0x170] sm:$0xff]
    %v1506 = vld [vmem:[%s1458 + $0x178] sm:$0xff]
    %s1507 = scalar_lea.vmem [#allocation8], 3
    %v1508 = vld [vmem:[%s1507] sm:$0x7]
    %v1510 = vlaneseq
    %v1511 = vshrl.u32 %v1510, 7
    %v1512 = vsub.s32 0, %v1511
    %v1513 = vrot.slane %v1508, %v1512
    %v1514 = vlaneseq
    %v1515 = vshrl.u32 %v1514, 7
    %v1516 = vsub.s32 1, %v1515
    %v1517 = vrot.slane %v1508, %v1516
    %v1518 = vlaneseq
    %v1519 = vshrl.u32 %v1518, 7
    %v1520 = vsub.s32 2, %v1519
    %v1521 = vrot.slane %v1508, %v1520
    %1525 = vmatprep.subr.mxu0 %v1460
    %1526 = vmatpush1.msra.mxu0 %v1459
    %1527 = vmatprep.subr.mxu0 %v1463
    %1528 = vmatpush1.msra.mxu0 %v1462
    %1529 = vmatprep.subr.mxu0 %v1466
    %1530 = vmatpush1.msra.mxu0 %v1465
    %1531 = vmatprep.subr.mxu0 %v1469
    %1532 = vmatpush1.msra.mxu0 %v1468
    %1533 = vmatprep.subr.mxu0 %v1472
    %1534 = vmatpush1.msra.mxu0 %v1471
    %1535 = vmatprep.subr.mxu0 %v1475
    %1536 = vmatpush1.msra.mxu0 %v1474
    %1537 = vmatprep.subr.mxu0 %v1478
    %1538 = vmatpush1.msra.mxu0 %v1477
    %1539 = vmatprep.subr.mxu0 %v1481
    %1540 = vmatpush1.msra.mxu0 %v1480
    %1541 = vmatprep.subr.mxu0 %v1484
    %1542 = vmatpush1.msra.mxu0 %v1483
    %1543 = vmatprep.subr.mxu0 %v1487
    %1544 = vmatpush1.msra.mxu0 %v1486
    %1545 = vmatprep.subr.mxu0 %v1490
    %1546 = vmatpush1.msra.mxu0 %v1489
    %1547 = vmatprep.subr.mxu0 %v1493
    %1548 = vmatpush1.msra.mxu0 %v1492
    %1549 = vmatprep.subr.mxu0 %v1496
    %1550 = vmatpush1.msra.mxu0 %v1495
    %1551 = vmatprep.subr.mxu0 %v1499
    %1552 = vmatpush1.msra.mxu0 %v1498
    %1553 = vmatprep.subr.mxu0 %v1502
    %1554 = vmatpush1.msra.mxu0 %v1501
    %1555 = vmatprep.subr.mxu0 %v1505
    %1556 = vmatpush1.msra.mxu0 %v1504
    %1557 = vmatprep.subr.mxu0 0.0
    %1558 = vmatpush1.msra.mxu0 0.0
    %1559 = vmatprep.subr.mxu0 0.0
    %1560 = vmatpush1.msra.mxu0 0.0
    %1561 = vmatprep.subr.mxu0 0.0
    %1562 = vmatpush1.msra.mxu0 0.0
    %1563 = vmatprep.subr.mxu0 0.0
    %1564 = vmatpush1.msra.mxu0 0.0
    %1565 = vmatprep.subr.mxu0 0.0
    %1566 = vmatpush1.msra.mxu0 0.0
    %1567 = vmatprep.subr.mxu0 0.0
    %1568 = vmatpush1.msra.mxu0 0.0
    %1569 = vmatprep.subr.mxu0 0.0
    %1570 = vmatpush1.msra.mxu0 0.0
    %1571 = vmatprep.subr.mxu0 0.0
    %1572 = vmatpush1.msra.mxu0 0.0
    %1573 = vmatprep.subr.mxu0 0.0
    %1574 = vmatpush1.msra.mxu0 0.0
    %1575 = vmatprep.subr.mxu0 0.0
    %1576 = vmatpush1.msra.mxu0 0.0
    %1577 = vmatprep.subr.mxu0 0.0
    %1578 = vmatpush1.msra.mxu0 0.0
    %1579 = vmatprep.subr.mxu0 0.0
    %1580 = vmatpush1.msra.mxu0 0.0
    %1581 = vmatprep.subr.mxu0 0.0
    %1582 = vmatpush1.msra.mxu0 0.0
    %1583 = vmatprep.subr.mxu0 0.0
    %1584 = vmatpush1.msra.mxu0 0.0
    %1585 = vmatprep.subr.mxu0 0.0
    %1586 = vmatpush1.msra.mxu0 0.0
    %1587 = vmatprep.subr.mxu0 0.0
    %1588 = vmatpush1.msra.mxu0 0.0
    %1589 = vmatprep.mubr.f32.mxu0 0.0
    %1590 = vmatmul.mubr.f32.gmra.mrb[0].mxu0 %v1456
    %v1591 = vpop.f32.mrb[0].mxu0
    %v1592 = vadd.f32 %v1513, %v1591
    %v1593 = vpop.f32.mrb[0].mxu0
    %v1594 = vadd.f32 %v1517, %v1593
    %1595 = vmatprep.mubr.f32.mxu0 0.0
    %1596 = vmatmul.mubr.f32.gmra.mrb[0].mxu0 %v1457
    %v1597 = vpop.f32.mrb[0].mxu0
    %v1598 = vadd.f32 %v1513, %v1597
    %v1599 = vpop.f32.mrb[0].mxu0
    %v1600 = vadd.f32 %v1517, %v1599
    %1601 = vdwg.mxu0
    %1602 = vmatprep.subr.mxu0 0.0
    %1603 = vmatpush1.msra.mxu0 %v1461
    %1604 = vmatprep.subr.mxu0 0.0
    %1605 = vmatpush1.msra.mxu0 %v1464
    %1606 = vmatprep.subr.mxu0 0.0
    %1607 = vmatpush1.msra.mxu0 %v1467
    %1608 = vmatprep.subr.mxu0 0.0
    %1609 = vmatpush1.msra.mxu0 %v1470
    %1610 = vmatprep.subr.mxu0 0.0
    %1611 = vmatpush1.msra.mxu0 %v1473
    %1612 = vmatprep.subr.mxu0 0.0
    %1613 = vmatpush1.msra.mxu0 %v1476
    %1614 = vmatprep.subr.mxu0 0.0
    %1615 = vmatpush1.msra.mxu0 %v1479
    %1616 = vmatprep.subr.mxu0 0.0
    %1617 = vmatpush1.msra.mxu0 %v1482
    %1618 = vmatprep.subr.mxu0 0.0
    %1619 = vmatpush1.msra.mxu0 %v1485
    %1620 = vmatprep.subr.mxu0 0.0
    %1621 = vmatpush1.msra.mxu0 %v1488
    %1622 = vmatprep.subr.mxu0 0.0
    %1623 = vmatpush1.msra.mxu0 %v1491
    %1624 = vmatprep.subr.mxu0 0.0
    %1625 = vmatpush1.msra.mxu0 %v1494
    %1626 = vmatprep.subr.mxu0 0.0
    %1627 = vmatpush1.msra.mxu0 %v1497
    %1628 = vmatprep.subr.mxu0 0.0
    %1629 = vmatpush1.msra.mxu0 %v1500
    %1630 = vmatprep.subr.mxu0 0.0
    %1631 = vmatpush1.msra.mxu0 %v1503
    %1632 = vmatprep.subr.mxu0 0.0
    %1633 = vmatpush1.msra.mxu0 %v1506
    %1634 = vmatprep.subr.mxu0 0.0
    %1635 = vmatpush1.msra.mxu0 0.0
    %1636 = vmatprep.subr.mxu0 0.0
    %1637 = vmatpush1.msra.mxu0 0.0
    %1638 = vmatprep.subr.mxu0 0.0
    %1639 = vmatpush1.msra.mxu0 0.0
    %1640 = vmatprep.subr.mxu0 0.0
    %1641 = vmatpush1.msra.mxu0 0.0
    %1642 = vmatprep.subr.mxu0 0.0
    %1643 = vmatpush1.msra.mxu0 0.0
    %1644 = vmatprep.subr.mxu0 0.0
    %1645 = vmatpush1.msra.mxu0 0.0
    %1646 = vmatprep.subr.mxu0 0.0
    %1647 = vmatpush1.msra.mxu0 0.0
    %1648 = vmatprep.subr.mxu0 0.0
    %1649 = vmatpush1.msra.mxu0 0.0
    %1650 = vmatprep.subr.mxu0 0.0
    %1651 = vmatpush1.msra.mxu0 0.0
    %1652 = vmatprep.subr.mxu0 0.0
    %1653 = vmatpush1.msra.mxu0 0.0
    %1654 = vmatprep.subr.mxu0 0.0
    %1655 = vmatpush1.msra.mxu0 0.0
    %1656 = vmatprep.subr.mxu0 0.0
    %1657 = vmatpush1.msra.mxu0 0.0
    %1658 = vmatprep.subr.mxu0 0.0
    %1659 = vmatpush1.msra.mxu0 0.0
    %1660 = vmatprep.subr.mxu0 0.0
    %1661 = vmatpush1.msra.mxu0 0.0
    %1662 = vmatprep.subr.mxu0 0.0
    %1663 = vmatpush1.msra.mxu0 0.0
    %1664 = vmatprep.subr.mxu0 0.0
    %1665 = vmatpush1.msra.mxu0 0.0
    %1666 = vmatprep.mubr.f32.mxu0 0.0
    %1667 = vmatmul.mubr.f32.gmra.mrb[0].mxu0 %v1456
    %v1668 = vpop.f32.mrb[0].mxu0
    %v1669 = vadd.f32 %v1521, %v1668
    %v1670 = vpop.f32.mrb[0].mxu0
    %1671 = vmatprep.mubr.f32.mxu0 0.0
    %1672 = vmatmul.mubr.f32.gmra.mrb[0].mxu0 %v1457
    %v1673 = vpop.f32.mrb[0].mxu0
    %v1674 = vadd.f32 %v1521, %v1673
    %v1675 = vpop.f32.mrb[0].mxu0
    %1676 = vdwg.mxu0
    %v1678 = vsel %vm366, %v1592, 0
    %v1681 = vsel %vm366, %v1598, 0
    %v1684 = vsel %vm366, %v1594, 0
    %v1687 = vsel %vm366, %v1600, 0
    %1689 = vmatprep.subr.mxu0 0.0
    %1690 = vmatpush1.xpose.msra.mxu0 %v1684
    %1691 = vmatprep.subr.mxu0 0.0
    %1692 = vmatpush1.xpose.msra.mxu0 %v1687
    %1693 = vmatprep.subr.mxu0 0.0
    %1694 = vmatpush1.xpose.msra.mxu0 0.0
    %1695 = vmatprep.subr.mxu0 0.0
    %1696 = vmatpush1.xpose.msra.mxu0 0.0
    %1697 = vmatprep.subr.mxu0 0.0
    %1698 = vmatpush1.xpose.msra.mxu0 0.0
    %1699 = vmatprep.subr.mxu0 0.0
    %1700 = vmatpush1.xpose.msra.mxu0 0.0
    %1701 = vmatprep.subr.mxu0 0.0
    %1702 = vmatpush1.xpose.msra.mxu0 0.0
    %1703 = vmatprep.subr.mxu0 0.0
    %1704 = vmatpush1.xpose.msra.mxu0 0.0
    %1705 = vmatprep.subr.mxu0 0.0
    %1706 = vmatpush1.xpose.msra.mxu0 0.0
    %1707 = vmatprep.subr.mxu0 0.0
    %1708 = vmatpush1.xpose.msra.mxu0 0.0
    %1709 = vmatprep.subr.mxu0 0.0
    %1710 = vmatpush1.xpose.msra.mxu0 0.0
    %1711 = vmatprep.subr.mxu0 0.0
    %1712 = vmatpush1.xpose.msra.mxu0 0.0
    %1713 = vmatprep.subr.mxu0 0.0
    %1714 = vmatpush1.xpose.msra.mxu0 0.0
    %1715 = vmatprep.subr.mxu0 0.0
    %1716 = vmatpush1.xpose.msra.mxu0 0.0
    %1717 = vmatprep.subr.mxu0 0.0
    %1718 = vmatpush1.xpose.msra.mxu0 0.0
    %1719 = vmatprep.subr.mxu0 0.0
    %1720 = vmatpush1.xpose.msra.mxu0 0.0
    %1721 = vmatprep.subr.mxu0 0.0
    %1722 = vmatpush1.xpose.msra.mxu0 0.0
    %1723 = vmatprep.subr.mxu0 0.0
    %1724 = vmatpush1.xpose.msra.mxu0 0.0
    %1725 = vmatprep.subr.mxu0 0.0
    %1726 = vmatpush1.xpose.msra.mxu0 0.0
    %1727 = vmatprep.subr.mxu0 0.0
    %1728 = vmatpush1.xpose.msra.mxu0 0.0
    %1729 = vmatprep.subr.mxu0 0.0
    %1730 = vmatpush1.xpose.msra.mxu0 0.0
    %1731 = vmatprep.subr.mxu0 0.0
    %1732 = vmatpush1.xpose.msra.mxu0 0.0
    %1733 = vmatprep.subr.mxu0 0.0
    %1734 = vmatpush1.xpose.msra.mxu0 0.0
    %1735 = vmatprep.subr.mxu0 0.0
    %1736 = vmatpush1.xpose.msra.mxu0 0.0
    %1737 = vmatprep.subr.mxu0 0.0
    %1738 = vmatpush1.xpose.msra.mxu0 0.0
    %1739 = vmatprep.subr.mxu0 0.0
    %1740 = vmatpush1.xpose.msra.mxu0 0.0
    %1741 = vmatprep.subr.mxu0 0.0
    %1742 = vmatpush1.xpose.msra.mxu0 0.0
    %1743 = vmatprep.subr.mxu0 0.0
    %1744 = vmatpush1.xpose.msra.mxu0 0.0
    %1745 = vmatprep.subr.mxu0 0.0
    %1746 = vmatpush1.xpose.msra.mxu0 0.0
    %1747 = vmatprep.subr.mxu0 0.0
    %1748 = vmatpush1.xpose.msra.mxu0 0.0
    %1749 = vmatprep.subr.mxu0 0.0
    %1750 = vmatpush1.xpose.msra.mxu0 0.0
    %1751 = vmatprep.subr.mxu0 0.0
    %1752 = vmatpush1.xpose.msra.mxu0 0.0
    %1753 = vmatprep.mubr.f32.mxu0 0.0
    %1754 = vmatmul.mubr.f32.gmra.mrb[0].mxu0 %v1678
    %v1755 = vpop.f32.mrb[0].mxu0
    %v1756 = vadd.f32 0.0, %v1755
    %v1757 = vpop.f32.mrb[0].mxu0
    %1758 = vmatprep.mubr.f32.mxu0 0.0
    %1759 = vmatmul.mubr.f32.gmra.mrb[0].mxu0 %v1681
    %v1760 = vpop.f32.mrb[0].mxu0
    %v1761 = vadd.f32 0.0, %v1760
    %v1762 = vpop.f32.mrb[0].mxu0
    %1763 = vdwg.mxu0
    %v1764 = vmul.f32 %v1756, 0.125
    %v1765 = vmul.f32 %v1761, 0.125
    %v1766 = vadd.f32 %v1764, %v147
    %v1767 = vadd.f32 %v1765, %v148
    %v1768 = vsel %vm458, %v1766, -inf
    %1769 = vmax.xlane.f32.xlu0 %v1768
    %v1770 = vpop.xlane.xlu0 %1769
    %v1771 = vsel %vm458, %v1767, -inf
    %1772 = vmax.xlane.f32.xlu0 %v1771
    %v1773 = vpop.xlane.xlu0 %1772
    %v1774 = vsub.f32 %v1766, %v1770
    %v1775 = vsub.f32 %v1767, %v1773
    %v1776 = vmul.f32 %v1774, 1.442695
    %v1777 = vpow.pop %v1776
    %v1778 = vmul.f32 %v1775, 1.442695
    %v1779 = vpow.pop %v1778
    %v1780 = vsel %vm458, %v1777, 0.0
    %1781 = vadd.xlane.f32.xlu0 %v1780
    %v1782 = vpop.xlane.xlu0 %1781
    %v1783 = vsel %vm458, %v1779, 0.0
    %1784 = vadd.xlane.f32.xlu0 %v1783
    %v1785 = vpop.xlane.xlu0 %1784
    %v1786 = vrcp.pop %v1782
    %v1787 = vmul.f32 %v1777, %v1786
    %v1788 = vrcp.pop %v1785
    %v1789 = vmul.f32 %v1779, %v1788
    %v1791 = vsel %vm458, %v1787, 0
    %v1794 = vsel %vm458, %v1789, 0
    %1796 = vmatprep.subr.mxu0 0.0
    %1797 = vmatpush1.msra.mxu0 %v1669
    %1798 = vmatprep.subr.mxu0 0.0
    %1799 = vmatpush1.msra.mxu0 %v1674
    %1800 = vmatprep.subr.mxu0 0.0
    %1801 = vmatpush1.msra.mxu0 0.0
    %1802 = vmatprep.subr.mxu0 0.0
    %1803 = vmatpush1.msra.mxu0 0.0
    %1804 = vmatprep.subr.mxu0 0.0
    %1805 = vmatpush1.msra.mxu0 0.0
    %1806 = vmatprep.subr.mxu0 0.0
    %1807 = vmatpush1.msra.mxu0 0.0
    %1808 = vmatprep.subr.mxu0 0.0
    %1809 = vmatpush1.msra.mxu0 0.0
    %1810 = vmatprep.subr.mxu0 0.0
    %1811 = vmatpush1.msra.mxu0 0.0
    %1812 = vmatprep.subr.mxu0 0.0
    %1813 = vmatpush1.msra.mxu0 0.0
    %1814 = vmatprep.subr.mxu0 0.0
    %1815 = vmatpush1.msra.mxu0 0.0
    %1816 = vmatprep.subr.mxu0 0.0
    %1817 = vmatpush1.msra.mxu0 0.0
    %1818 = vmatprep.subr.mxu0 0.0
    %1819 = vmatpush1.msra.mxu0 0.0
    %1820 = vmatprep.subr.mxu0 0.0
    %1821 = vmatpush1.msra.mxu0 0.0
    %1822 = vmatprep.subr.mxu0 0.0
    %1823 = vmatpush1.msra.mxu0 0.0
    %1824 = vmatprep.subr.mxu0 0.0
    %1825 = vmatpush1.msra.mxu0 0.0
    %1826 = vmatprep.subr.mxu0 0.0
    %1827 = vmatpush1.msra.mxu0 0.0
    %1828 = vmatprep.subr.mxu0 0.0
    %1829 = vmatpush1.msra.mxu0 0.0
    %1830 = vmatprep.subr.mxu0 0.0
    %1831 = vmatpush1.msra.mxu0 0.0
    %1832 = vmatprep.subr.mxu0 0.0
    %1833 = vmatpush1.msra.mxu0 0.0
    %1834 = vmatprep.subr.mxu0 0.0
    %1835 = vmatpush1.msra.mxu0 0.0
    %1836 = vmatprep.subr.mxu0 0.0
    %1837 = vmatpush1.msra.mxu0 0.0
    %1838 = vmatprep.subr.mxu0 0.0
    %1839 = vmatpush1.msra.mxu0 0.0
    %1840 = vmatprep.subr.mxu0 0.0
    %1841 = vmatpush1.msra.mxu0 0.0
    %1842 = vmatprep.subr.mxu0 0.0
    %1843 = vmatpush1.msra.mxu0 0.0
    %1844 = vmatprep.subr.mxu0 0.0
    %1845 = vmatpush1.msra.mxu0 0.0
    %1846 = vmatprep.subr.mxu0 0.0
    %1847 = vmatpush1.msra.mxu0 0.0
    %1848 = vmatprep.subr.mxu0 0.0
    %1849 = vmatpush1.msra.mxu0 0.0
    %1850 = vmatprep.subr.mxu0 0.0
    %1851 = vmatpush1.msra.mxu0 0.0
    %1852 = vmatprep.subr.mxu0 0.0
    %1853 = vmatpush1.msra.mxu0 0.0
    %1854 = vmatprep.subr.mxu0 0.0
    %1855 = vmatpush1.msra.mxu0 0.0
    %1856 = vmatprep.subr.mxu0 0.0
    %1857 = vmatpush1.msra.mxu0 0.0
    %1858 = vmatprep.subr.mxu0 0.0
    %1859 = vmatpush1.msra.mxu0 0.0
    %1860 = vmatprep.mubr.f32.mxu0 0.0
    %1861 = vmatmul.mubr.f32.gmra.mrb[0].mxu0 %v1791
    %v1862 = vpop.f32.mrb[0].mxu0
    %v1863 = vadd.f32 0.0, %v1862
    %v1864 = vpop.f32.mrb[0].mxu0
    %1865 = vmatprep.mubr.f32.mxu0 0.0
    %1866 = vmatmul.mubr.f32.gmra.mrb[0].mxu0 %v1794
    %v1867 = vpop.f32.mrb[0].mxu0
    %v1868 = vadd.f32 0.0, %v1867
    %v1869 = vpop.f32.mrb[0].mxu0
    %1870 = vdwg.mxu0
    %1871 = vrot.lane.b32.xlu0 %v1592, 64
    %v1872 = vpop.permute.xlu0 %1871
    %1873 = vrot.lane.b32.xlu0 %v1598, 64
    %v1874 = vpop.permute.xlu0 %1873
    %1875 = vrot.lane.b32.xlu0 %v1594, 64
    %v1876 = vpop.permute.xlu0 %1875
    %1877 = vrot.lane.b32.xlu0 %v1600, 64
    %v1878 = vpop.permute.xlu0 %1877
    %v1879 = vsel %vm366, %v1872, 0
    %v1881 = vsel %vm366, %v1874, 0
    %v1883 = vsel %vm366, %v1876, 0
    %v1885 = vsel %vm366, %v1878, 0
    %1887 = vmatprep.subr.mxu0 0.0
    %1888 = vmatpush1.xpose.msra.mxu0 %v1883
    %1889 = vmatprep.subr.mxu0 0.0
    %1890 = vmatpush1.xpose.msra.mxu0 %v1885
    %1891 = vmatprep.subr.mxu0 0.0
    %1892 = vmatpush1.xpose.msra.mxu0 0.0
    %1893 = vmatprep.subr.mxu0 0.0
    %1894 = vmatpush1.xpose.msra.mxu0 0.0
    %1895 = vmatprep.subr.mxu0 0.0
    %1896 = vmatpush1.xpose.msra.mxu0 0.0
    %1897 = vmatprep.subr.mxu0 0.0
    %1898 = vmatpush1.xpose.msra.mxu0 0.0
    %1899 = vmatprep.subr.mxu0 0.0
    %1900 = vmatpush1.xpose.msra.mxu0 0.0
    %1901 = vmatprep.subr.mxu0 0.0
    %1902 = vmatpush1.xpose.msra.mxu0 0.0
    %1903 = vmatprep.subr.mxu0 0.0
    %1904 = vmatpush1.xpose.msra.mxu0 0.0
    %1905 = vmatprep.subr.mxu0 0.0
    %1906 = vmatpush1.xpose.msra.mxu0 0.0
    %1907 = vmatprep.subr.mxu0 0.0
    %1908 = vmatpush1.xpose.msra.mxu0 0.0
    %1909 = vmatprep.subr.mxu0 0.0
    %1910 = vmatpush1.xpose.msra.mxu0 0.0
    %1911 = vmatprep.subr.mxu0 0.0
    %1912 = vmatpush1.xpose.msra.mxu0 0.0
    %1913 = vmatprep.subr.mxu0 0.0
    %1914 = vmatpush1.xpose.msra.mxu0 0.0
    %1915 = vmatprep.subr.mxu0 0.0
    %1916 = vmatpush1.xpose.msra.mxu0 0.0
    %1917 = vmatprep.subr.mxu0 0.0
    %1918 = vmatpush1.xpose.msra.mxu0 0.0
    %1919 = vmatprep.subr.mxu0 0.0
    %1920 = vmatpush1.xpose.msra.mxu0 0.0
    %1921 = vmatprep.subr.mxu0 0.0
    %1922 = vmatpush1.xpose.msra.mxu0 0.0
    %1923 = vmatprep.subr.mxu0 0.0
    %1924 = vmatpush1.xpose.msra.mxu0 0.0
    %1925 = vmatprep.subr.mxu0 0.0
    %1926 = vmatpush1.xpose.msra.mxu0 0.0
    %1927 = vmatprep.subr.mxu0 0.0
    %1928 = vmatpush1.xpose.msra.mxu0 0.0
    %1929 = vmatprep.subr.mxu0 0.0
    %1930 = vmatpush1.xpose.msra.mxu0 0.0
    %1931 = vmatprep.subr.mxu0 0.0
    %1932 = vmatpush1.xpose.msra.mxu0 0.0
    %1933 = vmatprep.subr.mxu0 0.0
    %1934 = vmatpush1.xpose.msra.mxu0 0.0
    %1935 = vmatprep.subr.mxu0 0.0
    %1936 = vmatpush1.xpose.msra.mxu0 0.0
    %1937 = vmatprep.subr.mxu0 0.0
    %1938 = vmatpush1.xpose.msra.mxu0 0.0
    %1939 = vmatprep.subr.mxu0 0.0
    %1940 = vmatpush1.xpose.msra.mxu0 0.0
    %1941 = vmatprep.subr.mxu0 0.0
    %1942 = vmatpush1.xpose.msra.mxu0 0.0
    %1943 = vmatprep.subr.mxu0 0.0
    %1944 = vmatpush1.xpose.msra.mxu0 0.0
    %1945 = vmatprep.subr.mxu0 0.0
    %1946 = vmatpush1.xpose.msra.mxu0 0.0
    %1947 = vmatprep.subr.mxu0 0.0
    %1948 = vmatpush1.xpose.msra.mxu0 0.0
    %1949 = vmatprep.subr.mxu0 0.0
    %1950 = vmatpush1.xpose.msra.mxu0 0.0
    %1951 = vmatprep.mubr.f32.mxu0 0.0
    %1952 = vmatmul.mubr.f32.gmra.mrb[0].mxu0 %v1879
    %v1953 = vpop.f32.mrb[0].mxu0
    %v1954 = vadd.f32 0.0, %v1953
    %v1955 = vpop.f32.mrb[0].mxu0
    %1956 = vmatprep.mubr.f32.mxu0 0.0
    %1957 = vmatmul.mubr.f32.gmra.mrb[0].mxu0 %v1881
    %v1958 = vpop.f32.mrb[0].mxu0
    %v1959 = vadd.f32 0.0, %v1958
    %v1960 = vpop.f32.mrb[0].mxu0
    %1961 = vdwg.mxu0
    %v1962 = vmul.f32 %v1954, 0.125
    %v1963 = vmul.f32 %v1959, 0.125
    %v1964 = vadd.f32 %v1962, %v147
    %v1965 = vadd.f32 %v1963, %v148
    %v1966 = vsel %vm458, %v1964, -inf
    %1967 = vmax.xlane.f32.xlu0 %v1966
    %v1968 = vpop.xlane.xlu0 %1967
    %v1969 = vsel %vm458, %v1965, -inf
    %1970 = vmax.xlane.f32.xlu0 %v1969
    %v1971 = vpop.xlane.xlu0 %1970
    %v1972 = vsub.f32 %v1964, %v1968
    %v1973 = vsub.f32 %v1965, %v1971
    %v1974 = vmul.f32 %v1972, 1.442695
    %v1975 = vpow.pop %v1974
    %v1976 = vmul.f32 %v1973, 1.442695
    %v1977 = vpow.pop %v1976
    %v1978 = vsel %vm458, %v1975, 0.0
    %1979 = vadd.xlane.f32.xlu0 %v1978
    %v1980 = vpop.xlane.xlu0 %1979
    %v1981 = vsel %vm458, %v1977, 0.0
    %1982 = vadd.xlane.f32.xlu0 %v1981
    %v1983 = vpop.xlane.xlu0 %1982
    %v1984 = vrcp.pop %v1980
    %v1985 = vmul.f32 %v1975, %v1984
    %v1986 = vrcp.pop %v1983
    %v1987 = vmul.f32 %v1977, %v1986
    %1990 = vrot.lane.b32.xlu0 %v1669, 64
    %v1991 = vpop.permute.xlu0 %1990
    %1992 = vrot.lane.b32.xlu0 %v1674, 64
    %v1993 = vpop.permute.xlu0 %1992
    %v1997 = vsel %vm458, %v1985, 0
    %v2000 = vsel %vm458, %v1987, 0
    %2002 = vmatprep.subr.mxu0 0.0
    %2003 = vmatpush1.msra.mxu0 %v1991
    %2004 = vmatprep.subr.mxu0 0.0
    %2005 = vmatpush1.msra.mxu0 %v1993
    %2006 = vmatprep.subr.mxu0 0.0
    %2007 = vmatpush1.msra.mxu0 0.0
    %2008 = vmatprep.subr.mxu0 0.0
    %2009 = vmatpush1.msra.mxu0 0.0
    %2010 = vmatprep.subr.mxu0 0.0
    %2011 = vmatpush1.msra.mxu0 0.0
    %2012 = vmatprep.subr.mxu0 0.0
    %2013 = vmatpush1.msra.mxu0 0.0
    %2014 = vmatprep.subr.mxu0 0.0
    %2015 = vmatpush1.msra.mxu0 0.0
    %2016 = vmatprep.subr.mxu0 0.0
    %2017 = vmatpush1.msra.mxu0 0.0
    %2018 = vmatprep.subr.mxu0 0.0
    %2019 = vmatpush1.msra.mxu0 0.0
    %2020 = vmatprep.subr.mxu0 0.0
    %2021 = vmatpush1.msra.mxu0 0.0
    %2022 = vmatprep.subr.mxu0 0.0
    %2023 = vmatpush1.msra.mxu0 0.0
    %2024 = vmatprep.subr.mxu0 0.0
    %2025 = vmatpush1.msra.mxu0 0.0
    %2026 = vmatprep.subr.mxu0 0.0
    %2027 = vmatpush1.msra.mxu0 0.0
    %2028 = vmatprep.subr.mxu0 0.0
    %2029 = vmatpush1.msra.mxu0 0.0
    %2030 = vmatprep.subr.mxu0 0.0
    %2031 = vmatpush1.msra.mxu0 0.0
    %2032 = vmatprep.subr.mxu0 0.0
    %2033 = vmatpush1.msra.mxu0 0.0
    %2034 = vmatprep.subr.mxu0 0.0
    %2035 = vmatpush1.msra.mxu0 0.0
    %2036 = vmatprep.subr.mxu0 0.0
    %2037 = vmatpush1.msra.mxu0 0.0
    %2038 = vmatprep.subr.mxu0 0.0
    %2039 = vmatpush1.msra.mxu0 0.0
    %2040 = vmatprep.subr.mxu0 0.0
    %2041 = vmatpush1.msra.mxu0 0.0
    %2042 = vmatprep.subr.mxu0 0.0
    %2043 = vmatpush1.msra.mxu0 0.0
    %2044 = vmatprep.subr.mxu0 0.0
    %2045 = vmatpush1.msra.mxu0 0.0
    %2046 = vmatprep.subr.mxu0 0.0
    %2047 = vmatpush1.msra.mxu0 0.0
    %2048 = vmatprep.subr.mxu0 0.0
    %2049 = vmatpush1.msra.mxu0 0.0
    %2050 = vmatprep.subr.mxu0 0.0
    %2051 = vmatpush1.msra.mxu0 0.0
    %2052 = vmatprep.subr.mxu0 0.0
    %2053 = vmatpush1.msra.mxu0 0.0
    %2054 = vmatprep.subr.mxu0 0.0
    %2055 = vmatpush1.msra.mxu0 0.0
    %2056 = vmatprep.subr.mxu0 0.0
    %2057 = vmatpush1.msra.mxu0 0.0
    %2058 = vmatprep.subr.mxu0 0.0
    %2059 = vmatpush1.msra.mxu0 0.0
    %2060 = vmatprep.subr.mxu0 0.0
    %2061 = vmatpush1.msra.mxu0 0.0
    %2062 = vmatprep.subr.mxu0 0.0
    %2063 = vmatpush1.msra.mxu0 0.0
    %2064 = vmatprep.subr.mxu0 0.0
    %2065 = vmatpush1.msra.mxu0 0.0
    %2066 = vmatprep.mubr.f32.mxu0 0.0
    %2067 = vmatmul.mubr.f32.gmra.mrb[0].mxu0 %v1997
    %v2068 = vpop.f32.mrb[0].mxu0
    %v2069 = vadd.f32 0.0, %v2068
    %v2070 = vpop.f32.mrb[0].mxu0
    %2071 = vmatprep.mubr.f32.mxu0 0.0
    %2072 = vmatmul.mubr.f32.gmra.mrb[0].mxu0 %v2000
    %v2073 = vpop.f32.mrb[0].mxu0
    %v2074 = vadd.f32 0.0, %v2073
    %v2075 = vpop.f32.mrb[0].mxu0
    %2076 = vdwg.mxu0
    %2079 = vrot.lane.b32.xlu0 %v2069, 64
    %v2080 = vpop.permute.xlu0 %2079
    %2081 = vrot.lane.b32.xlu0 %v2074, 64
    %v2082 = vpop.permute.xlu0 %2081
    %v2085 = vsel %vm366, %v1863, %v2080
    %v2086 = vsel %vm366, %v1868, %v2082
    %s2087 = scalar_lea.vmem %s5, 128
    %v2088 = vld [vmem:[%s2087] sm:$0xff]
    %v2089 = vld [vmem:[%s2087 + $0x8] sm:$0xff]
    %v2090 = vld [vmem:[%s2087 + $0x10] sm:$0xff]
    %v2091 = vld [vmem:[%s2087 + $0x18] sm:$0xff]
    %v2092 = vld [vmem:[%s2087 + $0x20] sm:$0xff]
    %v2093 = vld [vmem:[%s2087 + $0x28] sm:$0xff]
    %v2094 = vld [vmem:[%s2087 + $0x30] sm:$0xff]
    %v2095 = vld [vmem:[%s2087 + $0x38] sm:$0xff]
    %v2096 = vld [vmem:[%s2087 + $0x40] sm:$0xff]
    %v2097 = vld [vmem:[%s2087 + $0x48] sm:$0xff]
    %v2098 = vld [vmem:[%s2087 + $0x50] sm:$0xff]
    %v2099 = vld [vmem:[%s2087 + $0x58] sm:$0xff]
    %v2100 = vld [vmem:[%s2087 + $0x60] sm:$0xff]
    %v2101 = vld [vmem:[%s2087 + $0x68] sm:$0xff]
    %v2102 = vld [vmem:[%s2087 + $0x70] sm:$0xff]
    %v2103 = vld [vmem:[%s2087 + $0x78] sm:$0xff]
    %s2104 = scalar_lea.vmem %s6, 1
    %v2105 = vld [vmem:[%s2104] sm:$0x1]
    %v2107 = vlaneseq
    %v2108 = vshrl.u32 %v2107, 7
    %v2109 = vsub.s32 0, %v2108
    %v2110 = vrot.slane %v2105, %v2109
    %2112 = vmatprep.subr.mxu0 0.0
    %2113 = vmatpush1.msra.mxu0 %v2088
    %2114 = vmatprep.subr.mxu0 0.0
    %2115 = vmatpush1.msra.mxu0 %v2089
    %2116 = vmatprep.subr.mxu0 0.0
    %2117 = vmatpush1.msra.mxu0 %v2090
    %2118 = vmatprep.subr.mxu0 0.0
    %2119 = vmatpush1.msra.mxu0 %v2091
    %2120 = vmatprep.subr.mxu0 0.0
    %2121 = vmatpush1.msra.mxu0 %v2092
    %2122 = vmatprep.subr.mxu0 0.0
    %2123 = vmatpush1.msra.mxu0 %v2093
    %2124 = vmatprep.subr.mxu0 0.0
    %2125 = vmatpush1.msra.mxu0 %v2094
    %2126 = vmatprep.subr.mxu0 0.0
    %2127 = vmatpush1.msra.mxu0 %v2095
    %2128 = vmatprep.subr.mxu0 0.0
    %2129 = vmatpush1.msra.mxu0 %v2096
    %2130 = vmatprep.subr.mxu0 0.0
    %2131 = vmatpush1.msra.mxu0 %v2097
    %2132 = vmatprep.subr.mxu0 0.0
    %2133 = vmatpush1.msra.mxu0 %v2098
    %2134 = vmatprep.subr.mxu0 0.0
    %2135 = vmatpush1.msra.mxu0 %v2099
    %2136 = vmatprep.subr.mxu0 0.0
    %2137 = vmatpush1.msra.mxu0 %v2100
    %2138 = vmatprep.subr.mxu0 0.0
    %2139 = vmatpush1.msra.mxu0 %v2101
    %2140 = vmatprep.subr.mxu0 0.0
    %2141 = vmatpush1.msra.mxu0 %v2102
    %2142 = vmatprep.subr.mxu0 0.0
    %2143 = vmatpush1.msra.mxu0 %v2103
    %2144 = vmatprep.subr.mxu0 0.0
    %2145 = vmatpush1.msra.mxu0 0.0
    %2146 = vmatprep.subr.mxu0 0.0
    %2147 = vmatpush1.msra.mxu0 0.0
    %2148 = vmatprep.subr.mxu0 0.0
    %2149 = vmatpush1.msra.mxu0 0.0
    %2150 = vmatprep.subr.mxu0 0.0
    %2151 = vmatpush1.msra.mxu0 0.0
    %2152 = vmatprep.subr.mxu0 0.0
    %2153 = vmatpush1.msra.mxu0 0.0
    %2154 = vmatprep.subr.mxu0 0.0
    %2155 = vmatpush1.msra.mxu0 0.0
    %2156 = vmatprep.subr.mxu0 0.0
    %2157 = vmatpush1.msra.mxu0 0.0
    %2158 = vmatprep.subr.mxu0 0.0
    %2159 = vmatpush1.msra.mxu0 0.0
    %2160 = vmatprep.subr.mxu0 0.0
    %2161 = vmatpush1.msra.mxu0 0.0
    %2162 = vmatprep.subr.mxu0 0.0
    %2163 = vmatpush1.msra.mxu0 0.0
    %2164 = vmatprep.subr.mxu0 0.0
    %2165 = vmatpush1.msra.mxu0 0.0
    %2166 = vmatprep.subr.mxu0 0.0
    %2167 = vmatpush1.msra.mxu0 0.0
    %2168 = vmatprep.subr.mxu0 0.0
    %2169 = vmatpush1.msra.mxu0 0.0
    %2170 = vmatprep.subr.mxu0 0.0
    %2171 = vmatpush1.msra.mxu0 0.0
    %2172 = vmatprep.subr.mxu0 0.0
    %2173 = vmatpush1.msra.mxu0 0.0
    %2174 = vmatprep.subr.mxu0 0.0
    %2175 = vmatpush1.msra.mxu0 0.0
    %2176 = vmatprep.mubr.f32.mxu0 0.0
    %2177 = vmatmul.mubr.f32.gmra.mrb[0].mxu0 %v2085
    %v2178 = vpop.f32.mrb[0].mxu0
    %v2179 = vadd.f32 %v2110, %v2178
    %v2180 = vpop.f32.mrb[0].mxu0
    %2181 = vmatprep.mubr.f32.mxu0 0.0
    %2182 = vmatmul.mubr.f32.gmra.mrb[0].mxu0 %v2086
    %v2183 = vpop.f32.mrb[0].mxu0
    %v2184 = vadd.f32 %v2110, %v2183
    %v2185 = vpop.f32.mrb[0].mxu0
    %2186 = vdwg.mxu0
    %v2187 = vadd.f32 %v1456, %v2179
    %v2188 = vadd.f32 %v1457, %v2184
    %s2189 = scalar_lea.vmem %s7, 1
    %v2190 = vld [vmem:[%s2189] sm:$0x1]
    %s2191 = scalar_lea.vmem %s8, 1
    %v2192 = vld [vmem:[%s2191] sm:$0x1]
    %2193 = vadd.xlane.f32.xlu0 %v2187
    %v2194 = vpop.xlane.xlu0 %2193
    %2195 = vadd.xlane.f32.xlu0 %v2188
    %v2196 = vpop.xlane.xlu0 %2195
    %v2197 = vmul.f32 %v2194, %v884
    %v2198 = vmul.f32 %v2196, %v884
    %v2199 = vsub.f32 %v2187, %v2197
    %v2200 = vsub.f32 %v2188, %v2198
    %v2201 = vmul.f32 %v2199, %v2199
    %v2202 = vmul.f32 %v2200, %v2200
    %2203 = vadd.xlane.f32.xlu0 %v2201
    %v2204 = vpop.xlane.xlu0 %2203
    %2205 = vadd.xlane.f32.xlu0 %v2202
    %v2206 = vpop.xlane.xlu0 %2205
    %v2207 = vmul.f32 %v2204, %v884
    %v2208 = vmul.f32 %v2206, %v884
    %v2209 = vadd.f32 %v2207, 1e-05
    %v2210 = vadd.f32 %v2208, 1e-05
    %v2211 = vrsqrt.pop %v2209
    %v2212 = vmul.f32 %v2209, %v2211
    %vm2213 = vcmp.eq.f32.partialorder %v2209, inf
    %v2214 = vsel %vm2213, %v2209, %v2212
    %vm2215 = vcmp.eq.f32.partialorder %v2209, 0.0
    %v2216 = vand.u32 %v2209, 2147483648
    %v2217 = vsel %vm2215, %v2216, %v2214
    %v2218 = vrsqrt.pop %v2210
    %v2219 = vmul.f32 %v2210, %v2218
    %vm2220 = vcmp.eq.f32.partialorder %v2210, inf
    %v2221 = vsel %vm2220, %v2210, %v2219
    %vm2222 = vcmp.eq.f32.partialorder %v2210, 0.0
    %v2223 = vand.u32 %v2210, 2147483648
    %v2224 = vsel %vm2222, %v2223, %v2221
    %v2225 = vrcp.pop %v2217
    %v2226 = vmul.f32 %v2199, %v2225
    %v2227 = vrcp.pop %v2224
    %v2228 = vmul.f32 %v2200, %v2227
    %v2230 = vlaneseq
    %v2231 = vshrl.u32 %v2230, 7
    %v2232 = vsub.s32 0, %v2231
    %v2233 = vrot.slane %v2190, %v2232
    %v2235 = vmul.f32 %v2226, %v2233
    %v2236 = vmul.f32 %v2228, %v2233
    %v2238 = vlaneseq
    %v2239 = vshrl.u32 %v2238, 7
    %v2240 = vsub.s32 0, %v2239
    %v2241 = vrot.slane %v2192, %v2240
    %v2243 = vadd.f32 %v2235, %v2241
    %v2244 = vadd.f32 %v2236, %v2241
    %s2245 = scalar_lea.vmem [#allocation9], 512
    %v2246 = vld [vmem:[%s2245] sm:$0xff]
    %v2247 = vld [vmem:[%s2245 + $0x8] sm:$0xff]
    %v2248 = vld [vmem:[%s2245 + $0x10] sm:$0xff]
    %v2249 = vld [vmem:[%s2245 + $0x18] sm:$0xff]
    %v2250 = vld [vmem:[%s2245 + $0x20] sm:$0xff]
    %v2251 = vld [vmem:[%s2245 + $0x28] sm:$0xff]
    %v2252 = vld [vmem:[%s2245 + $0x30] sm:$0xff]
    %v2253 = vld [vmem:[%s2245 + $0x38] sm:$0xff]
    %v2254 = vld [vmem:[%s2245 + $0x40] sm:$0xff]
    %v2255 = vld [vmem:[%s2245 + $0x48] sm:$0xff]
    %v2256 = vld [vmem:[%s2245 + $0x50] sm:$0xff]
    %v2257 = vld [vmem:[%s2245 + $0x58] sm:$0xff]
    %v2258 = vld [vmem:[%s2245 + $0x60] sm:$0xff]
    %v2259 = vld [vmem:[%s2245 + $0x68] sm:$0xff]
    %v2260 = vld [vmem:[%s2245 + $0x70] sm:$0xff]
    %v2261 = vld [vmem:[%s2245 + $0x78] sm:$0xff]
    %v2262 = vld [vmem:[%s2245 + $0x80] sm:$0xff]
    %v2263 = vld [vmem:[%s2245 + $0x88] sm:$0xff]
    %v2264 = vld [vmem:[%s2245 + $0x90] sm:$0xff]
    %v2265 = vld [vmem:[%s2245 + $0x98] sm:$0xff]
    %v2266 = vld [vmem:[%s2245 + $0xa0] sm:$0xff]
    %v2267 = vld [vmem:[%s2245 + $0xa8] sm:$0xff]
    %v2268 = vld [vmem:[%s2245 + $0xb0] sm:$0xff]
    %v2269 = vld [vmem:[%s2245 + $0xb8] sm:$0xff]
    %v2270 = vld [vmem:[%s2245 + $0xc0] sm:$0xff]
    %v2271 = vld [vmem:[%s2245 + $0xc8] sm:$0xff]
    %v2272 = vld [vmem:[%s2245 + $0xd0] sm:$0xff]
    %v2273 = vld [vmem:[%s2245 + $0xd8] sm:$0xff]
    %v2274 = vld [vmem:[%s2245 + $0xe0] sm:$0xff]
    %v2275 = vld [vmem:[%s2245 + $0xe8] sm:$0xff]
    %v2276 = vld [vmem:[%s2245 + $0xf0] sm:$0xff]
    %v2277 = vld [vmem:[%s2245 + $0xf8] sm:$0xff]
    %v2278 = vld [vmem:[%s2245 + $0x100] sm:$0xff]
    %v2279 = vld [vmem:[%s2245 + $0x108] sm:$0xff]
    %v2280 = vld [vmem:[%s2245 + $0x110] sm:$0xff]
    %v2281 = vld [vmem:[%s2245 + $0x118] sm:$0xff]
    %v2282 = vld [vmem:[%s2245 + $0x120] sm:$0xff]
    %v2283 = vld [vmem:[%s2245 + $0x128] sm:$0xff]
    %v2284 = vld [vmem:[%s2245 + $0x130] sm:$0xff]
    %v2285 = vld [vmem:[%s2245 + $0x138] sm:$0xff]
    %v2286 = vld [vmem:[%s2245 + $0x140] sm:$0xff]
    %v2287 = vld [vmem:[%s2245 + $0x148] sm:$0xff]
    %v2288 = vld [vmem:[%s2245 + $0x150] sm:$0xff]
    %v2289 = vld [vmem:[%s2245 + $0x158] sm:$0xff]
    %v2290 = vld [vmem:[%s2245 + $0x160] sm:$0xff]
    %v2291 = vld [vmem:[%s2245 + $0x168] sm:$0xff]
    %v2292 = vld [vmem:[%s2245 + $0x170] sm:$0xff]
    %v2293 = vld [vmem:[%s2245 + $0x178] sm:$0xff]
    %v2294 = vld [vmem:[%s2245 + $0x180] sm:$0xff]
    %v2295 = vld [vmem:[%s2245 + $0x188] sm:$0xff]
    %v2296 = vld [vmem:[%s2245 + $0x190] sm:$0xff]
    %v2297 = vld [vmem:[%s2245 + $0x198] sm:$0xff]
    %v2298 = vld [vmem:[%s2245 + $0x1a0] sm:$0xff]
    %v2299 = vld [vmem:[%s2245 + $0x1a8] sm:$0xff]
    %v2300 = vld [vmem:[%s2245 + $0x1b0] sm:$0xff]
    %v2301 = vld [vmem:[%s2245 + $0x1b8] sm:$0xff]
    %v2302 = vld [vmem:[%s2245 + $0x1c0] sm:$0xff]
    %v2303 = vld [vmem:[%s2245 + $0x1c8] sm:$0xff]
    %v2304 = vld [vmem:[%s2245 + $0x1d0] sm:$0xff]
    %v2305 = vld [vmem:[%s2245 + $0x1d8] sm:$0xff]
    %v2306 = vld [vmem:[%s2245 + $0x1e0] sm:$0xff]
    %v2307 = vld [vmem:[%s2245 + $0x1e8] sm:$0xff]
    %v2308 = vld [vmem:[%s2245 + $0x1f0] sm:$0xff]
    %v2309 = vld [vmem:[%s2245 + $0x1f8] sm:$0xff]
    %s2310 = scalar_lea.vmem %s10, 4
    %v2311 = vld [vmem:[%s2310] sm:$0xf]
    %v2313 = vlaneseq
    %v2314 = vshrl.u32 %v2313, 7
    %v2315 = vsub.s32 0, %v2314
    %v2316 = vrot.slane %v2311, %v2315
    %v2317 = vlaneseq
    %v2318 = vshrl.u32 %v2317, 7
    %v2319 = vsub.s32 1, %v2318
    %v2320 = vrot.slane %v2311, %v2319
    %v2321 = vlaneseq
    %v2322 = vshrl.u32 %v2321, 7
    %v2323 = vsub.s32 2, %v2322
    %v2324 = vrot.slane %v2311, %v2323
    %v2325 = vlaneseq
    %v2326 = vshrl.u32 %v2325, 7
    %v2327 = vsub.s32 3, %v2326
    %v2328 = vrot.slane %v2311, %v2327
    %2333 = vmatprep.subr.mxu0 %v2247
    %2334 = vmatpush1.msra.mxu0 %v2246
    %2335 = vmatprep.subr.mxu0 %v2251
    %2336 = vmatpush1.msra.mxu0 %v2250
    %2337 = vmatprep.subr.mxu0 %v2255
    %2338 = vmatpush1.msra.mxu0 %v2254
    %2339 = vmatprep.subr.mxu0 %v2259
    %2340 = vmatpush1.msra.mxu0 %v2258
    %2341 = vmatprep.subr.mxu0 %v2263
    %2342 = vmatpush1.msra.mxu0 %v2262
    %2343 = vmatprep.subr.mxu0 %v2267
    %2344 = vmatpush1.msra.mxu0 %v2266
    %2345 = vmatprep.subr.mxu0 %v2271
    %2346 = vmatpush1.msra.mxu0 %v2270
    %2347 = vmatprep.subr.mxu0 %v2275
    %2348 = vmatpush1.msra.mxu0 %v2274
    %2349 = vmatprep.subr.mxu0 %v2279
    %2350 = vmatpush1.msra.mxu0 %v2278
    %2351 = vmatprep.subr.mxu0 %v2283
    %2352 = vmatpush1.msra.mxu0 %v2282
    %2353 = vmatprep.subr.mxu0 %v2287
    %2354 = vmatpush1.msra.mxu0 %v2286
    %2355 = vmatprep.subr.mxu0 %v2291
    %2356 = vmatpush1.msra.mxu0 %v2290
    %2357 = vmatprep.subr.mxu0 %v2295
    %2358 = vmatpush1.msra.mxu0 %v2294
    %2359 = vmatprep.subr.mxu0 %v2299
    %2360 = vmatpush1.msra.mxu0 %v2298
    %2361 = vmatprep.subr.mxu0 %v2303
    %2362 = vmatpush1.msra.mxu0 %v2302
    %2363 = vmatprep.subr.mxu0 %v2307
    %2364 = vmatpush1.msra.mxu0 %v2306
    %2365 = vmatprep.subr.mxu0 0.0
    %2366 = vmatpush1.msra.mxu0 0.0
    %2367 = vmatprep.subr.mxu0 0.0
    %2368 = vmatpush1.msra.mxu0 0.0
    %2369 = vmatprep.subr.mxu0 0.0
    %2370 = vmatpush1.msra.mxu0 0.0
    %2371 = vmatprep.subr.mxu0 0.0
    %2372 = vmatpush1.msra.mxu0 0.0
    %2373 = vmatprep.subr.mxu0 0.0
    %2374 = vmatpush1.msra.mxu0 0.0
    %2375 = vmatprep.subr.mxu0 0.0
    %2376 = vmatpush1.msra.mxu0 0.0
    %2377 = vmatprep.subr.mxu0 0.0
    %2378 = vmatpush1.msra.mxu0 0.0
    %2379 = vmatprep.subr.mxu0 0.0
    %2380 = vmatpush1.msra.mxu0 0.0
    %2381 = vmatprep.subr.mxu0 0.0
    %2382 = vmatpush1.msra.mxu0 0.0
    %2383 = vmatprep.subr.mxu0 0.0
    %2384 = vmatpush1.msra.mxu0 0.0
    %2385 = vmatprep.subr.mxu0 0.0
    %2386 = vmatpush1.msra.mxu0 0.0
    %2387 = vmatprep.subr.mxu0 0.0
    %2388 = vmatpush1.msra.mxu0 0.0
    %2389 = vmatprep.subr.mxu0 0.0
    %2390 = vmatpush1.msra.mxu0 0.0
    %2391 = vmatprep.subr.mxu0 0.0
    %2392 = vmatpush1.msra.mxu0 0.0
    %2393 = vmatprep.subr.mxu0 0.0
    %2394 = vmatpush1.msra.mxu0 0.0
    %2395 = vmatprep.subr.mxu0 0.0
    %2396 = vmatpush1.msra.mxu0 0.0
    %2397 = vmatprep.mubr.f32.mxu0 0.0
    %2398 = vmatmul.mubr.f32.gmra.mrb[0].mxu0 %v2243
    %v2399 = vpop.f32.mrb[0].mxu0
    %v2400 = vadd.f32 %v2316, %v2399
    %v2401 = vpop.f32.mrb[0].mxu0
    %v2402 = vadd.f32 %v2320, %v2401
    %2403 = vmatprep.mubr.f32.mxu0 0.0
    %2404 = vmatmul.mubr.f32.gmra.mrb[0].mxu0 %v2244
    %v2405 = vpop.f32.mrb[0].mxu0
    %v2406 = vadd.f32 %v2316, %v2405
    %v2407 = vpop.f32.mrb[0].mxu0
    %v2408 = vadd.f32 %v2320, %v2407
    %2409 = vdwg.mxu0
    %2410 = vmatprep.subr.mxu0 %v2249
    %2411 = vmatpush1.msra.mxu0 %v2248
    %2412 = vmatprep.subr.mxu0 %v2253
    %2413 = vmatpush1.msra.mxu0 %v2252
    %2414 = vmatprep.subr.mxu0 %v2257
    %2415 = vmatpush1.msra.mxu0 %v2256
    %2416 = vmatprep.subr.mxu0 %v2261
    %2417 = vmatpush1.msra.mxu0 %v2260
    %2418 = vmatprep.subr.mxu0 %v2265
    %2419 = vmatpush1.msra.mxu0 %v2264
    %2420 = vmatprep.subr.mxu0 %v2269
    %2421 = vmatpush1.msra.mxu0 %v2268
    %2422 = vmatprep.subr.mxu0 %v2273
    %2423 = vmatpush1.msra.mxu0 %v2272
    %2424 = vmatprep.subr.mxu0 %v2277
    %2425 = vmatpush1.msra.mxu0 %v2276
    %2426 = vmatprep.subr.mxu0 %v2281
    %2427 = vmatpush1.msra.mxu0 %v2280
    %2428 = vmatprep.subr.mxu0 %v2285
    %2429 = vmatpush1.msra.mxu0 %v2284
    %2430 = vmatprep.subr.mxu0 %v2289
    %2431 = vmatpush1.msra.mxu0 %v2288
    %2432 = vmatprep.subr.mxu0 %v2293
    %2433 = vmatpush1.msra.mxu0 %v2292
    %2434 = vmatprep.subr.mxu0 %v2297
    %2435 = vmatpush1.msra.mxu0 %v2296
    %2436 = vmatprep.subr.mxu0 %v2301
    %2437 = vmatpush1.msra.mxu0 %v2300
    %2438 = vmatprep.subr.mxu0 %v2305
    %2439 = vmatpush1.msra.mxu0 %v2304
    %2440 = vmatprep.subr.mxu0 %v2309
    %2441 = vmatpush1.msra.mxu0 %v2308
    %2442 = vmatprep.subr.mxu0 0.0
    %2443 = vmatpush1.msra.mxu0 0.0
    %2444 = vmatprep.subr.mxu0 0.0
    %2445 = vmatpush1.msra.mxu0 0.0
    %2446 = vmatprep.subr.mxu0 0.0
    %2447 = vmatpush1.msra.mxu0 0.0
    %2448 = vmatprep.subr.mxu0 0.0
    %2449 = vmatpush1.msra.mxu0 0.0
    %2450 = vmatprep.subr.mxu0 0.0
    %2451 = vmatpush1.msra.mxu0 0.0
    %2452 = vmatprep.subr.mxu0 0.0
    %2453 = vmatpush1.msra.mxu0 0.0
    %2454 = vmatprep.subr.mxu0 0.0
    %2455 = vmatpush1.msra.mxu0 0.0
    %2456 = vmatprep.subr.mxu0 0.0
    %2457 = vmatpush1.msra.mxu0 0.0
    %2458 = vmatprep.subr.mxu0 0.0
    %2459 = vmatpush1.msra.mxu0 0.0
    %2460 = vmatprep.subr.mxu0 0.0
    %2461 = vmatpush1.msra.mxu0 0.0
    %2462 = vmatprep.subr.mxu0 0.0
    %2463 = vmatpush1.msra.mxu0 0.0
    %2464 = vmatprep.subr.mxu0 0.0
    %2465 = vmatpush1.msra.mxu0 0.0
    %2466 = vmatprep.subr.mxu0 0.0
    %2467 = vmatpush1.msra.mxu0 0.0
    %2468 = vmatprep.subr.mxu0 0.0
    %2469 = vmatpush1.msra.mxu0 0.0
    %2470 = vmatprep.subr.mxu0 0.0
    %2471 = vmatpush1.msra.mxu0 0.0
    %2472 = vmatprep.subr.mxu0 0.0
    %2473 = vmatpush1.msra.mxu0 0.0
    %2474 = vmatprep.mubr.f32.mxu0 0.0
    %2475 = vmatmul.mubr.f32.gmra.mrb[0].mxu0 %v2243
    %v2476 = vpop.f32.mrb[0].mxu0
    %v2477 = vadd.f32 %v2324, %v2476
    %v2478 = vpop.f32.mrb[0].mxu0
    %v2479 = vadd.f32 %v2328, %v2478
    %2480 = vmatprep.mubr.f32.mxu0 0.0
    %2481 = vmatmul.mubr.f32.gmra.mrb[0].mxu0 %v2244
    %v2482 = vpop.f32.mrb[0].mxu0
    %v2483 = vadd.f32 %v2324, %v2482
    %v2484 = vpop.f32.mrb[0].mxu0
    %v2485 = vadd.f32 %v2328, %v2484
    %2486 = vdwg.mxu0
    %v2487 = vmax.f32 %v2400, 0.0
    %v2488 = vmax.f32 %v2402, 0.0
    %v2489 = vmax.f32 %v2477, 0.0
    %v2490 = vmax.f32 %v2479, 0.0
    %v2491 = vmax.f32 %v2406, 0.0
    %v2492 = vmax.f32 %v2408, 0.0
    %v2493 = vmax.f32 %v2483, 0.0
    %v2494 = vmax.f32 %v2485, 0.0
    %s2495 = scalar_lea.vmem [#allocation11], 512
    %v2496 = vld [vmem:[%s2495] sm:$0xff]
    %v2497 = vld [vmem:[%s2495 + $0x8] sm:$0xff]
    %v2498 = vld [vmem:[%s2495 + $0x10] sm:$0xff]
    %v2499 = vld [vmem:[%s2495 + $0x18] sm:$0xff]
    %v2500 = vld [vmem:[%s2495 + $0x20] sm:$0xff]
    %v2501 = vld [vmem:[%s2495 + $0x28] sm:$0xff]
    %v2502 = vld [vmem:[%s2495 + $0x30] sm:$0xff]
    %v2503 = vld [vmem:[%s2495 + $0x38] sm:$0xff]
    %v2504 = vld [vmem:[%s2495 + $0x40] sm:$0xff]
    %v2505 = vld [vmem:[%s2495 + $0x48] sm:$0xff]
    %v2506 = vld [vmem:[%s2495 + $0x50] sm:$0xff]
    %v2507 = vld [vmem:[%s2495 + $0x58] sm:$0xff]
    %v2508 = vld [vmem:[%s2495 + $0x60] sm:$0xff]
    %v2509 = vld [vmem:[%s2495 + $0x68] sm:$0xff]
    %v2510 = vld [vmem:[%s2495 + $0x70] sm:$0xff]
    %v2511 = vld [vmem:[%s2495 + $0x78] sm:$0xff]
    %v2512 = vld [vmem:[%s2495 + $0x80] sm:$0xff]
    %v2513 = vld [vmem:[%s2495 + $0x88] sm:$0xff]
    %v2514 = vld [vmem:[%s2495 + $0x90] sm:$0xff]
    %v2515 = vld [vmem:[%s2495 + $0x98] sm:$0xff]
    %v2516 = vld [vmem:[%s2495 + $0xa0] sm:$0xff]
    %v2517 = vld [vmem:[%s2495 + $0xa8] sm:$0xff]
    %v2518 = vld [vmem:[%s2495 + $0xb0] sm:$0xff]
    %v2519 = vld [vmem:[%s2495 + $0xb8] sm:$0xff]
    %v2520 = vld [vmem:[%s2495 + $0xc0] sm:$0xff]
    %v2521 = vld [vmem:[%s2495 + $0xc8] sm:$0xff]
    %v2522 = vld [vmem:[%s2495 + $0xd0] sm:$0xff]
    %v2523 = vld [vmem:[%s2495 + $0xd8] sm:$0xff]
    %v2524 = vld [vmem:[%s2495 + $0xe0] sm:$0xff]
    %v2525 = vld [vmem:[%s2495 + $0xe8] sm:$0xff]
    %v2526 = vld [vmem:[%s2495 + $0xf0] sm:$0xff]
    %v2527 = vld [vmem:[%s2495 + $0xf8] sm:$0xff]
    %v2528 = vld [vmem:[%s2495 + $0x100] sm:$0xff]
    %v2529 = vld [vmem:[%s2495 + $0x108] sm:$0xff]
    %v2530 = vld [vmem:[%s2495 + $0x110] sm:$0xff]
    %v2531 = vld [vmem:[%s2495 + $0x118] sm:$0xff]
    %v2532 = vld [vmem:[%s2495 + $0x120] sm:$0xff]
    %v2533 = vld [vmem:[%s2495 + $0x128] sm:$0xff]
    %v2534 = vld [vmem:[%s2495 + $0x130] sm:$0xff]
    %v2535 = vld [vmem:[%s2495 + $0x138] sm:$0xff]
    %v2536 = vld [vmem:[%s2495 + $0x140] sm:$0xff]
    %v2537 = vld [vmem:[%s2495 + $0x148] sm:$0xff]
    %v2538 = vld [vmem:[%s2495 + $0x150] sm:$0xff]
    %v2539 = vld [vmem:[%s2495 + $0x158] sm:$0xff]
    %v2540 = vld [vmem:[%s2495 + $0x160] sm:$0xff]
    %v2541 = vld [vmem:[%s2495 + $0x168] sm:$0xff]
    %v2542 = vld [vmem:[%s2495 + $0x170] sm:$0xff]
    %v2543 = vld [vmem:[%s2495 + $0x178] sm:$0xff]
    %v2544 = vld [vmem:[%s2495 + $0x180] sm:$0xff]
    %v2545 = vld [vmem:[%s2495 + $0x188] sm:$0xff]
    %v2546 = vld [vmem:[%s2495 + $0x190] sm:$0xff]
    %v2547 = vld [vmem:[%s2495 + $0x198] sm:$0xff]
    %v2548 = vld [vmem:[%s2495 + $0x1a0] sm:$0xff]
    %v2549 = vld [vmem:[%s2495 + $0x1a8] sm:$0xff]
    %v2550 = vld [vmem:[%s2495 + $0x1b0] sm:$0xff]
    %v2551 = vld [vmem:[%s2495 + $0x1b8] sm:$0xff]
    %v2552 = vld [vmem:[%s2495 + $0x1c0] sm:$0xff]
    %v2553 = vld [vmem:[%s2495 + $0x1c8] sm:$0xff]
    %v2554 = vld [vmem:[%s2495 + $0x1d0] sm:$0xff]
    %v2555 = vld [vmem:[%s2495 + $0x1d8] sm:$0xff]
    %v2556 = vld [vmem:[%s2495 + $0x1e0] sm:$0xff]
    %v2557 = vld [vmem:[%s2495 + $0x1e8] sm:$0xff]
    %v2558 = vld [vmem:[%s2495 + $0x1f0] sm:$0xff]
    %v2559 = vld [vmem:[%s2495 + $0x1f8] sm:$0xff]
    %s2560 = scalar_lea.vmem %s12, 1
    %v2561 = vld [vmem:[%s2560] sm:$0x1]
    %v2563 = vlaneseq
    %v2564 = vshrl.u32 %v2563, 7
    %v2565 = vsub.s32 0, %v2564
    %v2566 = vrot.slane %v2561, %v2565
    %2568 = vmatprep.subr.mxu0 0.0
    %2569 = vmatpush1.msra.mxu0 %v2496
    %2570 = vmatprep.subr.mxu0 0.0
    %2571 = vmatpush1.msra.mxu0 %v2497
    %2572 = vmatprep.subr.mxu0 0.0
    %2573 = vmatpush1.msra.mxu0 %v2498
    %2574 = vmatprep.subr.mxu0 0.0
    %2575 = vmatpush1.msra.mxu0 %v2499
    %2576 = vmatprep.subr.mxu0 0.0
    %2577 = vmatpush1.msra.mxu0 %v2500
    %2578 = vmatprep.subr.mxu0 0.0
    %2579 = vmatpush1.msra.mxu0 %v2501
    %2580 = vmatprep.subr.mxu0 0.0
    %2581 = vmatpush1.msra.mxu0 %v2502
    %2582 = vmatprep.subr.mxu0 0.0
    %2583 = vmatpush1.msra.mxu0 %v2503
    %2584 = vmatprep.subr.mxu0 0.0
    %2585 = vmatpush1.msra.mxu0 %v2504
    %2586 = vmatprep.subr.mxu0 0.0
    %2587 = vmatpush1.msra.mxu0 %v2505
    %2588 = vmatprep.subr.mxu0 0.0
    %2589 = vmatpush1.msra.mxu0 %v2506
    %2590 = vmatprep.subr.mxu0 0.0
    %2591 = vmatpush1.msra.mxu0 %v2507
    %2592 = vmatprep.subr.mxu0 0.0
    %2593 = vmatpush1.msra.mxu0 %v2508
    %2594 = vmatprep.subr.mxu0 0.0
    %2595 = vmatpush1.msra.mxu0 %v2509
    %2596 = vmatprep.subr.mxu0 0.0
    %2597 = vmatpush1.msra.mxu0 %v2510
    %2598 = vmatprep.subr.mxu0 0.0
    %2599 = vmatpush1.msra.mxu0 %v2511
    %2600 = vmatprep.subr.mxu0 0.0
    %2601 = vmatpush1.msra.mxu0 %v2512
    %2602 = vmatprep.subr.mxu0 0.0
    %2603 = vmatpush1.msra.mxu0 %v2513
    %2604 = vmatprep.subr.mxu0 0.0
    %2605 = vmatpush1.msra.mxu0 %v2514
    %2606 = vmatprep.subr.mxu0 0.0
    %2607 = vmatpush1.msra.mxu0 %v2515
    %2608 = vmatprep.subr.mxu0 0.0
    %2609 = vmatpush1.msra.mxu0 %v2516
    %2610 = vmatprep.subr.mxu0 0.0
    %2611 = vmatpush1.msra.mxu0 %v2517
    %2612 = vmatprep.subr.mxu0 0.0
    %2613 = vmatpush1.msra.mxu0 %v2518
    %2614 = vmatprep.subr.mxu0 0.0
    %2615 = vmatpush1.msra.mxu0 %v2519
    %2616 = vmatprep.subr.mxu0 0.0
    %2617 = vmatpush1.msra.mxu0 %v2520
    %2618 = vmatprep.subr.mxu0 0.0
    %2619 = vmatpush1.msra.mxu0 %v2521
    %2620 = vmatprep.subr.mxu0 0.0
    %2621 = vmatpush1.msra.mxu0 %v2522
    %2622 = vmatprep.subr.mxu0 0.0
    %2623 = vmatpush1.msra.mxu0 %v2523
    %2624 = vmatprep.subr.mxu0 0.0
    %2625 = vmatpush1.msra.mxu0 %v2524
    %2626 = vmatprep.subr.mxu0 0.0
    %2627 = vmatpush1.msra.mxu0 %v2525
    %2628 = vmatprep.subr.mxu0 0.0
    %2629 = vmatpush1.msra.mxu0 %v2526
    %2630 = vmatprep.subr.mxu0 0.0
    %2631 = vmatpush1.msra.mxu0 %v2527
    %2632 = vmatprep.mubr.f32.mxu0 %v2488
    %2633 = vmatmul.mubr.f32.gmra.mrb[0].mxu0 %v2487
    %v2634 = vpop.f32.mrb[0].mxu0
    %v2635 = vadd.f32 %v2566, %v2634
    %v2636 = vpop.f32.mrb[0].mxu0
    %2637 = vmatprep.mubr.f32.mxu0 %v2492
    %2638 = vmatmul.mubr.f32.gmra.mrb[0].mxu0 %v2491
    %v2639 = vpop.f32.mrb[0].mxu0
    %v2640 = vadd.f32 %v2566, %v2639
    %v2641 = vpop.f32.mrb[0].mxu0
    %2642 = vdwg.mxu0
    %2643 = vmatprep.subr.mxu0 0.0
    %2644 = vmatpush1.msra.mxu0 %v2528
    %2645 = vmatprep.subr.mxu0 0.0
    %2646 = vmatpush1.msra.mxu0 %v2529
    %2647 = vmatprep.subr.mxu0 0.0
    %2648 = vmatpush1.msra.mxu0 %v2530
    %2649 = vmatprep.subr.mxu0 0.0
    %2650 = vmatpush1.msra.mxu0 %v2531
    %2651 = vmatprep.subr.mxu0 0.0
    %2652 = vmatpush1.msra.mxu0 %v2532
    %2653 = vmatprep.subr.mxu0 0.0
    %2654 = vmatpush1.msra.mxu0 %v2533
    %2655 = vmatprep.subr.mxu0 0.0
    %2656 = vmatpush1.msra.mxu0 %v2534
    %2657 = vmatprep.subr.mxu0 0.0
    %2658 = vmatpush1.msra.mxu0 %v2535
    %2659 = vmatprep.subr.mxu0 0.0
    %2660 = vmatpush1.msra.mxu0 %v2536
    %2661 = vmatprep.subr.mxu0 0.0
    %2662 = vmatpush1.msra.mxu0 %v2537
    %2663 = vmatprep.subr.mxu0 0.0
    %2664 = vmatpush1.msra.mxu0 %v2538
    %2665 = vmatprep.subr.mxu0 0.0
    %2666 = vmatpush1.msra.mxu0 %v2539
    %2667 = vmatprep.subr.mxu0 0.0
    %2668 = vmatpush1.msra.mxu0 %v2540
    %2669 = vmatprep.subr.mxu0 0.0
    %2670 = vmatpush1.msra.mxu0 %v2541
    %2671 = vmatprep.subr.mxu0 0.0
    %2672 = vmatpush1.msra.mxu0 %v2542
    %2673 = vmatprep.subr.mxu0 0.0
    %2674 = vmatpush1.msra.mxu0 %v2543
    %2675 = vmatprep.subr.mxu0 0.0
    %2676 = vmatpush1.msra.mxu0 %v2544
    %2677 = vmatprep.subr.mxu0 0.0
    %2678 = vmatpush1.msra.mxu0 %v2545
    %2679 = vmatprep.subr.mxu0 0.0
    %2680 = vmatpush1.msra.mxu0 %v2546
    %2681 = vmatprep.subr.mxu0 0.0
    %2682 = vmatpush1.msra.mxu0 %v2547
    %2683 = vmatprep.subr.mxu0 0.0
    %2684 = vmatpush1.msra.mxu0 %v2548
    %2685 = vmatprep.subr.mxu0 0.0
    %2686 = vmatpush1.msra.mxu0 %v2549
    %2687 = vmatprep.subr.mxu0 0.0
    %2688 = vmatpush1.msra.mxu0 %v2550
    %2689 = vmatprep.subr.mxu0 0.0
    %2690 = vmatpush1.msra.mxu0 %v2551
    %2691 = vmatprep.subr.mxu0 0.0
    %2692 = vmatpush1.msra.mxu0 %v2552
    %2693 = vmatprep.subr.mxu0 0.0
    %2694 = vmatpush1.msra.mxu0 %v2553
    %2695 = vmatprep.subr.mxu0 0.0
    %2696 = vmatpush1.msra.mxu0 %v2554
    %2697 = vmatprep.subr.mxu0 0.0
    %2698 = vmatpush1.msra.mxu0 %v2555
    %2699 = vmatprep.subr.mxu0 0.0
    %2700 = vmatpush1.msra.mxu0 %v2556
    %2701 = vmatprep.subr.mxu0 0.0
    %2702 = vmatpush1.msra.mxu0 %v2557
    %2703 = vmatprep.subr.mxu0 0.0
    %2704 = vmatpush1.msra.mxu0 %v2558
    %2705 = vmatprep.subr.mxu0 0.0
    %2706 = vmatpush1.msra.mxu0 %v2559
    %2707 = vmatprep.mubr.f32.mxu0 %v2490
    %2708 = vmatmul.mubr.f32.gmra.mrb[0].mxu0 %v2489
    %v2709 = vpop.f32.mrb[0].mxu0
    %v2710 = vadd.f32 %v2635, %v2709
    %v2711 = vpop.f32.mrb[0].mxu0
    %2712 = vmatprep.mubr.f32.mxu0 %v2494
    %2713 = vmatmul.mubr.f32.gmra.mrb[0].mxu0 %v2493
    %v2714 = vpop.f32.mrb[0].mxu0
    %v2715 = vadd.f32 %v2640, %v2714
    %v2716 = vpop.f32.mrb[0].mxu0
    %2717 = vdwg.mxu0
    %v2718 = vadd.f32 %v2243, %v2710
    %v2719 = vadd.f32 %v2244, %v2715
    %s2720 = scalar_lea.vmem %s13, 1
    %v2721 = vld [vmem:[%s2720] sm:$0x1]
    %s2722 = scalar_lea.vmem %s14, 1
    %v2723 = vld [vmem:[%s2722] sm:$0x1]
    %2724 = vadd.xlane.f32.xlu0 %v2718
    %v2725 = vpop.xlane.xlu0 %2724
    %2726 = vadd.xlane.f32.xlu0 %v2719
    %v2727 = vpop.xlane.xlu0 %2726
    %v2728 = vmul.f32 %v2725, %v884
    %v2729 = vmul.f32 %v2727, %v884
    %v2730 = vsub.f32 %v2718, %v2728
    %v2731 = vsub.f32 %v2719, %v2729
    %v2732 = vmul.f32 %v2730, %v2730
    %v2733 = vmul.f32 %v2731, %v2731
    %2734 = vadd.xlane.f32.xlu0 %v2732
    %v2735 = vpop.xlane.xlu0 %2734
    %2736 = vadd.xlane.f32.xlu0 %v2733
    %v2737 = vpop.xlane.xlu0 %2736
    %v2738 = vmul.f32 %v2735, %v884
    %v2739 = vmul.f32 %v2737, %v884
    %v2740 = vadd.f32 %v2738, 1e-05
    %v2741 = vadd.f32 %v2739, 1e-05
    %v2742 = vrsqrt.pop %v2740
    %v2743 = vmul.f32 %v2740, %v2742
    %vm2744 = vcmp.eq.f32.partialorder %v2740, inf
    %v2745 = vsel %vm2744, %v2740, %v2743
    %vm2746 = vcmp.eq.f32.partialorder %v2740, 0.0
    %v2747 = vand.u32 %v2740, 2147483648
    %v2748 = vsel %vm2746, %v2747, %v2745
    %v2749 = vrsqrt.pop %v2741
    %v2750 = vmul.f32 %v2741, %v2749
    %vm2751 = vcmp.eq.f32.partialorder %v2741, inf
    %v2752 = vsel %vm2751, %v2741, %v2750
    %vm2753 = vcmp.eq.f32.partialorder %v2741, 0.0
    %v2754 = vand.u32 %v2741, 2147483648
    %v2755 = vsel %vm2753, %v2754, %v2752
    %v2756 = vrcp.pop %v2748
    %v2757 = vmul.f32 %v2730, %v2756
    %v2758 = vrcp.pop %v2755
    %v2759 = vmul.f32 %v2731, %v2758
    %v2761 = vlaneseq
    %v2762 = vshrl.u32 %v2761, 7
    %v2763 = vsub.s32 0, %v2762
    %v2764 = vrot.slane %v2721, %v2763
    %v2766 = vmul.f32 %v2757, %v2764
    %v2767 = vmul.f32 %v2759, %v2764
    %v2769 = vlaneseq
    %v2770 = vshrl.u32 %v2769, 7
    %v2771 = vsub.s32 0, %v2770
    %v2772 = vrot.slane %v2723, %v2771
    %v2774 = vadd.f32 %v2766, %v2772
    %v2775 = vadd.f32 %v2767, %v2772
    %v2776 = vmul.f32 %v2774, %v2774
    %v2777 = vmul.f32 %v2775, %v2775
    %2778 = vadd.xlane.f32.xlu0 %v2776
    %v2779 = vpop.xlane.xlu0 %2778
    %2780 = vadd.xlane.f32.xlu0 %v2777
    %v2781 = vpop.xlane.xlu0 %2780
    %v2782 = vrsqrt.pop %v2779
    %v2783 = vmul.f32 %v2779, %v2782
    %vm2784 = vcmp.eq.f32.partialorder %v2779, inf
    %v2785 = vsel %vm2784, %v2779, %v2783
    %vm2786 = vcmp.eq.f32.partialorder %v2779, 0.0
    %v2787 = vand.u32 %v2779, 2147483648
    %v2788 = vsel %vm2786, %v2787, %v2785
    %v2789 = vrsqrt.pop %v2781
    %v2790 = vmul.f32 %v2781, %v2789
    %vm2791 = vcmp.eq.f32.partialorder %v2781, inf
    %v2792 = vsel %vm2791, %v2781, %v2790
    %vm2793 = vcmp.eq.f32.partialorder %v2781, 0.0
    %v2794 = vand.u32 %v2781, 2147483648
    %v2795 = vsel %vm2793, %v2794, %v2792
    %v2796 = vmax.f32 %v2788, 1e-12
    %v2797 = vmax.f32 %v2795, 1e-12
    %v2798 = vrcp.pop %v2796
    %v2799 = vmul.f32 %v2774, %v2798
    %v2800 = vrcp.pop %v2797
    %v2801 = vmul.f32 %v2775, %v2800
    %2802 = vst [vmem:[#allocation12] sm:$0xff] %v2799
    %2803 = vst [vmem:[#allocation12 + $0x8] sm:$0xff] %v2801
    %v2804 = vld [vmem:[%s15] sm:$0xff]
    %v2805 = vld [vmem:[%s15 + $0x8] sm:$0xff]
    %v2806 = vld [vmem:[%s15 + $0x10] sm:$0xff]
    %v2807 = vld [vmem:[%s15 + $0x18] sm:$0xff]
    %v2808 = vld [vmem:[%s15 + $0x20] sm:$0xff]
    %v2809 = vld [vmem:[%s15 + $0x28] sm:$0xff]
    %v2810 = vld [vmem:[%s15 + $0x30] sm:$0xff]
    %v2811 = vld [vmem:[%s15 + $0x38] sm:$0xff]
    %v2812 = vld [vmem:[%s15 + $0x40] sm:$0xff]
    %v2813 = vld [vmem:[%s15 + $0x48] sm:$0xff]
    %v2814 = vld [vmem:[%s15 + $0x50] sm:$0xff]
    %v2815 = vld [vmem:[%s15 + $0x58] sm:$0xff]
    %v2816 = vld [vmem:[%s15 + $0x60] sm:$0xff]
    %v2817 = vld [vmem:[%s15 + $0x68] sm:$0xff]
    %v2818 = vld [vmem:[%s15 + $0x70] sm:$0xff]
    %v2819 = vld [vmem:[%s15 + $0x78] sm:$0xff]
    %v2820 = vld [vmem:[%s16] sm:$0x1]
    %v2822 = vlaneseq
    %v2823 = vshrl.u32 %v2822, 7
    %v2824 = vsub.s32 0, %v2823
    %v2825 = vrot.slane %v2820, %v2824
    %2827 = vmatprep.subr.mxu0 0.0
    %2828 = vmatpush1.msra.mxu0 %v2804
    %2829 = vmatprep.subr.mxu0 0.0
    %2830 = vmatpush1.msra.mxu0 %v2805
    %2831 = vmatprep.subr.mxu0 0.0
    %2832 = vmatpush1.msra.mxu0 %v2806
    %2833 = vmatprep.subr.mxu0 0.0
    %2834 = vmatpush1.msra.mxu0 %v2807
    %2835 = vmatprep.subr.mxu0 0.0
    %2836 = vmatpush1.msra.mxu0 %v2808
    %2837 = vmatprep.subr.mxu0 0.0
    %2838 = vmatpush1.msra.mxu0 %v2809
    %2839 = vmatprep.subr.mxu0 0.0
    %2840 = vmatpush1.msra.mxu0 %v2810
    %2841 = vmatprep.subr.mxu0 0.0
    %2842 = vmatpush1.msra.mxu0 %v2811
    %2843 = vmatprep.subr.mxu0 0.0
    %2844 = vmatpush1.msra.mxu0 %v2812
    %2845 = vmatprep.subr.mxu0 0.0
    %2846 = vmatpush1.msra.mxu0 %v2813
    %2847 = vmatprep.subr.mxu0 0.0
    %2848 = vmatpush1.msra.mxu0 %v2814
    %2849 = vmatprep.subr.mxu0 0.0
    %2850 = vmatpush1.msra.mxu0 %v2815
    %2851 = vmatprep.subr.mxu0 0.0
    %2852 = vmatpush1.msra.mxu0 %v2816
    %2853 = vmatprep.subr.mxu0 0.0
    %2854 = vmatpush1.msra.mxu0 %v2817
    %2855 = vmatprep.subr.mxu0 0.0
    %2856 = vmatpush1.msra.mxu0 %v2818
    %2857 = vmatprep.subr.mxu0 0.0
    %2858 = vmatpush1.msra.mxu0 %v2819
    %2859 = vmatprep.subr.mxu0 0.0
    %2860 = vmatpush1.msra.mxu0 0.0
    %2861 = vmatprep.subr.mxu0 0.0
    %2862 = vmatpush1.msra.mxu0 0.0
    %2863 = vmatprep.subr.mxu0 0.0
    %2864 = vmatpush1.msra.mxu0 0.0
    %2865 = vmatprep.subr.mxu0 0.0
    %2866 = vmatpush1.msra.mxu0 0.0
    %2867 = vmatprep.subr.mxu0 0.0
    %2868 = vmatpush1.msra.mxu0 0.0
    %2869 = vmatprep.subr.mxu0 0.0
    %2870 = vmatpush1.msra.mxu0 0.0
    %2871 = vmatprep.subr.mxu0 0.0
    %2872 = vmatpush1.msra.mxu0 0.0
    %2873 = vmatprep.subr.mxu0 0.0
    %2874 = vmatpush1.msra.mxu0 0.0
    %2875 = vmatprep.subr.mxu0 0.0
    %2876 = vmatpush1.msra.mxu0 0.0
    %2877 = vmatprep.subr.mxu0 0.0
    %2878 = vmatpush1.msra.mxu0 0.0
    %2879 = vmatprep.subr.mxu0 0.0
    %2880 = vmatpush1.msra.mxu0 0.0
    %2881 = vmatprep.subr.mxu0 0.0
    %2882 = vmatpush1.msra.mxu0 0.0
    %2883 = vmatprep.subr.mxu0 0.0
    %2884 = vmatpush1.msra.mxu0 0.0
    %2885 = vmatprep.subr.mxu0 0.0
    %2886 = vmatpush1.msra.mxu0 0.0
    %2887 = vmatprep.subr.mxu0 0.0
    %2888 = vmatpush1.msra.mxu0 0.0
    %2889 = vmatprep.subr.mxu0 0.0
    %2890 = vmatpush1.msra.mxu0 0.0
    %2891 = vmatprep.mubr.f32.mxu0 0.0
    %2892 = vmatmul.mubr.f32.gmra.mrb[0].mxu0 %v2799
    %v2893 = vpop.f32.mrb[0].mxu0
    %v2894 = vadd.f32 %v2825, %v2893
    %v2895 = vpop.f32.mrb[0].mxu0
    %2896 = vmatprep.mubr.f32.mxu0 0.0
    %2897 = vmatmul.mubr.f32.gmra.mrb[0].mxu0 %v2801
    %v2898 = vpop.f32.mrb[0].mxu0
    %v2899 = vadd.f32 %v2825, %v2898
    %v2900 = vpop.f32.mrb[0].mxu0
    %2901 = vdwg.mxu0
    %2902 = vst.msk [vmem:[#allocation13] sm:$0xff] %vm366, %v2894
    %2903 = vst.msk [vmem:[#allocation13 + $0x8] sm:$0xff] %vm366, %v2899
    %v2904 = vld [vmem:[%s21] sm:$0xff]
    %v2905 = vld [vmem:[%s21 + $0x8] sm:$0xff]
    %v2906 = vmul.f32 %v2894, 0.5
    %v2907 = vmul.f32 %v2899, 0.5
    %v2908 = vmul.f32 %v2906, 1.442695
    %v2909 = vpow.pop %v2908
    %v2910 = vmul.f32 %v2907, 1.442695
    %v2911 = vpow.pop %v2910
    %2914 = vrot.lane.b32.xlu0 %v2909, 96
    %v2915 = vpop.permute.xlu0 %2914
    %2916 = vrot.lane.b32.xlu0 %v2911, 96
    %v2917 = vpop.permute.xlu0 %2916
    %v2920 = vmul.f32 %v2904, %v2915
    %v2921 = vmul.f32 %v2905, %v2917
    %v2922 = vadd.f32 %v2894, %v2920
    %v2923 = vadd.f32 %v2899, %v2921
    %vm2924 = vcmask 261120
    %2925 = vst.msk [vmem:[#allocation15] sm:$0xff] %vm2924, %v2922
    %2926 = vst.msk [vmem:[#allocation15 + $0x8] sm:$0xff] %vm2924, %v2923
    %v2927 = vld [vmem:[#allocation3] sm:$0xff]
    %v2929 = vsel %vm458, %v2927, 0
    %2931 = vmatprep.subr.mxu0 0.0
    %2932 = vmatpush1.msra.mxu0 %v2922
    %2933 = vmatprep.subr.mxu0 0.0
    %2934 = vmatpush1.msra.mxu0 %v2923
    %2935 = vmatprep.subr.mxu0 0.0
    %2936 = vmatpush1.msra.mxu0 0.0
    %2937 = vmatprep.subr.mxu0 0.0
    %2938 = vmatpush1.msra.mxu0 0.0
    %2939 = vmatprep.subr.mxu0 0.0
    %2940 = vmatpush1.msra.mxu0 0.0
    %2941 = vmatprep.subr.mxu0 0.0
    %2942 = vmatpush1.msra.mxu0 0.0
    %2943 = vmatprep.subr.mxu0 0.0
    %2944 = vmatpush1.msra.mxu0 0.0
    %2945 = vmatprep.subr.mxu0 0.0
    %2946 = vmatpush1.msra.mxu0 0.0
    %2947 = vmatprep.subr.mxu0 0.0
    %2948 = vmatpush1.msra.mxu0 0.0
    %2949 = vmatprep.subr.mxu0 0.0
    %2950 = vmatpush1.msra.mxu0 0.0
    %2951 = vmatprep.subr.mxu0 0.0
    %2952 = vmatpush1.msra.mxu0 0.0
    %2953 = vmatprep.subr.mxu0 0.0
    %2954 = vmatpush1.msra.mxu0 0.0
    %2955 = vmatprep.subr.mxu0 0.0
    %2956 = vmatpush1.msra.mxu0 0.0
    %2957 = vmatprep.subr.mxu0 0.0
    %2958 = vmatpush1.msra.mxu0 0.0
    %2959 = vmatprep.subr.mxu0 0.0
    %2960 = vmatpush1.msra.mxu0 0.0
    %2961 = vmatprep.subr.mxu0 0.0
    %2962 = vmatpush1.msra.mxu0 0.0
    %2963 = vmatprep.subr.mxu0 0.0
    %2964 = vmatpush1.msra.mxu0 0.0
    %2965 = vmatprep.subr.mxu0 0.0
    %2966 = vmatpush1.msra.mxu0 0.0
    %2967 = vmatprep.subr.mxu0 0.0
    %2968 = vmatpush1.msra.mxu0 0.0
    %2969 = vmatprep.subr.mxu0 0.0
    %2970 = vmatpush1.msra.mxu0 0.0
    %2971 = vmatprep.subr.mxu0 0.0
    %2972 = vmatpush1.msra.mxu0 0.0
    %2973 = vmatprep.subr.mxu0 0.0
    %2974 = vmatpush1.msra.mxu0 0.0
    %2975 = vmatprep.subr.mxu0 0.0
    %2976 = vmatpush1.msra.mxu0 0.0
    %2977 = vmatprep.subr.mxu0 0.0
    %2978 = vmatpush1.msra.mxu0 0.0
    %2979 = vmatprep.subr.mxu0 0.0
    %2980 = vmatpush1.msra.mxu0 0.0
    %2981 = vmatprep.subr.mxu0 0.0
    %2982 = vmatpush1.msra.mxu0 0.0
    %2983 = vmatprep.subr.mxu0 0.0
    %2984 = vmatpush1.msra.mxu0 0.0
    %2985 = vmatprep.subr.mxu0 0.0
    %2986 = vmatpush1.msra.mxu0 0.0
    %2987 = vmatprep.subr.mxu0 0.0
    %2988 = vmatpush1.msra.mxu0 0.0
    %2989 = vmatprep.subr.mxu0 0.0
    %2990 = vmatpush1.msra.mxu0 0.0
    %2991 = vmatprep.subr.mxu0 0.0
    %2992 = vmatpush1.msra.mxu0 0.0
    %2993 = vmatprep.subr.mxu0 0.0
    %2994 = vmatpush1.msra.mxu0 0.0
    %2995 = vmatprep.mubr.f32.mxu0 0.0
    %2996 = vmatmul.mubr.f32.gmra.mrb[0].mxu0 %v2929
    %v2997 = vpop.f32.mrb[0].mxu0
    %v2998 = vadd.f32 0.0, %v2997
    %v2999 = vpop.f32.mrb[0].mxu0
    %3000 = vdwg.mxu0
    %v3001 = vld [vmem:[%s17] sm:$0xff]
    %v3002 = vld [vmem:[%s17 + $0x8] sm:$0xff]
    %v3003 = vld [vmem:[%s17 + $0x10] sm:$0xff]
    %v3004 = vld [vmem:[%s17 + $0x18] sm:$0xff]
    %v3005 = vld [vmem:[%s18] sm:$0x1]
    %v3007 = vlaneseq
    %v3008 = vshrl.u32 %v3007, 7
    %v3009 = vsub.s32 0, %v3008
    %v3010 = vrot.slane %v3005, %v3009
    %v3013 = vsel %vm2924, %v2998, 0
    %3015 = vmatprep.subr.mxu0 0.0
    %3016 = vmatpush1.msra.mxu0 %v3001
    %3017 = vmatprep.subr.mxu0 0.0
    %3018 = vmatpush1.msra.mxu0 %v3002
    %3019 = vmatprep.subr.mxu0 0.0
    %3020 = vmatpush1.msra.mxu0 %v3003
    %3021 = vmatprep.subr.mxu0 0.0
    %3022 = vmatpush1.msra.mxu0 %v3004
    %3023 = vmatprep.subr.mxu0 0.0
    %3024 = vmatpush1.msra.mxu0 0.0
    %3025 = vmatprep.subr.mxu0 0.0
    %3026 = vmatpush1.msra.mxu0 0.0
    %3027 = vmatprep.subr.mxu0 0.0
    %3028 = vmatpush1.msra.mxu0 0.0
    %3029 = vmatprep.subr.mxu0 0.0
    %3030 = vmatpush1.msra.mxu0 0.0
    %3031 = vmatprep.subr.mxu0 0.0
    %3032 = vmatpush1.msra.mxu0 0.0
    %3033 = vmatprep.subr.mxu0 0.0
    %3034 = vmatpush1.msra.mxu0 0.0
    %3035 = vmatprep.subr.mxu0 0.0
    %3036 = vmatpush1.msra.mxu0 0.0
    %3037 = vmatprep.subr.mxu0 0.0
    %3038 = vmatpush1.msra.mxu0 0.0
    %3039 = vmatprep.subr.mxu0 0.0
    %3040 = vmatpush1.msra.mxu0 0.0
    %3041 = vmatprep.subr.mxu0 0.0
    %3042 = vmatpush1.msra.mxu0 0.0
    %3043 = vmatprep.subr.mxu0 0.0
    %3044 = vmatpush1.msra.mxu0 0.0
    %3045 = vmatprep.subr.mxu0 0.0
    %3046 = vmatpush1.msra.mxu0 0.0
    %3047 = vmatprep.subr.mxu0 0.0
    %3048 = vmatpush1.msra.mxu0 0.0
    %3049 = vmatprep.subr.mxu0 0.0
    %3050 = vmatpush1.msra.mxu0 0.0
    %3051 = vmatprep.subr.mxu0 0.0
    %3052 = vmatpush1.msra.mxu0 0.0
    %3053 = vmatprep.subr.mxu0 0.0
    %3054 = vmatpush1.msra.mxu0 0.0
    %3055 = vmatprep.subr.mxu0 0.0
    %3056 = vmatpush1.msra.mxu0 0.0
    %3057 = vmatprep.subr.mxu0 0.0
    %3058 = vmatpush1.msra.mxu0 0.0
    %3059 = vmatprep.subr.mxu0 0.0
    %3060 = vmatpush1.msra.mxu0 0.0
    %3061 = vmatprep.subr.mxu0 0.0
    %3062 = vmatpush1.msra.mxu0 0.0
    %3063 = vmatprep.subr.mxu0 0.0
    %3064 = vmatpush1.msra.mxu0 0.0
    %3065 = vmatprep.subr.mxu0 0.0
    %3066 = vmatpush1.msra.mxu0 0.0
    %3067 = vmatprep.subr.mxu0 0.0
    %3068 = vmatpush1.msra.mxu0 0.0
    %3069 = vmatprep.subr.mxu0 0.0
    %3070 = vmatpush1.msra.mxu0 0.0
    %3071 = vmatprep.subr.mxu0 0.0
    %3072 = vmatpush1.msra.mxu0 0.0
    %3073 = vmatprep.subr.mxu0 0.0
    %3074 = vmatpush1.msra.mxu0 0.0
    %3075 = vmatprep.subr.mxu0 0.0
    %3076 = vmatpush1.msra.mxu0 0.0
    %3077 = vmatprep.subr.mxu0 0.0
    %3078 = vmatpush1.msra.mxu0 0.0
    %3079 = vmatprep.mubr.f32.mxu0 0.0
    %3080 = vmatmul.mubr.f32.gmra.mrb[0].mxu0 %v3013
    %v3081 = vpop.f32.mrb[0].mxu0
    %v3082 = vadd.f32 %v3010, %v3081
    %v3083 = vpop.f32.mrb[0].mxu0
    %3084 = vdwg.mxu0
    %v3085 = vmax.f32 %v3082, 0.0
    %v3086 = vld [vmem:[%s19] sm:$0xff]
    %v3087 = vld [vmem:[%s19 + $0x8] sm:$0xff]
    %v3088 = vld [vmem:[%s19 + $0x10] sm:$0xff]
    %v3089 = vld [vmem:[%s19 + $0x18] sm:$0xff]
    %v3090 = vld [vmem:[%s19 + $0x20] sm:$0xff]
    %v3091 = vld [vmem:[%s19 + $0x28] sm:$0xff]
    %v3092 = vld [vmem:[%s19 + $0x30] sm:$0xff]
    %v3093 = vld [vmem:[%s19 + $0x38] sm:$0xff]
    %v3094 = vld [vmem:[%s19 + $0x40] sm:$0xff]
    %v3095 = vld [vmem:[%s19 + $0x48] sm:$0xff]
    %v3096 = vld [vmem:[%s19 + $0x50] sm:$0xff]
    %v3097 = vld [vmem:[%s19 + $0x58] sm:$0xff]
    %v3098 = vld [vmem:[%s19 + $0x60] sm:$0xff]
    %v3099 = vld [vmem:[%s19 + $0x68] sm:$0xff]
    %v3100 = vld [vmem:[%s19 + $0x70] sm:$0xff]
    %v3101 = vld [vmem:[%s19 + $0x78] sm:$0xff]
    %v3102 = vld [vmem:[#allocation2] sm:$0x1]
    %v3104 = vlaneseq
    %v3105 = vshrl.u32 %v3104, 7
    %v3106 = vsub.s32 0, %v3105
    %v3107 = vrot.slane %v3102, %v3106
    %3109 = vmatprep.subr.mxu0 0.0
    %3110 = vmatpush1.msra.mxu0 %v3086
    %3111 = vmatprep.subr.mxu0 0.0
    %3112 = vmatpush1.msra.mxu0 %v3087
    %3113 = vmatprep.subr.mxu0 0.0
    %3114 = vmatpush1.msra.mxu0 %v3088
    %3115 = vmatprep.subr.mxu0 0.0
    %3116 = vmatpush1.msra.mxu0 %v3089
    %3117 = vmatprep.subr.mxu0 0.0
    %3118 = vmatpush1.msra.mxu0 %v3090
    %3119 = vmatprep.subr.mxu0 0.0
    %3120 = vmatpush1.msra.mxu0 %v3091
    %3121 = vmatprep.subr.mxu0 0.0
    %3122 = vmatpush1.msra.mxu0 %v3092
    %3123 = vmatprep.subr.mxu0 0.0
    %3124 = vmatpush1.msra.mxu0 %v3093
    %3125 = vmatprep.subr.mxu0 0.0
    %3126 = vmatpush1.msra.mxu0 %v3094
    %3127 = vmatprep.subr.mxu0 0.0
    %3128 = vmatpush1.msra.mxu0 %v3095
    %3129 = vmatprep.subr.mxu0 0.0
    %3130 = vmatpush1.msra.mxu0 %v3096
    %3131 = vmatprep.subr.mxu0 0.0
    %3132 = vmatpush1.msra.mxu0 %v3097
    %3133 = vmatprep.subr.mxu0 0.0
    %3134 = vmatpush1.msra.mxu0 %v3098
    %3135 = vmatprep.subr.mxu0 0.0
    %3136 = vmatpush1.msra.mxu0 %v3099
    %3137 = vmatprep.subr.mxu0 0.0
    %3138 = vmatpush1.msra.mxu0 %v3100
    %3139 = vmatprep.subr.mxu0 0.0
    %3140 = vmatpush1.msra.mxu0 %v3101
    %3141 = vmatprep.subr.mxu0 0.0
    %3142 = vmatpush1.msra.mxu0 0.0
    %3143 = vmatprep.subr.mxu0 0.0
    %3144 = vmatpush1.msra.mxu0 0.0
    %3145 = vmatprep.subr.mxu0 0.0
    %3146 = vmatpush1.msra.mxu0 0.0
    %3147 = vmatprep.subr.mxu0 0.0
    %3148 = vmatpush1.msra.mxu0 0.0
    %3149 = vmatprep.subr.mxu0 0.0
    %3150 = vmatpush1.msra.mxu0 0.0
    %3151 = vmatprep.subr.mxu0 0.0
    %3152 = vmatpush1.msra.mxu0 0.0
    %3153 = vmatprep.subr.mxu0 0.0
    %3154 = vmatpush1.msra.mxu0 0.0
    %3155 = vmatprep.subr.mxu0 0.0
    %3156 = vmatpush1.msra.mxu0 0.0
    %3157 = vmatprep.subr.mxu0 0.0
    %3158 = vmatpush1.msra.mxu0 0.0
    %3159 = vmatprep.subr.mxu0 0.0
    %3160 = vmatpush1.msra.mxu0 0.0
    %3161 = vmatprep.subr.mxu0 0.0
    %3162 = vmatpush1.msra.mxu0 0.0
    %3163 = vmatprep.subr.mxu0 0.0
    %3164 = vmatpush1.msra.mxu0 0.0
    %3165 = vmatprep.subr.mxu0 0.0
    %3166 = vmatpush1.msra.mxu0 0.0
    %3167 = vmatprep.subr.mxu0 0.0
    %3168 = vmatpush1.msra.mxu0 0.0
    %3169 = vmatprep.subr.mxu0 0.0
    %3170 = vmatpush1.msra.mxu0 0.0
    %3171 = vmatprep.subr.mxu0 0.0
    %3172 = vmatpush1.msra.mxu0 0.0
    %3173 = vmatprep.mubr.f32.mxu0 0.0
    %3174 = vmatmul.mubr.f32.gmra.mrb[0].mxu0 %v3085
    %v3175 = vpop.f32.mrb[0].mxu0
    %v3176 = vadd.f32 %v3107, %v3175
    %v3177 = vpop.f32.mrb[0].mxu0
    %3178 = vdwg.mxu0
    %v3179 = vxor.u32 %v3176, 2147483648
    %v3180 = vmul.f32 %v3179, 1.442695
    %v3181 = vpow.pop %v3180
    %v3182 = vadd.f32 %v3181, 1.0
    %v3183 = vrcp.pop %v3182
    %v3184 = vmul.f32 1.0, %v3183
    %vm3185 = vcmask 7168
    %3186 = vst.msk [vmem:[%s25] sm:$0xff] %vm3185, %v3184
    // Predicated region
    $region110: #{tpu_custom_call.1} parent=1 // pred_check
      _
    $region111: #{tpu_custom_call.1} parent=1 // pred_check_branch
      %3188 = sbr.rel (0) target = $region113
    $region112: #{tpu_custom_call.1} parent=1 // pred_region
      %s3190 = ssub.s32 256, 256
      %3191 = vsyncadd [#allocation5], %s3190
      %s3192 = sshll.u32 [#allocation12], 4
      %s3193 = int_to_ptr.vmem [resolvable:$true] %s3192
      %3198 = dma.vmem_to_hbm [thread:$0]  %s3193, 256, %s22, [#allocation5], 128, 128, 8
    $region113: #{tpu_custom_call.1} parent=1 // pred_fallthru
      _
    // Predicated region
    $region114: #{tpu_custom_call.1} parent=1 // pred_check
      _
    $region115: #{tpu_custom_call.1} parent=1 // pred_check_branch
      %3200 = sbr.rel (0) target = $region117
    $region116: #{tpu_custom_call.1} parent=1 // pred_region
      %s3202 = ssub.s32 256, 256
      %3203 = vsyncadd [#allocation14], %s3202
      %s3204 = sshll.u32 [#allocation13], 4
      %s3205 = int_to_ptr.vmem [resolvable:$true] %s3204
      %3210 = dma.vmem_to_hbm [thread:$0]  %s3205, 256, %s23, [#allocation14], 128, 128, 8
    $region117: #{tpu_custom_call.1} parent=1 // pred_fallthru
      _
    // Predicated region
    $region118: #{tpu_custom_call.1} parent=1 // pred_check
      _
    $region119: #{tpu_custom_call.1} parent=1 // pred_check_branch
      %3212 = sbr.rel (0) target = $region121
    $region120: #{tpu_custom_call.1} parent=1 // pred_region
      %s3214 = ssub.s32 256, 256
      %3215 = vsyncadd [#allocation14], %s3214
      %s3216 = sshll.u32 [#allocation15], 4
      %s3217 = int_to_ptr.vmem [resolvable:$true] %s3216
      %3222 = dma.vmem_to_hbm [thread:$0]  %s3217, 256, %s24, [#allocation14], 128, 128, 8
    $region121: #{tpu_custom_call.1} parent=1 // pred_fallthru
      _
    // Predicated region
    $region122: #{tpu_custom_call.1} parent=1 // pred_check
      _
    $region123: #{tpu_custom_call.1} parent=1 // pred_check_branch
      %3224 = sbr.rel (0) target = $region125
    $region124: #{tpu_custom_call.1} parent=1 // pred_region
      _
    $region125: #{tpu_custom_call.1} parent=1 // pred_fallthru
      _
    // Predicated region
    $region126: #{tpu_custom_call.1} parent=1 // pred_check
      _
    $region127: #{tpu_custom_call.1} parent=1 // pred_check_branch
      %3226 = sbr.rel (0) target = $region129
    $region128: #{tpu_custom_call.1} parent=1 // pred_region
      %3227 = dma.done [#allocation5], 256
    $region129: #{tpu_custom_call.1} parent=1 // pred_fallthru
      _
    // Predicated region
    $region130: #{tpu_custom_call.1} parent=1 // pred_check
      _
    $region131: #{tpu_custom_call.1} parent=1 // pred_check_branch
      %3229 = sbr.rel (0) target = $region133
    $region132: #{tpu_custom_call.1} parent=1 // pred_region
      %3230 = dma.done [#allocation14], 256
    $region133: #{tpu_custom_call.1} parent=1 // pred_fallthru
      _
    // Predicated region
    $region134: #{tpu_custom_call.1} parent=1 // pred_check
      _
    $region135: #{tpu_custom_call.1} parent=1 // pred_check_branch
      %3232 = sbr.rel (0) target = $region137
    $region136: #{tpu_custom_call.1} parent=1 // pred_region
      %3233 = dma.done [#allocation14], 256
    $region137: #{tpu_custom_call.1} parent=1 // pred_fallthru
      _
    // Predicated region
    $region138: #{tpu_custom_call.1} parent=1 // pred_check
      _
    $region139: #{tpu_custom_call.1} parent=1 // pred_check_branch
      %3235 = sbr.rel (0) target = $region141
    $region140: #{tpu_custom_call.1} parent=1 // pred_region
      _
    $region141: #{tpu_custom_call.1} parent=1 // pred_fallthru
      _
    %3236 = vsyncpa [#allocation4], 1
    %3237 = vsyncpa [#allocation7], 1
    %3238 = vsyncpa [#allocation10], 1
    %3239 = vsyncpa [#allocation5], 1
    %3240 = vsyncpa [#allocation14], 1

</llo_original>
